<compile_context>
chip_gen: v7x
topology: tpu7x:2x2x1
jax: 0.10.0
libtpu: 0.0.40
codegen_flags: <defaults>
</compile_context>

<pallas_src>
import functools

import jax
import jax.numpy as jnp
from jax import lax
from jax.experimental import pallas as pl
from jax.experimental.pallas import tpu as pltpu


def _round_up(x, m):
    return (x + m - 1) // m * m


def _cdiv(a, b):
    return (a + b - 1) // b


# ----------------------------------------------------------------------------
# Pallas kernel: in-kernel tap gather (im2col) + fused matmul/bias/act chain.
# ----------------------------------------------------------------------------
def _stage_kernel(x_ref, *refs, n_layers, acts, offsets, k_pad, pt, n_pt):
    """x_ref: (Cin, Lin) f32 -- the whole padded, row-flattened feature map of
    the current image, resident in VMEM (Pallas only re-DMAs it when the batch
    grid index changes).

    Taps are gathered here as lane-offset slices of x_ref and concatenated on
    the sublane/K axis, so no patch tensor ever exists in HBM.

    refs = (w_0, b_0, ..., w_{n-1}, b_{n-1}, alpha_smem, o_ref):
      w_i (C_i, C_{i-1}) bf16 (C_{-1} == k_pad), b_i (C_i, 1) f32,
      alpha_smem (n_layers,) f32 PReLU slopes, o_ref (C_last, pt).
    """
    w_refs = refs[0:2 * n_layers:2]
    b_refs = refs[1:2 * n_layers:2]
    a_ref = refs[2 * n_layers]
    o_ref = refs[2 * n_layers + 1]
    cin = x_ref.shape[0]

    if n_pt == 1:                                    # common case: static slices
        taps = [x_ref[:, off:off + pt] for off in offsets]
    else:                                            # P-tiled: dynamic slices
        base = pl.multiple_of(pl.program_id(1) * pt, 128)
        taps = [x_ref[:, pl.ds(base + off, pt)] for off in offsets]
    k = len(offsets) * cin
    if k_pad > k:                                    # pad K to x16 (bf16 packing)
        taps.append(jnp.zeros((k_pad - k, pt), jnp.float32))
    y = jnp.concatenate(taps, axis=0) if len(taps) > 1 else taps[0]
    y = y.astype(jnp.bfloat16)                       # (k_pad, pt) MXU operand

    for i in range(n_layers):
        y = jnp.dot(w_refs[i][...], y, preferred_element_type=jnp.float32)
        y = y + b_refs[i][...]                       # (C_i, 1) broadcast
        if acts[i] == "prelu":
            y = jnp.where(y >= 0.0, y, a_ref[i] * y)
        elif acts[i] == "sigmoid":
            y = jax.nn.sigmoid(y)
        if i + 1 < n_layers:
            y = y.astype(jnp.bfloat16)
    o_ref[...] = y.astype(o_ref.dtype)


def _conv_stage(x_pad, span, layer_specs, *, out_dtype=jnp.float32,
                pt_max=2048):
    """Fused conv chain on an already spatially padded NCHW feature map.

    The padded map is row-flattened; the tap at (di, dj) of the (sh, sw) window
    is the constant lane offset di*Wp + dj, so the kernel builds its own
    patches in VMEM.  Outputs are computed on the full padded-width grid and
    the junk columns (w >= Wo) are sliced off here.

    layer_specs: [(W[C_i, C_{i-1}], bias[C_i], act, alpha)], act in
    {"prelu", "sigmoid"}; the first W has C_{-1} = sh*sw*Cin with column order
    (tap_row, tap_col, cin).  Returns (N, C_last, Ho, Wo).
    """
    N, cin, Hp, Wp = x_pad.shape
    sh, sw = span
    Ho, Wo = Hp - sh + 1, Wp - sw + 1
    offsets = [i * Wp + j for i in range(sh) for j in range(sw)]
    P = Ho * Wp                                       # full flat output grid

    # balanced lane tiling (avoids p_pad blow-up on awkward sizes)
    n_pt = max(1, _cdiv(P, pt_max))
    if N == 1 and n_pt == 1 and P > 128:
        n_pt = 2                                      # keep both v7x TCs busy
    pt = _round_up(_cdiv(P, n_pt), 128)
    p_pad = n_pt * pt
    max_off = max(offsets)
    lin = p_pad + max_off                             # tail pad covers halo

    x_flat = x_pad.reshape(N, cin, Hp * Wp).astype(jnp.float32)
    x_flat = jnp.pad(x_flat, ((0, 0), (0, 0), (0, lin - Hp * Wp)))

    k = len(offsets) * cin
    k_pad = _round_up(k, 16)

    n_layers = len(layer_specs)
    acts = tuple(s[2] for s in layer_specs)
    alphas = jnp.stack([
        jnp.asarray(s[3] if s[3] is not None else 0.0, jnp.float32)
        for s in layer_specs])

    args = [x_flat]
    in_specs = [pl.BlockSpec((None, cin, lin), lambda n, pi: (n, 0, 0))]
    for i, (w, b, _act, _alpha) in enumerate(layer_specs):
        cout, kin = w.shape
        if i == 0 and kin != k_pad:
            w = jnp.pad(w, ((0, 0), (0, k_pad - kin)))
        w = w.astype(jnp.bfloat16)
        b = b.reshape(cout, 1).astype(jnp.float32)
        args += [w, b]
        in_specs += [pl.BlockSpec(w.shape, lambda n, pi: (0, 0)),
                     pl.BlockSpec(b.shape, lambda n, pi: (0, 0))]
    args.append(alphas)
    in_specs.append(pl.BlockSpec(memory_space=pltpu.MemorySpace.SMEM))

    c_last = layer_specs[-1][0].shape[0]
    kernel = functools.partial(
        _stage_kernel, n_layers=n_layers, acts=acts, offsets=tuple(offsets),
        k_pad=k_pad, pt=pt, n_pt=n_pt)
    out = pl.pallas_call(
        kernel,
        out_shape=jax.ShapeDtypeStruct((N, c_last, p_pad), out_dtype),
        grid=(N, n_pt),
        in_specs=in_specs,
        out_specs=pl.BlockSpec((None, c_last, pt), lambda n, pi: (n, 0, pi)),
        compiler_params=pltpu.CompilerParams(
            dimension_semantics=("parallel", "parallel"),
            vmem_limit_bytes=32 * 1024 * 1024),
    )(*args)
    out = out[:, :, :P].reshape(N, c_last, Ho, Wp)
    return out[:, :, :, :Wo]


# ----------------------------------------------------------------------------
# Plain-JAX glue: weight reshapes / deconv phase stacking
# ----------------------------------------------------------------------------
def _w_matrix(w_hwio):
    """HWIO conv weight -> (Cout, KH*KW*Cin), column order (kh, kw, cin)."""
    kh, kw, cin, cout = w_hwio.shape
    return jnp.transpose(w_hwio, (3, 0, 1, 2)).reshape(cout, kh * kw * cin)


def _deconv_stacked_weights(p):
    """Regroup ConvTranspose2d(32,4,9,9,s2,p4,op1) + Conv2d(4,1,1x1) into a
    phase-stacked matmul pair over the 25 distinct (5x5-span) taps of a
    (2,2)-zero-padded x5.  Row order: phase (py,px) in ((0,0),(0,1),(1,0),(1,1)),
    column order: (tap_row, tap_col, cin)."""
    # flipped transposed-conv kernel in HWIO layout: (9, 9, 32, 4)
    w_flip = jnp.transpose(jnp.flip(p["w6"], axis=(2, 3)), (2, 3, 0, 1))
    # one leading zero row/col so phase taps with no source select zeros
    wfp = jnp.pad(w_flip, ((1, 0), (1, 0), (0, 0), (0, 0)))      # (10,10,32,4)
    blocks = []
    for py, px in ((0, 0), (0, 1), (1, 0), (1, 1)):
        sub = wfp[1 - py::2, 1 - px::2, :, :]                    # (5,5,32,4)
        blocks.append(jnp.transpose(sub, (3, 0, 1, 2)).reshape(4, 25 * 32))
    w6s = jnp.concatenate(blocks, axis=0)                        # (16, 800)
    b6s = jnp.tile(p["b6"], 4)                                   # (16,)
    w7s = jnp.kron(jnp.eye(4, dtype=jnp.float32),
                   p["w7"].reshape(1, 4))                        # (4, 16)
    b7s = jnp.tile(p["b7"], 4)                                   # (4,)
    return w6s, b6s, w7s, b7s


# ----------------------------------------------------------------------------
# Full FSRCNN20 forward (NCHW in / NCHW out, like the PyTorch module)
# ----------------------------------------------------------------------------
def fsrcnn20_forward(x_nchw, p):
    N, _, H, W = x_nchw.shape
    refl = lambda t, k: jnp.pad(t, ((0, 0), (0, 0), (k, k), (k, k)),
                                mode="reflect")

    # layers 1 (5x5 reflect conv, 1->32) + 2 (1x1, 32->8), one kernel
    x2 = _conv_stage(
        refl(x_nchw, 2), (5, 5),
        [(_w_matrix(p["w1"]), p["b1"], "prelu", p["a1"]),
         (_w_matrix(p["w2"]), p["b2"], "prelu", p["a2"])])

    # layer 3 (3x3 reflect conv, 8->8)
    x3 = _conv_stage(
        refl(x2, 1), (3, 3),
        [(_w_matrix(p["w3"]), p["b3"], "prelu", p["a3"])])

    # layers 4 (3x3 reflect conv, 8->8) + 5 (1x1, 8->32), one kernel
    x5 = _conv_stage(
        refl(x3, 1), (3, 3),
        [(_w_matrix(p["w4"]), p["b4"], "prelu", p["a4"]),
         (_w_matrix(p["w5"]), p["b5"], "prelu", p["a5"])])

    # layers 6 (ConvTranspose2d 32->4, 9x9, s2, p4, op1) + 7 (1x1 4->1,
    # sigmoid): all four sub-pixel phases + the 1x1 fused into ONE kernel.
    # x5 is zero-padded once; phase weights are stacked -> Cout = 16, then the
    # block-diagonal (4,16) conv7 yields one output channel per phase.
    w6s, b6s, w7s, b7s = _deconv_stacked_weights(p)
    x6 = jnp.pad(x5, ((0, 0), (0, 0), (2, 2), (2, 2)))          # zero pad
    ph = _conv_stage(
        x6, (5, 5),
        [(w6s, b6s, "prelu", p["a6"]),
         (w7s, b7s, "sigmoid", None)],
        pt_max=1024)                                            # (N, 4, H, W)

    # interleave phases (channel = 2*py+px) into the 2x-upsampled output
    ph = ph.reshape(N, 2, 2, H, W)
    out = jnp.transpose(ph, (0, 3, 1, 4, 2)).reshape(N, 1, 2 * H, 2 * W)
    return out


# ----------------------------------------------------------------------------
# Pure-JAX reference (lax convs) at matched precision:
# bf16 matmul inputs, f32 accumulation, f32 bias / PReLU / sigmoid.
# ----------------------------------------------------------------------------
def _ref_forward(x_nchw, p):
    dn = ("NHWC", "HWIO", "NHWC")
    bf = jnp.bfloat16

    def conv(x, w, b):
        y = lax.conv_general_dilated(
            x.astype(bf), w.astype(bf), (1, 1), "VALID",
            dimension_numbers=dn, preferred_element_type=jnp.float32)
        return y + b.reshape(1, 1, 1, -1)

    prelu = lambda t, a: jnp.where(t >= 0, t, a * t)
    refl = lambda t, k: jnp.pad(t, ((0, 0), (k, k), (k, k), (0, 0)),
                                mode="reflect")

    x = jnp.transpose(x_nchw, (0, 2, 3, 1))
    x = prelu(conv(refl(x, 2), p["w1"], p["b1"]), p["a1"])
    x = prelu(conv(x, p["w2"], p["b2"]), p["a2"])
    x = prelu(conv(refl(x, 1), p["w3"], p["b3"]), p["a3"])
    x = prelu(conv(refl(x, 1), p["w4"], p["b4"]), p["a4"])
    x = prelu(conv(x, p["w5"], p["b5"]), p["a5"])
    # ConvTranspose2d == zero-insert (lhs_dilation) + flipped kernel conv
    w6 = jnp.transpose(jnp.flip(p["w6"], axis=(2, 3)), (2, 3, 0, 1))
    y = lax.conv_general_dilated(
        x.astype(bf), w6.astype(bf), (1, 1), [(4, 5), (4, 5)],
        lhs_dilation=(2, 2), dimension_numbers=dn,
        preferred_element_type=jnp.float32)
    x = prelu(y + p["b6"].reshape(1, 1, 1, -1), p["a6"])
    x = jax.nn.sigmoid(conv(x, p["w7"], p["b7"]))
    return jnp.transpose(x, (0, 3, 1, 2))


# ----------------------------------------------------------------------------
# Deterministic parameter init (mimics PyTorch default U(-1/sqrt(fan_in), .))
# ----------------------------------------------------------------------------
def init_params(key):
    def uconv(k, kh, kw, cin, cout):
        bound = 1.0 / jnp.sqrt(float(cin * kh * kw))
        kw_, kb_ = jax.random.split(k)
        w = jax.random.uniform(kw_, (kh, kw, cin, cout), jnp.float32,
                               -bound, bound)
        b = jax.random.uniform(kb_, (cout,), jnp.float32, -bound, bound)
        return w, b

    ks = jax.random.split(key, 7)
    p = {}
    p["w1"], p["b1"] = uconv(ks[0], 5, 5, 1, 32)
    p["w2"], p["b2"] = uconv(ks[1], 1, 1, 32, 8)
    p["w3"], p["b3"] = uconv(ks[2], 3, 3, 8, 8)
    p["w4"], p["b4"] = uconv(ks[3], 3, 3, 8, 8)
    p["w5"], p["b5"] = uconv(ks[4], 1, 1, 8, 32)
    # ConvTranspose2d(32, 4, 9, 9): weight layout (in, out, kH, kW)
    bound6 = 1.0 / jnp.sqrt(32.0 * 9.0 * 9.0)
    k6w, k6b = jax.random.split(ks[5])
    p["w6"] = jax.random.uniform(k6w, (32, 4, 9, 9), jnp.float32,
                                 -bound6, bound6)
    p["b6"] = jax.random.uniform(k6b, (4,), jnp.float32, -bound6, bound6)
    p["w7"], p["b7"] = uconv(ks[6], 1, 1, 4, 1)
    for i in range(1, 7):  # PReLU default init = 0.25 (single alpha)
        p[f"a{i}"] = jnp.float32(0.25)
    return p


if __name__ == "__main__":
    key = jax.random.PRNGKey(0)
    pkey, xkey = jax.random.split(key)
    params = init_params(pkey)

    # small input consistent with the module: N=2, C=1 (FSRCNN is single-chan)
    x = jax.random.uniform(xkey, (2, 1, 16, 16), jnp.float32)

    out = jax.block_until_ready(jax.jit(fsrcnn20_forward)(x, params))
    assert out.shape == (2, 1, 32, 32), out.shape

    ref = jax.block_until_ready(jax.jit(_ref_forward)(x, params))
    err = float(jnp.max(jnp.abs(out - ref)))
    assert jnp.allclose(out, ref, rtol=1e-3, atol=1e-4), err

    print("KERNEL_OK")
</pallas_src>

<mosaic_0001>
module attributes {stable_mosaic.version = 11 : i64} {
  func.func @_stage_kernel(%arg0: i32, %arg1: i32, %arg2: memref<1x1x468xf32, #tpu.memory_space<vmem>>, %arg3: memref<32x32xbf16, #tpu.memory_space<vmem>>, %arg4: memref<32x1xf32, #tpu.memory_space<vmem>>, %arg5: memref<8x32xbf16, #tpu.memory_space<vmem>>, %arg6: memref<8x1xf32, #tpu.memory_space<vmem>>, %arg7: memref<2xf32, #tpu.memory_space<smem>>, %arg8: memref<1x8x384xf32, #tpu.memory_space<vmem>>) attributes {dimension_semantics = [#tpu.dimension_semantics<parallel>, #tpu.dimension_semantics<parallel>], iteration_bounds = array<i64: 2, 1>, scalar_prefetch = 0 : i64, scratch_operands = 0 : i64, tpu.core_type = #tpu.core_type<tc>, window_params = [{transform_indices = @transform_0, window_bounds = array<i64: 1, 1, 468>}, {pipeline_mode = #tpu.pipeline_mode<synchronous>, transform_indices = @transform_1, window_bounds = array<i64: 32, 32>}, {pipeline_mode = #tpu.pipeline_mode<synchronous>, transform_indices = @transform_2, window_bounds = array<i64: 32, 1>}, {pipeline_mode = #tpu.pipeline_mode<synchronous>, transform_indices = @transform_3, window_bounds = array<i64: 8, 32>}, {pipeline_mode = #tpu.pipeline_mode<synchronous>, transform_indices = @transform_4, window_bounds = array<i64: 8, 1>}, {transform_indices = @transform_5, window_bounds = array<i64: 2>}, {transform_indices = @transform_6, window_bounds = array<i64: 1, 8, 384>}]} {
    %c0 = arith.constant 0 : index
    %c0_0 = arith.constant 0 : index
    %c0_1 = arith.constant 0 : index
    %0 = vector.load %arg2[%c0, %c0_0, %c0_1] : memref<1x1x468xf32, #tpu.memory_space<vmem>>, vector<1x1x384xf32>
    %1 = vector.shape_cast %0 : vector<1x1x384xf32> to vector<1x384xf32>
    %c0_2 = arith.constant 0 : index
    %c0_3 = arith.constant 0 : index
    %c1 = arith.constant 1 : index
    %2 = vector.load %arg2[%c0_2, %c0_3, %c1] : memref<1x1x468xf32, #tpu.memory_space<vmem>>, vector<1x1x384xf32>
    %3 = vector.shape_cast %2 : vector<1x1x384xf32> to vector<1x384xf32>
    %c0_4 = arith.constant 0 : index
    %c0_5 = arith.constant 0 : index
    %c2 = arith.constant 2 : index
    %4 = vector.load %arg2[%c0_4, %c0_5, %c2] : memref<1x1x468xf32, #tpu.memory_space<vmem>>, vector<1x1x384xf32>
    %5 = vector.shape_cast %4 : vector<1x1x384xf32> to vector<1x384xf32>
    %c0_6 = arith.constant 0 : index
    %c0_7 = arith.constant 0 : index
    %c3 = arith.constant 3 : index
    %6 = vector.load %arg2[%c0_6, %c0_7, %c3] : memref<1x1x468xf32, #tpu.memory_space<vmem>>, vector<1x1x384xf32>
    %7 = vector.shape_cast %6 : vector<1x1x384xf32> to vector<1x384xf32>
    %c0_8 = arith.constant 0 : index
    %c0_9 = arith.constant 0 : index
    %c4 = arith.constant 4 : index
    %8 = vector.load %arg2[%c0_8, %c0_9, %c4] : memref<1x1x468xf32, #tpu.memory_space<vmem>>, vector<1x1x384xf32>
    %9 = vector.shape_cast %8 : vector<1x1x384xf32> to vector<1x384xf32>
    %c0_10 = arith.constant 0 : index
    %c0_11 = arith.constant 0 : index
    %c20 = arith.constant 20 : index
    %10 = vector.load %arg2[%c0_10, %c0_11, %c20] : memref<1x1x468xf32, #tpu.memory_space<vmem>>, vector<1x1x384xf32>
    %11 = vector.shape_cast %10 : vector<1x1x384xf32> to vector<1x384xf32>
    %c0_12 = arith.constant 0 : index
    %c0_13 = arith.constant 0 : index
    %c21 = arith.constant 21 : index
    %12 = vector.load %arg2[%c0_12, %c0_13, %c21] : memref<1x1x468xf32, #tpu.memory_space<vmem>>, vector<1x1x384xf32>
    %13 = vector.shape_cast %12 : vector<1x1x384xf32> to vector<1x384xf32>
    %c0_14 = arith.constant 0 : index
    %c0_15 = arith.constant 0 : index
    %c22 = arith.constant 22 : index
    %14 = vector.load %arg2[%c0_14, %c0_15, %c22] : memref<1x1x468xf32, #tpu.memory_space<vmem>>, vector<1x1x384xf32>
    %15 = vector.shape_cast %14 : vector<1x1x384xf32> to vector<1x384xf32>
    %c0_16 = arith.constant 0 : index
    %c0_17 = arith.constant 0 : index
    %c23 = arith.constant 23 : index
    %16 = vector.load %arg2[%c0_16, %c0_17, %c23] : memref<1x1x468xf32, #tpu.memory_space<vmem>>, vector<1x1x384xf32>
    %17 = vector.shape_cast %16 : vector<1x1x384xf32> to vector<1x384xf32>
    %c0_18 = arith.constant 0 : index
    %c0_19 = arith.constant 0 : index
    %c24 = arith.constant 24 : index
    %18 = vector.load %arg2[%c0_18, %c0_19, %c24] : memref<1x1x468xf32, #tpu.memory_space<vmem>>, vector<1x1x384xf32>
    %19 = vector.shape_cast %18 : vector<1x1x384xf32> to vector<1x384xf32>
    %c0_20 = arith.constant 0 : index
    %c0_21 = arith.constant 0 : index
    %c40 = arith.constant 40 : index
    %20 = vector.load %arg2[%c0_20, %c0_21, %c40] : memref<1x1x468xf32, #tpu.memory_space<vmem>>, vector<1x1x384xf32>
    %21 = vector.shape_cast %20 : vector<1x1x384xf32> to vector<1x384xf32>
    %c0_22 = arith.constant 0 : index
    %c0_23 = arith.constant 0 : index
    %c41 = arith.constant 41 : index
    %22 = vector.load %arg2[%c0_22, %c0_23, %c41] : memref<1x1x468xf32, #tpu.memory_space<vmem>>, vector<1x1x384xf32>
    %23 = vector.shape_cast %22 : vector<1x1x384xf32> to vector<1x384xf32>
    %c0_24 = arith.constant 0 : index
    %c0_25 = arith.constant 0 : index
    %c42 = arith.constant 42 : index
    %24 = vector.load %arg2[%c0_24, %c0_25, %c42] : memref<1x1x468xf32, #tpu.memory_space<vmem>>, vector<1x1x384xf32>
    %25 = vector.shape_cast %24 : vector<1x1x384xf32> to vector<1x384xf32>
    %c0_26 = arith.constant 0 : index
    %c0_27 = arith.constant 0 : index
    %c43 = arith.constant 43 : index
    %26 = vector.load %arg2[%c0_26, %c0_27, %c43] : memref<1x1x468xf32, #tpu.memory_space<vmem>>, vector<1x1x384xf32>
    %27 = vector.shape_cast %26 : vector<1x1x384xf32> to vector<1x384xf32>
    %c0_28 = arith.constant 0 : index
    %c0_29 = arith.constant 0 : index
    %c44 = arith.constant 44 : index
    %28 = vector.load %arg2[%c0_28, %c0_29, %c44] : memref<1x1x468xf32, #tpu.memory_space<vmem>>, vector<1x1x384xf32>
    %29 = vector.shape_cast %28 : vector<1x1x384xf32> to vector<1x384xf32>
    %c0_30 = arith.constant 0 : index
    %c0_31 = arith.constant 0 : index
    %c60 = arith.constant 60 : index
    %30 = vector.load %arg2[%c0_30, %c0_31, %c60] : memref<1x1x468xf32, #tpu.memory_space<vmem>>, vector<1x1x384xf32>
    %31 = vector.shape_cast %30 : vector<1x1x384xf32> to vector<1x384xf32>
    %c0_32 = arith.constant 0 : index
    %c0_33 = arith.constant 0 : index
    %c61 = arith.constant 61 : index
    %32 = vector.load %arg2[%c0_32, %c0_33, %c61] : memref<1x1x468xf32, #tpu.memory_space<vmem>>, vector<1x1x384xf32>
    %33 = vector.shape_cast %32 : vector<1x1x384xf32> to vector<1x384xf32>
    %c0_34 = arith.constant 0 : index
    %c0_35 = arith.constant 0 : index
    %c62 = arith.constant 62 : index
    %34 = vector.load %arg2[%c0_34, %c0_35, %c62] : memref<1x1x468xf32, #tpu.memory_space<vmem>>, vector<1x1x384xf32>
    %35 = vector.shape_cast %34 : vector<1x1x384xf32> to vector<1x384xf32>
    %c0_36 = arith.constant 0 : index
    %c0_37 = arith.constant 0 : index
    %c63 = arith.constant 63 : index
    %36 = vector.load %arg2[%c0_36, %c0_37, %c63] : memref<1x1x468xf32, #tpu.memory_space<vmem>>, vector<1x1x384xf32>
    %37 = vector.shape_cast %36 : vector<1x1x384xf32> to vector<1x384xf32>
    %c0_38 = arith.constant 0 : index
    %c0_39 = arith.constant 0 : index
    %c64 = arith.constant 64 : index
    %38 = vector.load %arg2[%c0_38, %c0_39, %c64] : memref<1x1x468xf32, #tpu.memory_space<vmem>>, vector<1x1x384xf32>
    %39 = vector.shape_cast %38 : vector<1x1x384xf32> to vector<1x384xf32>
    %c0_40 = arith.constant 0 : index
    %c0_41 = arith.constant 0 : index
    %c80 = arith.constant 80 : index
    %40 = vector.load %arg2[%c0_40, %c0_41, %c80] : memref<1x1x468xf32, #tpu.memory_space<vmem>>, vector<1x1x384xf32>
    %41 = vector.shape_cast %40 : vector<1x1x384xf32> to vector<1x384xf32>
    %c0_42 = arith.constant 0 : index
    %c0_43 = arith.constant 0 : index
    %c81 = arith.constant 81 : index
    %42 = vector.load %arg2[%c0_42, %c0_43, %c81] : memref<1x1x468xf32, #tpu.memory_space<vmem>>, vector<1x1x384xf32>
    %43 = vector.shape_cast %42 : vector<1x1x384xf32> to vector<1x384xf32>
    %c0_44 = arith.constant 0 : index
    %c0_45 = arith.constant 0 : index
    %c82 = arith.constant 82 : index
    %44 = vector.load %arg2[%c0_44, %c0_45, %c82] : memref<1x1x468xf32, #tpu.memory_space<vmem>>, vector<1x1x384xf32>
    %45 = vector.shape_cast %44 : vector<1x1x384xf32> to vector<1x384xf32>
    %c0_46 = arith.constant 0 : index
    %c0_47 = arith.constant 0 : index
    %c83 = arith.constant 83 : index
    %46 = vector.load %arg2[%c0_46, %c0_47, %c83] : memref<1x1x468xf32, #tpu.memory_space<vmem>>, vector<1x1x384xf32>
    %47 = vector.shape_cast %46 : vector<1x1x384xf32> to vector<1x384xf32>
    %c0_48 = arith.constant 0 : index
    %c0_49 = arith.constant 0 : index
    %c84 = arith.constant 84 : index
    %48 = vector.load %arg2[%c0_48, %c0_49, %c84] : memref<1x1x468xf32, #tpu.memory_space<vmem>>, vector<1x1x384xf32>
    %49 = vector.shape_cast %48 : vector<1x1x384xf32> to vector<1x384xf32>
    %cst = arith.constant 0.000000e+00 : f32
    %50 = vector.broadcast %cst : f32 to vector<7x384xf32>
    %51 = tpu.concatenate %1, %3, %5, %7, %9, %11, %13, %15, %17, %19, %21, %23, %25, %27, %29, %31 in 0 : vector<1x384xf32>, vector<1x384xf32>, vector<1x384xf32>, vector<1x384xf32>, vector<1x384xf32>, vector<1x384xf32>, vector<1x384xf32>, vector<1x384xf32>, vector<1x384xf32>, vector<1x384xf32>, vector<1x384xf32>, vector<1x384xf32>, vector<1x384xf32>, vector<1x384xf32>, vector<1x384xf32>, vector<1x384xf32> -> vector<16x384xf32>
    %52 = tpu.concatenate %33, %35, %37, %39, %41, %43, %45, %47, %49, %50 in 0 : vector<1x384xf32>, vector<1x384xf32>, vector<1x384xf32>, vector<1x384xf32>, vector<1x384xf32>, vector<1x384xf32>, vector<1x384xf32>, vector<1x384xf32>, vector<1x384xf32>, vector<7x384xf32> -> vector<16x384xf32>
    %53 = tpu.concatenate %51, %52 in 0 : vector<16x384xf32>, vector<16x384xf32> -> vector<32x384xf32>
    %54 = arith.truncf %53 : vector<32x384xf32> to vector<32x384xbf16>
    %c0_50 = arith.constant 0 : index
    %c0_51 = arith.constant 0 : index
    %55 = vector.load %arg3[%c0_50, %c0_51] : memref<32x32xbf16, #tpu.memory_space<vmem>>, vector<32x32xbf16>
    %cst_52 = arith.constant dense<0.000000e+00> : vector<32x384xf32>
    %56 = tpu.matmul %55, %54, %cst_52 {dimension_numbers = #tpu.dot_dimension_numbers<[1], [0], [0], [1], [0, 0, 1, 1], [], []>} : vector<32x32xbf16>, vector<32x384xbf16>, vector<32x384xf32> -> vector<32x384xf32>
    %c0_53 = arith.constant 0 : index
    %c0_54 = arith.constant 0 : index
    %57 = vector.load %arg4[%c0_53, %c0_54] : memref<32x1xf32, #tpu.memory_space<vmem>>, vector<32x1xf32>
    %58 = vector.broadcast %57 : vector<32x1xf32> to vector<32x384xf32>
    %59 = arith.addf %56, %58 : vector<32x384xf32>
    %cst_55 = arith.constant 0.000000e+00 : f32
    %60 = vector.broadcast %cst_55 : f32 to vector<32x384xf32>
    %61 = arith.cmpf oge, %59, %60 : vector<32x384xf32>
    %c0_56 = arith.constant 0 : index
    %62 = memref.load %arg7[%c0_56] : memref<2xf32, #tpu.memory_space<smem>>
    %63 = vector.broadcast %62 : f32 to vector<32x384xf32>
    %64 = arith.mulf %63, %59 : vector<32x384xf32>
    %65 = arith.select %61, %59, %64 : vector<32x384xi1>, vector<32x384xf32>
    %66 = arith.truncf %65 : vector<32x384xf32> to vector<32x384xbf16>
    %c0_57 = arith.constant 0 : index
    %c0_58 = arith.constant 0 : index
    %67 = vector.load %arg5[%c0_57, %c0_58] : memref<8x32xbf16, #tpu.memory_space<vmem>>, vector<8x32xbf16>
    %cst_59 = arith.constant dense<0.000000e+00> : vector<8x384xf32>
    %68 = tpu.matmul %67, %66, %cst_59 {dimension_numbers = #tpu.dot_dimension_numbers<[1], [0], [0], [1], [0, 0, 1, 1], [], []>} : vector<8x32xbf16>, vector<32x384xbf16>, vector<8x384xf32> -> vector<8x384xf32>
    %c0_60 = arith.constant 0 : index
    %c0_61 = arith.constant 0 : index
    %69 = vector.load %arg6[%c0_60, %c0_61] : memref<8x1xf32, #tpu.memory_space<vmem>>, vector<8x1xf32>
    %70 = vector.broadcast %69 : vector<8x1xf32> to vector<8x384xf32>
    %71 = arith.addf %68, %70 : vector<8x384xf32>
    %cst_62 = arith.constant 0.000000e+00 : f32
    %72 = vector.broadcast %cst_62 : f32 to vector<8x384xf32>
    %73 = arith.cmpf oge, %71, %72 : vector<8x384xf32>
    %c1_63 = arith.constant 1 : index
    %74 = memref.load %arg7[%c1_63] : memref<2xf32, #tpu.memory_space<smem>>
    %75 = vector.broadcast %74 : f32 to vector<8x384xf32>
    %76 = arith.mulf %75, %71 : vector<8x384xf32>
    %77 = arith.select %73, %71, %76 : vector<8x384xi1>, vector<8x384xf32>
    %c0_64 = arith.constant 0 : index
    %c0_65 = arith.constant 0 : index
    %c0_66 = arith.constant 0 : index
    %78 = vector.load %arg8[%c0_64, %c0_65, %c0_66] : memref<1x8x384xf32, #tpu.memory_space<vmem>>, vector<1x8x384xf32>
    %79 = vector.shape_cast %78 : vector<1x8x384xf32> to vector<8x384xf32>
    %80 = vector.shape_cast %77 : vector<8x384xf32> to vector<1x8x384xf32>
    tpu.vector_store %arg8[%c0_64, %c0_65, %c0_66], %80 {strides = array<i32>} : memref<1x8x384xf32, #tpu.memory_space<vmem>>, vector<1x8x384xf32>,
    return
  }
  func.func @transform_0(%arg0: i32, %arg1: i32) -> (i32, i32, i32) {
    %c0_i32 = arith.constant 0 : i32
    %c0_i32_0 = arith.constant 0 : i32
    %c0_i32_1 = arith.constant 0 : i32
    return %arg0, %c0_i32, %c0_i32_0 : i32, i32, i32
  }
  func.func @transform_1(%arg0: i32, %arg1: i32) -> (i32, i32) {
    %c0_i32 = arith.constant 0 : i32
    %c0_i32_0 = arith.constant 0 : i32
    %c0_i32_1 = arith.constant 0 : i32
    return %c0_i32, %c0_i32_0 : i32, i32
  }
  func.func @transform_2(%arg0: i32, %arg1: i32) -> (i32, i32) {
    %c0_i32 = arith.constant 0 : i32
    %c0_i32_0 = arith.constant 0 : i32
    %c0_i32_1 = arith.constant 0 : i32
    return %c0_i32, %c0_i32_0 : i32, i32
  }
  func.func @transform_3(%arg0: i32, %arg1: i32) -> (i32, i32) {
    %c0_i32 = arith.constant 0 : i32
    %c0_i32_0 = arith.constant 0 : i32
    %c0_i32_1 = arith.constant 0 : i32
    return %c0_i32, %c0_i32_0 : i32, i32
  }
  func.func @transform_4(%arg0: i32, %arg1: i32) -> (i32, i32) {
    %c0_i32 = arith.constant 0 : i32
    %c0_i32_0 = arith.constant 0 : i32
    %c0_i32_1 = arith.constant 0 : i32
    return %c0_i32, %c0_i32_0 : i32, i32
  }
  func.func @transform_5(%arg0: i32, %arg1: i32) -> i32 {
    %c0_i32 = arith.constant 0 : i32
    %c0_i32_0 = arith.constant 0 : i32
    return %c0_i32 : i32
  }
  func.func @transform_6(%arg0: i32, %arg1: i32) -> (i32, i32, i32) {
    %c0_i32 = arith.constant 0 : i32
    %c0_i32_0 = arith.constant 0 : i32
    return %arg0, %c0_i32, %arg1 : i32, i32, i32
  }
}

module attributes {stable_mosaic.version = 11 : i64} {
  func.func @_stage_kernel(%arg0: i32, %arg1: i32, %arg2: memref<1x8x422xf32, #tpu.memory_space<vmem>>, %arg3: memref<8x80xbf16, #tpu.memory_space<vmem>>, %arg4: memref<8x1xf32, #tpu.memory_space<vmem>>, %arg5: memref<1xf32, #tpu.memory_space<smem>>, %arg6: memref<1x8x384xf32, #tpu.memory_space<vmem>>) attributes {dimension_semantics = [#tpu.dimension_semantics<parallel>, #tpu.dimension_semantics<parallel>], iteration_bounds = array<i64: 2, 1>, scalar_prefetch = 0 : i64, scratch_operands = 0 : i64, tpu.core_type = #tpu.core_type<tc>, window_params = [{transform_indices = @transform_0, window_bounds = array<i64: 1, 8, 422>}, {pipeline_mode = #tpu.pipeline_mode<synchronous>, transform_indices = @transform_1, window_bounds = array<i64: 8, 80>}, {pipeline_mode = #tpu.pipeline_mode<synchronous>, transform_indices = @transform_2, window_bounds = array<i64: 8, 1>}, {transform_indices = @transform_3, window_bounds = array<i64: 1>}, {transform_indices = @transform_4, window_bounds = array<i64: 1, 8, 384>}]} {
    %c0 = arith.constant 0 : index
    %c0_0 = arith.constant 0 : index
    %c0_1 = arith.constant 0 : index
    %0 = vector.load %arg2[%c0, %c0_0, %c0_1] : memref<1x8x422xf32, #tpu.memory_space<vmem>>, vector<1x8x384xf32>
    %1 = vector.shape_cast %0 : vector<1x8x384xf32> to vector<8x384xf32>
    %c0_2 = arith.constant 0 : index
    %c0_3 = arith.constant 0 : index
    %c1 = arith.constant 1 : index
    %2 = vector.load %arg2[%c0_2, %c0_3, %c1] : memref<1x8x422xf32, #tpu.memory_space<vmem>>, vector<1x8x384xf32>
    %3 = vector.shape_cast %2 : vector<1x8x384xf32> to vector<8x384xf32>
    %c0_4 = arith.constant 0 : index
    %c0_5 = arith.constant 0 : index
    %c2 = arith.constant 2 : index
    %4 = vector.load %arg2[%c0_4, %c0_5, %c2] : memref<1x8x422xf32, #tpu.memory_space<vmem>>, vector<1x8x384xf32>
    %5 = vector.shape_cast %4 : vector<1x8x384xf32> to vector<8x384xf32>
    %c0_6 = arith.constant 0 : index
    %c0_7 = arith.constant 0 : index
    %c18 = arith.constant 18 : index
    %6 = vector.load %arg2[%c0_6, %c0_7, %c18] : memref<1x8x422xf32, #tpu.memory_space<vmem>>, vector<1x8x384xf32>
    %7 = vector.shape_cast %6 : vector<1x8x384xf32> to vector<8x384xf32>
    %c0_8 = arith.constant 0 : index
    %c0_9 = arith.constant 0 : index
    %c19 = arith.constant 19 : index
    %8 = vector.load %arg2[%c0_8, %c0_9, %c19] : memref<1x8x422xf32, #tpu.memory_space<vmem>>, vector<1x8x384xf32>
    %9 = vector.shape_cast %8 : vector<1x8x384xf32> to vector<8x384xf32>
    %c0_10 = arith.constant 0 : index
    %c0_11 = arith.constant 0 : index
    %c20 = arith.constant 20 : index
    %10 = vector.load %arg2[%c0_10, %c0_11, %c20] : memref<1x8x422xf32, #tpu.memory_space<vmem>>, vector<1x8x384xf32>
    %11 = vector.shape_cast %10 : vector<1x8x384xf32> to vector<8x384xf32>
    %c0_12 = arith.constant 0 : index
    %c0_13 = arith.constant 0 : index
    %c36 = arith.constant 36 : index
    %12 = vector.load %arg2[%c0_12, %c0_13, %c36] : memref<1x8x422xf32, #tpu.memory_space<vmem>>, vector<1x8x384xf32>
    %13 = vector.shape_cast %12 : vector<1x8x384xf32> to vector<8x384xf32>
    %c0_14 = arith.constant 0 : index
    %c0_15 = arith.constant 0 : index
    %c37 = arith.constant 37 : index
    %14 = vector.load %arg2[%c0_14, %c0_15, %c37] : memref<1x8x422xf32, #tpu.memory_space<vmem>>, vector<1x8x384xf32>
    %15 = vector.shape_cast %14 : vector<1x8x384xf32> to vector<8x384xf32>
    %c0_16 = arith.constant 0 : index
    %c0_17 = arith.constant 0 : index
    %c38 = arith.constant 38 : index
    %16 = vector.load %arg2[%c0_16, %c0_17, %c38] : memref<1x8x422xf32, #tpu.memory_space<vmem>>, vector<1x8x384xf32>
    %17 = vector.shape_cast %16 : vector<1x8x384xf32> to vector<8x384xf32>
    %cst = arith.constant 0.000000e+00 : f32
    %18 = vector.broadcast %cst : f32 to vector<8x384xf32>
    %19 = tpu.concatenate %1, %3, %5, %7, %9, %11, %13, %15, %17, %18 in 0 : vector<8x384xf32>, vector<8x384xf32>, vector<8x384xf32>, vector<8x384xf32>, vector<8x384xf32>, vector<8x384xf32>, vector<8x384xf32>, vector<8x384xf32>, vector<8x384xf32>, vector<8x384xf32> -> vector<80x384xf32>
    %20 = arith.truncf %19 : vector<80x384xf32> to vector<80x384xbf16>
    %c0_18 = arith.constant 0 : index
    %c0_19 = arith.constant 0 : index
    %21 = vector.load %arg3[%c0_18, %c0_19] : memref<8x80xbf16, #tpu.memory_space<vmem>>, vector<8x80xbf16>
    %cst_20 = arith.constant dense<0.000000e+00> : vector<8x384xf32>
    %22 = tpu.matmul %21, %20, %cst_20 {dimension_numbers = #tpu.dot_dimension_numbers<[1], [0], [0], [1], [0, 0, 1, 1], [], []>} : vector<8x80xbf16>, vector<80x384xbf16>, vector<8x384xf32> -> vector<8x384xf32>
    %c0_21 = arith.constant 0 : index
    %c0_22 = arith.constant 0 : index
    %23 = vector.load %arg4[%c0_21, %c0_22] : memref<8x1xf32, #tpu.memory_space<vmem>>, vector<8x1xf32>
    %24 = vector.broadcast %23 : vector<8x1xf32> to vector<8x384xf32>
    %25 = arith.addf %22, %24 : vector<8x384xf32>
    %cst_23 = arith.constant 0.000000e+00 : f32
    %26 = vector.broadcast %cst_23 : f32 to vector<8x384xf32>
    %27 = arith.cmpf oge, %25, %26 : vector<8x384xf32>
    %c0_24 = arith.constant 0 : index
    %28 = memref.load %arg5[%c0_24] : memref<1xf32, #tpu.memory_space<smem>>
    %29 = vector.broadcast %28 : f32 to vector<8x384xf32>
    %30 = arith.mulf %29, %25 : vector<8x384xf32>
    %31 = arith.select %27, %25, %30 : vector<8x384xi1>, vector<8x384xf32>
    %c0_25 = arith.constant 0 : index
    %c0_26 = arith.constant 0 : index
    %c0_27 = arith.constant 0 : index
    %32 = vector.load %arg6[%c0_25, %c0_26, %c0_27] : memref<1x8x384xf32, #tpu.memory_space<vmem>>, vector<1x8x384xf32>
    %33 = vector.shape_cast %32 : vector<1x8x384xf32> to vector<8x384xf32>
    %34 = vector.shape_cast %31 : vector<8x384xf32> to vector<1x8x384xf32>
    tpu.vector_store %arg6[%c0_25, %c0_26, %c0_27], %34 {strides = array<i32>} : memref<1x8x384xf32, #tpu.memory_space<vmem>>, vector<1x8x384xf32>,
    return
  }
  func.func @transform_0(%arg0: i32, %arg1: i32) -> (i32, i32, i32) {
    %c0_i32 = arith.constant 0 : i32
    %c0_i32_0 = arith.constant 0 : i32
    %c0_i32_1 = arith.constant 0 : i32
    return %arg0, %c0_i32, %c0_i32_0 : i32, i32, i32
  }
  func.func @transform_1(%arg0: i32, %arg1: i32) -> (i32, i32) {
    %c0_i32 = arith.constant 0 : i32
    %c0_i32_0 = arith.constant 0 : i32
    %c0_i32_1 = arith.constant 0 : i32
    return %c0_i32, %c0_i32_0 : i32, i32
  }
  func.func @transform_2(%arg0: i32, %arg1: i32) -> (i32, i32) {
    %c0_i32 = arith.constant 0 : i32
    %c0_i32_0 = arith.constant 0 : i32
    %c0_i32_1 = arith.constant 0 : i32
    return %c0_i32, %c0_i32_0 : i32, i32
  }
  func.func @transform_3(%arg0: i32, %arg1: i32) -> i32 {
    %c0_i32 = arith.constant 0 : i32
    %c0_i32_0 = arith.constant 0 : i32
    return %c0_i32 : i32
  }
  func.func @transform_4(%arg0: i32, %arg1: i32) -> (i32, i32, i32) {
    %c0_i32 = arith.constant 0 : i32
    %c0_i32_0 = arith.constant 0 : i32
    return %arg0, %c0_i32, %arg1 : i32, i32, i32
  }
}

module attributes {stable_mosaic.version = 11 : i64} {
  func.func @_stage_kernel(%arg0: i32, %arg1: i32, %arg2: memref<1x8x422xf32, #tpu.memory_space<vmem>>, %arg3: memref<8x80xbf16, #tpu.memory_space<vmem>>, %arg4: memref<8x1xf32, #tpu.memory_space<vmem>>, %arg5: memref<32x8xbf16, #tpu.memory_space<vmem>>, %arg6: memref<32x1xf32, #tpu.memory_space<vmem>>, %arg7: memref<2xf32, #tpu.memory_space<smem>>, %arg8: memref<1x32x384xf32, #tpu.memory_space<vmem>>) attributes {dimension_semantics = [#tpu.dimension_semantics<parallel>, #tpu.dimension_semantics<parallel>], iteration_bounds = array<i64: 2, 1>, scalar_prefetch = 0 : i64, scratch_operands = 0 : i64, tpu.core_type = #tpu.core_type<tc>, window_params = [{transform_indices = @transform_0, window_bounds = array<i64: 1, 8, 422>}, {pipeline_mode = #tpu.pipeline_mode<synchronous>, transform_indices = @transform_1, window_bounds = array<i64: 8, 80>}, {pipeline_mode = #tpu.pipeline_mode<synchronous>, transform_indices = @transform_2, window_bounds = array<i64: 8, 1>}, {pipeline_mode = #tpu.pipeline_mode<synchronous>, transform_indices = @transform_3, window_bounds = array<i64: 32, 8>}, {pipeline_mode = #tpu.pipeline_mode<synchronous>, transform_indices = @transform_4, window_bounds = array<i64: 32, 1>}, {transform_indices = @transform_5, window_bounds = array<i64: 2>}, {transform_indices = @transform_6, window_bounds = array<i64: 1, 32, 384>}]} {
    %c0 = arith.constant 0 : index
    %c0_0 = arith.constant 0 : index
    %c0_1 = arith.constant 0 : index
    %0 = vector.load %arg2[%c0, %c0_0, %c0_1] : memref<1x8x422xf32, #tpu.memory_space<vmem>>, vector<1x8x384xf32>
    %1 = vector.shape_cast %0 : vector<1x8x384xf32> to vector<8x384xf32>
    %c0_2 = arith.constant 0 : index
    %c0_3 = arith.constant 0 : index
    %c1 = arith.constant 1 : index
    %2 = vector.load %arg2[%c0_2, %c0_3, %c1] : memref<1x8x422xf32, #tpu.memory_space<vmem>>, vector<1x8x384xf32>
    %3 = vector.shape_cast %2 : vector<1x8x384xf32> to vector<8x384xf32>
    %c0_4 = arith.constant 0 : index
    %c0_5 = arith.constant 0 : index
    %c2 = arith.constant 2 : index
    %4 = vector.load %arg2[%c0_4, %c0_5, %c2] : memref<1x8x422xf32, #tpu.memory_space<vmem>>, vector<1x8x384xf32>
    %5 = vector.shape_cast %4 : vector<1x8x384xf32> to vector<8x384xf32>
    %c0_6 = arith.constant 0 : index
    %c0_7 = arith.constant 0 : index
    %c18 = arith.constant 18 : index
    %6 = vector.load %arg2[%c0_6, %c0_7, %c18] : memref<1x8x422xf32, #tpu.memory_space<vmem>>, vector<1x8x384xf32>
    %7 = vector.shape_cast %6 : vector<1x8x384xf32> to vector<8x384xf32>
    %c0_8 = arith.constant 0 : index
    %c0_9 = arith.constant 0 : index
    %c19 = arith.constant 19 : index
    %8 = vector.load %arg2[%c0_8, %c0_9, %c19] : memref<1x8x422xf32, #tpu.memory_space<vmem>>, vector<1x8x384xf32>
    %9 = vector.shape_cast %8 : vector<1x8x384xf32> to vector<8x384xf32>
    %c0_10 = arith.constant 0 : index
    %c0_11 = arith.constant 0 : index
    %c20 = arith.constant 20 : index
    %10 = vector.load %arg2[%c0_10, %c0_11, %c20] : memref<1x8x422xf32, #tpu.memory_space<vmem>>, vector<1x8x384xf32>
    %11 = vector.shape_cast %10 : vector<1x8x384xf32> to vector<8x384xf32>
    %c0_12 = arith.constant 0 : index
    %c0_13 = arith.constant 0 : index
    %c36 = arith.constant 36 : index
    %12 = vector.load %arg2[%c0_12, %c0_13, %c36] : memref<1x8x422xf32, #tpu.memory_space<vmem>>, vector<1x8x384xf32>
    %13 = vector.shape_cast %12 : vector<1x8x384xf32> to vector<8x384xf32>
    %c0_14 = arith.constant 0 : index
    %c0_15 = arith.constant 0 : index
    %c37 = arith.constant 37 : index
    %14 = vector.load %arg2[%c0_14, %c0_15, %c37] : memref<1x8x422xf32, #tpu.memory_space<vmem>>, vector<1x8x384xf32>
    %15 = vector.shape_cast %14 : vector<1x8x384xf32> to vector<8x384xf32>
    %c0_16 = arith.constant 0 : index
    %c0_17 = arith.constant 0 : index
    %c38 = arith.constant 38 : index
    %16 = vector.load %arg2[%c0_16, %c0_17, %c38] : memref<1x8x422xf32, #tpu.memory_space<vmem>>, vector<1x8x384xf32>
    %17 = vector.shape_cast %16 : vector<1x8x384xf32> to vector<8x384xf32>
    %cst = arith.constant 0.000000e+00 : f32
    %18 = vector.broadcast %cst : f32 to vector<8x384xf32>
    %19 = tpu.concatenate %1, %3, %5, %7, %9, %11, %13, %15, %17, %18 in 0 : vector<8x384xf32>, vector<8x384xf32>, vector<8x384xf32>, vector<8x384xf32>, vector<8x384xf32>, vector<8x384xf32>, vector<8x384xf32>, vector<8x384xf32>, vector<8x384xf32>, vector<8x384xf32> -> vector<80x384xf32>
    %20 = arith.truncf %19 : vector<80x384xf32> to vector<80x384xbf16>
    %c0_18 = arith.constant 0 : index
    %c0_19 = arith.constant 0 : index
    %21 = vector.load %arg3[%c0_18, %c0_19] : memref<8x80xbf16, #tpu.memory_space<vmem>>, vector<8x80xbf16>
    %cst_20 = arith.constant dense<0.000000e+00> : vector<8x384xf32>
    %22 = tpu.matmul %21, %20, %cst_20 {dimension_numbers = #tpu.dot_dimension_numbers<[1], [0], [0], [1], [0, 0, 1, 1], [], []>} : vector<8x80xbf16>, vector<80x384xbf16>, vector<8x384xf32> -> vector<8x384xf32>
    %c0_21 = arith.constant 0 : index
    %c0_22 = arith.constant 0 : index
    %23 = vector.load %arg4[%c0_21, %c0_22] : memref<8x1xf32, #tpu.memory_space<vmem>>, vector<8x1xf32>
    %24 = vector.broadcast %23 : vector<8x1xf32> to vector<8x384xf32>
    %25 = arith.addf %22, %24 : vector<8x384xf32>
    %cst_23 = arith.constant 0.000000e+00 : f32
    %26 = vector.broadcast %cst_23 : f32 to vector<8x384xf32>
    %27 = arith.cmpf oge, %25, %26 : vector<8x384xf32>
    %c0_24 = arith.constant 0 : index
    %28 = memref.load %arg7[%c0_24] : memref<2xf32, #tpu.memory_space<smem>>
    %29 = vector.broadcast %28 : f32 to vector<8x384xf32>
    %30 = arith.mulf %29, %25 : vector<8x384xf32>
    %31 = arith.select %27, %25, %30 : vector<8x384xi1>, vector<8x384xf32>
    %32 = arith.truncf %31 : vector<8x384xf32> to vector<8x384xbf16>
    %c0_25 = arith.constant 0 : index
    %c0_26 = arith.constant 0 : index
    %33 = vector.load %arg5[%c0_25, %c0_26] : memref<32x8xbf16, #tpu.memory_space<vmem>>, vector<32x8xbf16>
    %cst_27 = arith.constant dense<0.000000e+00> : vector<32x384xf32>
    %34 = tpu.matmul %33, %32, %cst_27 {dimension_numbers = #tpu.dot_dimension_numbers<[1], [0], [0], [1], [0, 0, 1, 1], [], []>} : vector<32x8xbf16>, vector<8x384xbf16>, vector<32x384xf32> -> vector<32x384xf32>
    %c0_28 = arith.constant 0 : index
    %c0_29 = arith.constant 0 : index
    %35 = vector.load %arg6[%c0_28, %c0_29] : memref<32x1xf32, #tpu.memory_space<vmem>>, vector<32x1xf32>
    %36 = vector.broadcast %35 : vector<32x1xf32> to vector<32x384xf32>
    %37 = arith.addf %34, %36 : vector<32x384xf32>
    %cst_30 = arith.constant 0.000000e+00 : f32
    %38 = vector.broadcast %cst_30 : f32 to vector<32x384xf32>
    %39 = arith.cmpf oge, %37, %38 : vector<32x384xf32>
    %c1_31 = arith.constant 1 : index
    %40 = memref.load %arg7[%c1_31] : memref<2xf32, #tpu.memory_space<smem>>
    %41 = vector.broadcast %40 : f32 to vector<32x384xf32>
    %42 = arith.mulf %41, %37 : vector<32x384xf32>
    %43 = arith.select %39, %37, %42 : vector<32x384xi1>, vector<32x384xf32>
    %c0_32 = arith.constant 0 : index
    %c0_33 = arith.constant 0 : index
    %c0_34 = arith.constant 0 : index
    %44 = vector.load %arg8[%c0_32, %c0_33, %c0_34] : memref<1x32x384xf32, #tpu.memory_space<vmem>>, vector<1x32x384xf32>
    %45 = vector.shape_cast %44 : vector<1x32x384xf32> to vector<32x384xf32>
    %46 = vector.shape_cast %43 : vector<32x384xf32> to vector<1x32x384xf32>
    tpu.vector_store %arg8[%c0_32, %c0_33, %c0_34], %46 {strides = array<i32>} : memref<1x32x384xf32, #tpu.memory_space<vmem>>, vector<1x32x384xf32>,
    return
  }
  func.func @transform_0(%arg0: i32, %arg1: i32) -> (i32, i32, i32) {
    %c0_i32 = arith.constant 0 : i32
    %c0_i32_0 = arith.constant 0 : i32
    %c0_i32_1 = arith.constant 0 : i32
    return %arg0, %c0_i32, %c0_i32_0 : i32, i32, i32
  }
  func.func @transform_1(%arg0: i32, %arg1: i32) -> (i32, i32) {
    %c0_i32 = arith.constant 0 : i32
    %c0_i32_0 = arith.constant 0 : i32
    %c0_i32_1 = arith.constant 0 : i32
    return %c0_i32, %c0_i32_0 : i32, i32
  }
  func.func @transform_2(%arg0: i32, %arg1: i32) -> (i32, i32) {
    %c0_i32 = arith.constant 0 : i32
    %c0_i32_0 = arith.constant 0 : i32
    %c0_i32_1 = arith.constant 0 : i32
    return %c0_i32, %c0_i32_0 : i32, i32
  }
  func.func @transform_3(%arg0: i32, %arg1: i32) -> (i32, i32) {
    %c0_i32 = arith.constant 0 : i32
    %c0_i32_0 = arith.constant 0 : i32
    %c0_i32_1 = arith.constant 0 : i32
    return %c0_i32, %c0_i32_0 : i32, i32
  }
  func.func @transform_4(%arg0: i32, %arg1: i32) -> (i32, i32) {
    %c0_i32 = arith.constant 0 : i32
    %c0_i32_0 = arith.constant 0 : i32
    %c0_i32_1 = arith.constant 0 : i32
    return %c0_i32, %c0_i32_0 : i32, i32
  }
  func.func @transform_5(%arg0: i32, %arg1: i32) -> i32 {
    %c0_i32 = arith.constant 0 : i32
    %c0_i32_0 = arith.constant 0 : i32
    return %c0_i32 : i32
  }
  func.func @transform_6(%arg0: i32, %arg1: i32) -> (i32, i32, i32) {
    %c0_i32 = arith.constant 0 : i32
    %c0_i32_0 = arith.constant 0 : i32
    return %arg0, %c0_i32, %arg1 : i32, i32, i32
  }
}

module attributes {stable_mosaic.version = 11 : i64} {
  func.func @_stage_kernel(%arg0: i32, %arg1: i32, %arg2: memref<1x32x468xf32, #tpu.memory_space<vmem>>, %arg3: memref<16x800xbf16, #tpu.memory_space<vmem>>, %arg4: memref<16x1xf32, #tpu.memory_space<vmem>>, %arg5: memref<4x16xbf16, #tpu.memory_space<vmem>>, %arg6: memref<4x1xf32, #tpu.memory_space<vmem>>, %arg7: memref<2xf32, #tpu.memory_space<smem>>, %arg8: memref<1x4x384xf32, #tpu.memory_space<vmem>>) attributes {dimension_semantics = [#tpu.dimension_semantics<parallel>, #tpu.dimension_semantics<parallel>], iteration_bounds = array<i64: 2, 1>, scalar_prefetch = 0 : i64, scratch_operands = 0 : i64, tpu.core_type = #tpu.core_type<tc>, window_params = [{transform_indices = @transform_0, window_bounds = array<i64: 1, 32, 468>}, {pipeline_mode = #tpu.pipeline_mode<synchronous>, transform_indices = @transform_1, window_bounds = array<i64: 16, 800>}, {pipeline_mode = #tpu.pipeline_mode<synchronous>, transform_indices = @transform_2, window_bounds = array<i64: 16, 1>}, {pipeline_mode = #tpu.pipeline_mode<synchronous>, transform_indices = @transform_3, window_bounds = array<i64: 4, 16>}, {pipeline_mode = #tpu.pipeline_mode<synchronous>, transform_indices = @transform_4, window_bounds = array<i64: 4, 1>}, {transform_indices = @transform_5, window_bounds = array<i64: 2>}, {transform_indices = @transform_6, window_bounds = array<i64: 1, 4, 384>}]} {
    %c0 = arith.constant 0 : index
    %c0_0 = arith.constant 0 : index
    %c0_1 = arith.constant 0 : index
    %0 = vector.load %arg2[%c0, %c0_0, %c0_1] : memref<1x32x468xf32, #tpu.memory_space<vmem>>, vector<1x32x384xf32>
    %1 = vector.shape_cast %0 : vector<1x32x384xf32> to vector<32x384xf32>
    %c0_2 = arith.constant 0 : index
    %c0_3 = arith.constant 0 : index
    %c1 = arith.constant 1 : index
    %2 = vector.load %arg2[%c0_2, %c0_3, %c1] : memref<1x32x468xf32, #tpu.memory_space<vmem>>, vector<1x32x384xf32>
    %3 = vector.shape_cast %2 : vector<1x32x384xf32> to vector<32x384xf32>
    %c0_4 = arith.constant 0 : index
    %c0_5 = arith.constant 0 : index
    %c2 = arith.constant 2 : index
    %4 = vector.load %arg2[%c0_4, %c0_5, %c2] : memref<1x32x468xf32, #tpu.memory_space<vmem>>, vector<1x32x384xf32>
    %5 = vector.shape_cast %4 : vector<1x32x384xf32> to vector<32x384xf32>
    %c0_6 = arith.constant 0 : index
    %c0_7 = arith.constant 0 : index
    %c3 = arith.constant 3 : index
    %6 = vector.load %arg2[%c0_6, %c0_7, %c3] : memref<1x32x468xf32, #tpu.memory_space<vmem>>, vector<1x32x384xf32>
    %7 = vector.shape_cast %6 : vector<1x32x384xf32> to vector<32x384xf32>
    %c0_8 = arith.constant 0 : index
    %c0_9 = arith.constant 0 : index
    %c4 = arith.constant 4 : index
    %8 = vector.load %arg2[%c0_8, %c0_9, %c4] : memref<1x32x468xf32, #tpu.memory_space<vmem>>, vector<1x32x384xf32>
    %9 = vector.shape_cast %8 : vector<1x32x384xf32> to vector<32x384xf32>
    %c0_10 = arith.constant 0 : index
    %c0_11 = arith.constant 0 : index
    %c20 = arith.constant 20 : index
    %10 = vector.load %arg2[%c0_10, %c0_11, %c20] : memref<1x32x468xf32, #tpu.memory_space<vmem>>, vector<1x32x384xf32>
    %11 = vector.shape_cast %10 : vector<1x32x384xf32> to vector<32x384xf32>
    %c0_12 = arith.constant 0 : index
    %c0_13 = arith.constant 0 : index
    %c21 = arith.constant 21 : index
    %12 = vector.load %arg2[%c0_12, %c0_13, %c21] : memref<1x32x468xf32, #tpu.memory_space<vmem>>, vector<1x32x384xf32>
    %13 = vector.shape_cast %12 : vector<1x32x384xf32> to vector<32x384xf32>
    %c0_14 = arith.constant 0 : index
    %c0_15 = arith.constant 0 : index
    %c22 = arith.constant 22 : index
    %14 = vector.load %arg2[%c0_14, %c0_15, %c22] : memref<1x32x468xf32, #tpu.memory_space<vmem>>, vector<1x32x384xf32>
    %15 = vector.shape_cast %14 : vector<1x32x384xf32> to vector<32x384xf32>
    %c0_16 = arith.constant 0 : index
    %c0_17 = arith.constant 0 : index
    %c23 = arith.constant 23 : index
    %16 = vector.load %arg2[%c0_16, %c0_17, %c23] : memref<1x32x468xf32, #tpu.memory_space<vmem>>, vector<1x32x384xf32>
    %17 = vector.shape_cast %16 : vector<1x32x384xf32> to vector<32x384xf32>
    %c0_18 = arith.constant 0 : index
    %c0_19 = arith.constant 0 : index
    %c24 = arith.constant 24 : index
    %18 = vector.load %arg2[%c0_18, %c0_19, %c24] : memref<1x32x468xf32, #tpu.memory_space<vmem>>, vector<1x32x384xf32>
    %19 = vector.shape_cast %18 : vector<1x32x384xf32> to vector<32x384xf32>
    %c0_20 = arith.constant 0 : index
    %c0_21 = arith.constant 0 : index
    %c40 = arith.constant 40 : index
    %20 = vector.load %arg2[%c0_20, %c0_21, %c40] : memref<1x32x468xf32, #tpu.memory_space<vmem>>, vector<1x32x384xf32>
    %21 = vector.shape_cast %20 : vector<1x32x384xf32> to vector<32x384xf32>
    %c0_22 = arith.constant 0 : index
    %c0_23 = arith.constant 0 : index
    %c41 = arith.constant 41 : index
    %22 = vector.load %arg2[%c0_22, %c0_23, %c41] : memref<1x32x468xf32, #tpu.memory_space<vmem>>, vector<1x32x384xf32>
    %23 = vector.shape_cast %22 : vector<1x32x384xf32> to vector<32x384xf32>
    %c0_24 = arith.constant 0 : index
    %c0_25 = arith.constant 0 : index
    %c42 = arith.constant 42 : index
    %24 = vector.load %arg2[%c0_24, %c0_25, %c42] : memref<1x32x468xf32, #tpu.memory_space<vmem>>, vector<1x32x384xf32>
    %25 = vector.shape_cast %24 : vector<1x32x384xf32> to vector<32x384xf32>
    %c0_26 = arith.constant 0 : index
    %c0_27 = arith.constant 0 : index
    %c43 = arith.constant 43 : index
    %26 = vector.load %arg2[%c0_26, %c0_27, %c43] : memref<1x32x468xf32, #tpu.memory_space<vmem>>, vector<1x32x384xf32>
    %27 = vector.shape_cast %26 : vector<1x32x384xf32> to vector<32x384xf32>
    %c0_28 = arith.constant 0 : index
    %c0_29 = arith.constant 0 : index
    %c44 = arith.constant 44 : index
    %28 = vector.load %arg2[%c0_28, %c0_29, %c44] : memref<1x32x468xf32, #tpu.memory_space<vmem>>, vector<1x32x384xf32>
    %29 = vector.shape_cast %28 : vector<1x32x384xf32> to vector<32x384xf32>
    %c0_30 = arith.constant 0 : index
    %c0_31 = arith.constant 0 : index
    %c60 = arith.constant 60 : index
    %30 = vector.load %arg2[%c0_30, %c0_31, %c60] : memref<1x32x468xf32, #tpu.memory_space<vmem>>, vector<1x32x384xf32>
    %31 = vector.shape_cast %30 : vector<1x32x384xf32> to vector<32x384xf32>
    %c0_32 = arith.constant 0 : index
    %c0_33 = arith.constant 0 : index
    %c61 = arith.constant 61 : index
    %32 = vector.load %arg2[%c0_32, %c0_33, %c61] : memref<1x32x468xf32, #tpu.memory_space<vmem>>, vector<1x32x384xf32>
    %33 = vector.shape_cast %32 : vector<1x32x384xf32> to vector<32x384xf32>
    %c0_34 = arith.constant 0 : index
    %c0_35 = arith.constant 0 : index
    %c62 = arith.constant 62 : index
    %34 = vector.load %arg2[%c0_34, %c0_35, %c62] : memref<1x32x468xf32, #tpu.memory_space<vmem>>, vector<1x32x384xf32>
    %35 = vector.shape_cast %34 : vector<1x32x384xf32> to vector<32x384xf32>
    %c0_36 = arith.constant 0 : index
    %c0_37 = arith.constant 0 : index
    %c63 = arith.constant 63 : index
    %36 = vector.load %arg2[%c0_36, %c0_37, %c63] : memref<1x32x468xf32, #tpu.memory_space<vmem>>, vector<1x32x384xf32>
    %37 = vector.shape_cast %36 : vector<1x32x384xf32> to vector<32x384xf32>
    %c0_38 = arith.constant 0 : index
    %c0_39 = arith.constant 0 : index
    %c64 = arith.constant 64 : index
    %38 = vector.load %arg2[%c0_38, %c0_39, %c64] : memref<1x32x468xf32, #tpu.memory_space<vmem>>, vector<1x32x384xf32>
    %39 = vector.shape_cast %38 : vector<1x32x384xf32> to vector<32x384xf32>
    %c0_40 = arith.constant 0 : index
    %c0_41 = arith.constant 0 : index
    %c80 = arith.constant 80 : index
    %40 = vector.load %arg2[%c0_40, %c0_41, %c80] : memref<1x32x468xf32, #tpu.memory_space<vmem>>, vector<1x32x384xf32>
    %41 = vector.shape_cast %40 : vector<1x32x384xf32> to vector<32x384xf32>
    %c0_42 = arith.constant 0 : index
    %c0_43 = arith.constant 0 : index
    %c81 = arith.constant 81 : index
    %42 = vector.load %arg2[%c0_42, %c0_43, %c81] : memref<1x32x468xf32, #tpu.memory_space<vmem>>, vector<1x32x384xf32>
    %43 = vector.shape_cast %42 : vector<1x32x384xf32> to vector<32x384xf32>
    %c0_44 = arith.constant 0 : index
    %c0_45 = arith.constant 0 : index
    %c82 = arith.constant 82 : index
    %44 = vector.load %arg2[%c0_44, %c0_45, %c82] : memref<1x32x468xf32, #tpu.memory_space<vmem>>, vector<1x32x384xf32>
    %45 = vector.shape_cast %44 : vector<1x32x384xf32> to vector<32x384xf32>
    %c0_46 = arith.constant 0 : index
    %c0_47 = arith.constant 0 : index
    %c83 = arith.constant 83 : index
    %46 = vector.load %arg2[%c0_46, %c0_47, %c83] : memref<1x32x468xf32, #tpu.memory_space<vmem>>, vector<1x32x384xf32>
    %47 = vector.shape_cast %46 : vector<1x32x384xf32> to vector<32x384xf32>
    %c0_48 = arith.constant 0 : index
    %c0_49 = arith.constant 0 : index
    %c84 = arith.constant 84 : index
    %48 = vector.load %arg2[%c0_48, %c0_49, %c84] : memref<1x32x468xf32, #tpu.memory_space<vmem>>, vector<1x32x384xf32>
    %49 = vector.shape_cast %48 : vector<1x32x384xf32> to vector<32x384xf32>
    %50 = tpu.concatenate %1, %3, %5, %7, %9, %11, %13, %15, %17, %19, %21, %23, %25, %27, %29, %31 in 0 : vector<32x384xf32>, vector<32x384xf32>, vector<32x384xf32>, vector<32x384xf32>, vector<32x384xf32>, vector<32x384xf32>, vector<32x384xf32>, vector<32x384xf32>, vector<32x384xf32>, vector<32x384xf32>, vector<32x384xf32>, vector<32x384xf32>, vector<32x384xf32>, vector<32x384xf32>, vector<32x384xf32>, vector<32x384xf32> -> vector<512x384xf32>
    %51 = tpu.concatenate %33, %35, %37, %39, %41, %43, %45, %47, %49 in 0 : vector<32x384xf32>, vector<32x384xf32>, vector<32x384xf32>, vector<32x384xf32>, vector<32x384xf32>, vector<32x384xf32>, vector<32x384xf32>, vector<32x384xf32>, vector<32x384xf32> -> vector<288x384xf32>
    %52 = tpu.concatenate %50, %51 in 0 : vector<512x384xf32>, vector<288x384xf32> -> vector<800x384xf32>
    %53 = arith.truncf %52 : vector<800x384xf32> to vector<800x384xbf16>
    %c0_50 = arith.constant 0 : index
    %c0_51 = arith.constant 0 : index
    %54 = vector.load %arg3[%c0_50, %c0_51] : memref<16x800xbf16, #tpu.memory_space<vmem>>, vector<16x800xbf16>
    %cst = arith.constant dense<0.000000e+00> : vector<16x384xf32>
    %55 = tpu.matmul %54, %53, %cst {dimension_numbers = #tpu.dot_dimension_numbers<[1], [0], [0], [1], [0, 0, 1, 1], [], []>} : vector<16x800xbf16>, vector<800x384xbf16>, vector<16x384xf32> -> vector<16x384xf32>
    %c0_52 = arith.constant 0 : index
    %c0_53 = arith.constant 0 : index
    %56 = vector.load %arg4[%c0_52, %c0_53] : memref<16x1xf32, #tpu.memory_space<vmem>>, vector<16x1xf32>
    %57 = vector.broadcast %56 : vector<16x1xf32> to vector<16x384xf32>
    %58 = arith.addf %55, %57 : vector<16x384xf32>
    %cst_54 = arith.constant 0.000000e+00 : f32
    %59 = vector.broadcast %cst_54 : f32 to vector<16x384xf32>
    %60 = arith.cmpf oge, %58, %59 : vector<16x384xf32>
    %c0_55 = arith.constant 0 : index
    %61 = memref.load %arg7[%c0_55] : memref<2xf32, #tpu.memory_space<smem>>
    %62 = vector.broadcast %61 : f32 to vector<16x384xf32>
    %63 = arith.mulf %62, %58 : vector<16x384xf32>
    %64 = arith.select %60, %58, %63 : vector<16x384xi1>, vector<16x384xf32>
    %65 = arith.truncf %64 : vector<16x384xf32> to vector<16x384xbf16>
    %c0_56 = arith.constant 0 : index
    %c0_57 = arith.constant 0 : index
    %66 = vector.load %arg5[%c0_56, %c0_57] : memref<4x16xbf16, #tpu.memory_space<vmem>>, vector<4x16xbf16>
    %cst_58 = arith.constant dense<0.000000e+00> : vector<4x384xf32>
    %67 = tpu.matmul %66, %65, %cst_58 {dimension_numbers = #tpu.dot_dimension_numbers<[1], [0], [0], [1], [0, 0, 1, 1], [], []>} : vector<4x16xbf16>, vector<16x384xbf16>, vector<4x384xf32> -> vector<4x384xf32>
    %c0_59 = arith.constant 0 : index
    %c0_60 = arith.constant 0 : index
    %68 = vector.load %arg6[%c0_59, %c0_60] : memref<4x1xf32, #tpu.memory_space<vmem>>, vector<4x1xf32>
    %69 = vector.broadcast %68 : vector<4x1xf32> to vector<4x384xf32>
    %70 = arith.addf %67, %69 : vector<4x384xf32>
    %71 = arith.negf %70 : vector<4x384xf32>
    %72 = math.exp %71 : vector<4x384xf32>
    %cst_61 = arith.constant 1.000000e+00 : f32
    %73 = vector.broadcast %cst_61 : f32 to vector<4x384xf32>
    %74 = arith.addf %73, %72 : vector<4x384xf32>
    %75 = arith.divf %73, %74 : vector<4x384xf32>
    %c0_62 = arith.constant 0 : index
    %c0_63 = arith.constant 0 : index
    %c0_64 = arith.constant 0 : index
    %76 = vector.load %arg8[%c0_62, %c0_63, %c0_64] : memref<1x4x384xf32, #tpu.memory_space<vmem>>, vector<1x4x384xf32>
    %77 = vector.shape_cast %76 : vector<1x4x384xf32> to vector<4x384xf32>
    %78 = vector.shape_cast %75 : vector<4x384xf32> to vector<1x4x384xf32>
    tpu.vector_store %arg8[%c0_62, %c0_63, %c0_64], %78 {strides = array<i32>} : memref<1x4x384xf32, #tpu.memory_space<vmem>>, vector<1x4x384xf32>,
    return
  }
  func.func @transform_0(%arg0: i32, %arg1: i32) -> (i32, i32, i32) {
    %c0_i32 = arith.constant 0 : i32
    %c0_i32_0 = arith.constant 0 : i32
    %c0_i32_1 = arith.constant 0 : i32
    return %arg0, %c0_i32, %c0_i32_0 : i32, i32, i32
  }
  func.func @transform_1(%arg0: i32, %arg1: i32) -> (i32, i32) {
    %c0_i32 = arith.constant 0 : i32
    %c0_i32_0 = arith.constant 0 : i32
    %c0_i32_1 = arith.constant 0 : i32
    return %c0_i32, %c0_i32_0 : i32, i32
  }
  func.func @transform_2(%arg0: i32, %arg1: i32) -> (i32, i32) {
    %c0_i32 = arith.constant 0 : i32
    %c0_i32_0 = arith.constant 0 : i32
    %c0_i32_1 = arith.constant 0 : i32
    return %c0_i32, %c0_i32_0 : i32, i32
  }
  func.func @transform_3(%arg0: i32, %arg1: i32) -> (i32, i32) {
    %c0_i32 = arith.constant 0 : i32
    %c0_i32_0 = arith.constant 0 : i32
    %c0_i32_1 = arith.constant 0 : i32
    return %c0_i32, %c0_i32_0 : i32, i32
  }
  func.func @transform_4(%arg0: i32, %arg1: i32) -> (i32, i32) {
    %c0_i32 = arith.constant 0 : i32
    %c0_i32_0 = arith.constant 0 : i32
    %c0_i32_1 = arith.constant 0 : i32
    return %c0_i32, %c0_i32_0 : i32, i32
  }
  func.func @transform_5(%arg0: i32, %arg1: i32) -> i32 {
    %c0_i32 = arith.constant 0 : i32
    %c0_i32_0 = arith.constant 0 : i32
    return %c0_i32 : i32
  }
  func.func @transform_6(%arg0: i32, %arg1: i32) -> (i32, i32, i32) {
    %c0_i32 = arith.constant 0 : i32
    %c0_i32_0 = arith.constant 0 : i32
    return %arg0, %c0_i32, %arg1 : i32, i32, i32
  }
}

</mosaic_0001>

<llo_original>
// kernel: fsrcnn20_forward.5
$region0: #{fsrcnn20_forward.5}
  #allocation0 [shape = 'u32[]', space=smem, size = 0x4, offset = 0x4, fixed_abs, tag = 'smem constant byte address 0x4 - core index']
  #allocation1 [shape = 'u32[144,128]{1,0:T(1,128)}', space=vmem, size = 0x12000, scoped, tag = 'internal scratch']
  #allocation2 [shape = 'f32[1]{0:T(128)S(6)}', space=smem, size = 0x200, scoped, tag = 'scoped memory for fsrcnn20_forward.5']
  %s0 = inlined_call_operand.vmem [shape: f32[2,8,422], index: 0, kind: input, shape index: {}]
  %s1 = inlined_call_operand.vmem [shape: bf16[8,80], index: 1, kind: input, shape index: {}]
  %s2 = inlined_call_operand.vmem [shape: f32[8,1], index: 2, kind: input, shape index: {}]
  %s3 = inlined_call_operand.<no memory space> [shape: f32[1], index: 3, kind: input, shape index: {}]
  %s4 = inlined_call_operand.vmem [shape: f32[2,8,384], index: 4, kind: output, shape index: {}]
  %s5 = sld [smem:[#allocation0]]
  $region49: #{fsrcnn20_forward.5} parent=0
    _
  %s7 = ssub.s32 1, %s5
  %s8 = scalar_select 0, %s7, %s5
  %9 = sst [smem:[#allocation2]] %s3
  loop: start=0, step=1, limit=4
  $region2: #{fsrcnn20_forward.5} parent=0 // loop_pre_header
    _
  $region3: #{fsrcnn20_forward.5} parent=0 // loop_header
    %s11 = sphi 0, %s15
    %p12 = scmp.ge.s32.totalorder %s11, 4
    %s18 = sphi 0, %s30
    %s19 = sphi 0, %s26
    %s20 = sphi 0, %s18
    %s21 = sphi 0, %s19
    %s22 = sphi 0, %s20
    %s23 = sphi 0, %s21
    %s33 = sphi 0, %s35
    %s36 = sphi 0, %s33
    %s37 = sphi 0, %s36
    %s53 = sphi 0, %s37
    %s57 = sphi 0, %s57
    %s59 = sphi 0, %s57
    %s60 = sphi 0, %s59
    %s74 = sphi 0, %s60
    %s78 = sphi 0, %s78
    %s80 = sphi 0, %s78
    %s81 = sphi 0, %s80
    %s95 = sphi 0, %s81
    %s99 = sphi 0, %s99
    %s101 = sphi 0, %s99
    %s102 = sphi 0, %s101
    %s116 = sphi 0, %s102
    %s124 = sphi 0, %s126
    %s127 = sphi 0, %s124
    %s128 = sphi 0, %s127
    %s144 = sphi 0, %s128
  $region4: #{fsrcnn20_forward.5} parent=0 // loop_header_branch
    %14 = sbr.rel (%p12) target = $region8
  $region5: #{fsrcnn20_forward.5} parent=0 // loop_body
    %s16 = ssub.s32 %s11, 1
    %s17 = ssub.s32 %s11, 2
    %s24 = sadd.s32 1, %s19
    %p25 = scmp.ge.s32.totalorder %s24, 1
    %s26 = scalar_select %p25, 0, %s24
    %s27 = sadd.s32 1, %s18
    %s28 = scalar_select %p25, %s27, %s18
    %p29 = scmp.ge.s32.totalorder %s28, 2
    %s30 = scalar_select %p29, 0, %s28
    %s31 = ssub.s32 %s18, %s30
    %p32 = scmp.eq.s32.totalorder %s31, 0
    %s34 = sadd.s32 %s33, 1
    %s35 = scalar_select %p32, %s33, %s34
    %p38 = pneg %p32
    %p39 = scmp.eq.s32.totalorder %s11, 1
    %p40 = por %p38, %p39
    %p41 = scmp.ne.s32.totalorder %s33, %s36
    %p42 = scmp.eq.s32.totalorder %s11, 0
    %p43 = por %p41, %p42
    %p44 = scmp.ne.s32.totalorder %s33, %s36
    %p45 = scmp.eq.s32.totalorder %s16, 1
    %p46 = por %p44, %p45
    %p47 = scmp.ne.s32.totalorder %s36, %s37
    %p48 = scmp.eq.s32.totalorder %s16, 0
    %p49 = por %p47, %p48
    %p50 = scmp.ne.s32.totalorder %s36, %s37
    %p51 = scmp.eq.s32.totalorder %s17, 1
    %p52 = por %p50, %p51
    %p54 = scmp.ne.s32.totalorder %s37, %s53
    %p55 = scmp.eq.s32.totalorder %s17, 0
    %p56 = por %p54, %p55
    %s58 = sadd.s32 %s57, 1
    %p61 = scmp.eq.s32.totalorder %s11, 1
    %p62 = scmp.ne.s32.totalorder %s57, %s59
    %p63 = scmp.eq.s32.totalorder %s11, 0
    %p64 = por %p62, %p63
    %p65 = scmp.ne.s32.totalorder %s57, %s59
    %p66 = scmp.eq.s32.totalorder %s16, 1
    %p67 = por %p65, %p66
    %p68 = scmp.ne.s32.totalorder %s59, %s60
    %p69 = scmp.eq.s32.totalorder %s16, 0
    %p70 = por %p68, %p69
    %p71 = scmp.ne.s32.totalorder %s59, %s60
    %p72 = scmp.eq.s32.totalorder %s17, 1
    %p73 = por %p71, %p72
    %p75 = scmp.ne.s32.totalorder %s60, %s74
    %p76 = scmp.eq.s32.totalorder %s17, 0
    %p77 = por %p75, %p76
    %s79 = sadd.s32 %s78, 1
    %p82 = scmp.eq.s32.totalorder %s11, 1
    %p83 = scmp.ne.s32.totalorder %s78, %s80
    %p84 = scmp.eq.s32.totalorder %s11, 0
    %p85 = por %p83, %p84
    %p86 = scmp.ne.s32.totalorder %s78, %s80
    %p87 = scmp.eq.s32.totalorder %s16, 1
    %p88 = por %p86, %p87
    %p89 = scmp.ne.s32.totalorder %s80, %s81
    %p90 = scmp.eq.s32.totalorder %s16, 0
    %p91 = por %p89, %p90
    %p92 = scmp.ne.s32.totalorder %s80, %s81
    %p93 = scmp.eq.s32.totalorder %s17, 1
    %p94 = por %p92, %p93
    %p96 = scmp.ne.s32.totalorder %s81, %s95
    %p97 = scmp.eq.s32.totalorder %s17, 0
    %p98 = por %p96, %p97
    %s100 = sadd.s32 %s99, 1
    %p103 = scmp.eq.s32.totalorder %s11, 1
    %p104 = scmp.ne.s32.totalorder %s99, %s101
    %p105 = scmp.eq.s32.totalorder %s11, 0
    %p106 = por %p104, %p105
    %p107 = scmp.ne.s32.totalorder %s99, %s101
    %p108 = scmp.eq.s32.totalorder %s16, 1
    %p109 = por %p107, %p108
    %p110 = scmp.ne.s32.totalorder %s101, %s102
    %p111 = scmp.eq.s32.totalorder %s16, 0
    %p112 = por %p110, %p111
    %p113 = scmp.ne.s32.totalorder %s101, %s102
    %p114 = scmp.eq.s32.totalorder %s17, 1
    %p115 = por %p113, %p114
    %p117 = scmp.ne.s32.totalorder %s102, %s116
    %p118 = scmp.eq.s32.totalorder %s17, 0
    %p119 = por %p117, %p118
    %s120 = ssub.s32 %s18, %s30
    %s121 = ssub.s32 %s19, %s26
    %s122 = sor.u32 %s120, %s121
    %p123 = scmp.eq.s32.totalorder %s122, 0
    %s125 = sadd.s32 %s124, 1
    %s126 = scalar_select %p123, %s124, %s125
    %p129 = pneg %p123
    %p130 = scmp.eq.s32.totalorder %s11, 1
    %p131 = por %p129, %p130
    %p132 = scmp.ne.s32.totalorder %s124, %s127
    %p133 = scmp.eq.s32.totalorder %s11, 0
    %p134 = por %p132, %p133
    %p135 = scmp.ne.s32.totalorder %s124, %s127
    %p136 = scmp.eq.s32.totalorder %s16, 1
    %p137 = por %p135, %p136
    %p138 = scmp.ne.s32.totalorder %s127, %s128
    %p139 = scmp.eq.s32.totalorder %s16, 0
    %p140 = por %p138, %p139
    %p141 = scmp.ne.s32.totalorder %s127, %s128
    %p142 = scmp.eq.s32.totalorder %s17, 1
    %p143 = por %p141, %p142
    %p145 = scmp.ne.s32.totalorder %s128, %s144
    %p146 = scmp.eq.s32.totalorder %s17, 0
    %p147 = por %p145, %p146
    %p148 = scmp.le.s32.totalorder 1, %s11
    %p149 = scmp.lt.s32.totalorder %s11, 3
    %p150 = pnand %p148, %p149
    %p151 = pneg %p150
    // Predicated region
    $region9: #{fsrcnn20_forward.5} parent=5 // pred_check
      _
    $region10: #{fsrcnn20_forward.5} parent=5 // pred_check_branch
      %153 = sbr.rel (%p150) target = $region12
    $region11: #{fsrcnn20_forward.5} parent=5 // pred_region
      %s154 = ssub.s32 %s11, 1
      // Predicated region
      $region13: #{fsrcnn20_forward.5} parent=11 // pred_check
        %p155 = pneg %p70
      $region14: #{fsrcnn20_forward.5} parent=11 // pred_check_branch
        %157 = sbr.rel (%p155) target = $region16
      $region15: #{fsrcnn20_forward.5} parent=11 // pred_region
        _
      $region16: #{fsrcnn20_forward.5} parent=11 // pred_fallthru
        _
      // Predicated region
      $region17: #{fsrcnn20_forward.5} parent=11 // pred_check
        %p158 = pneg %p91
      $region18: #{fsrcnn20_forward.5} parent=11 // pred_check_branch
        %160 = sbr.rel (%p158) target = $region20
      $region19: #{fsrcnn20_forward.5} parent=11 // pred_region
        _
      $region20: #{fsrcnn20_forward.5} parent=11 // pred_fallthru
        _
      // Predicated region
      $region21: #{fsrcnn20_forward.5} parent=11 // pred_check
        %p161 = pneg %p112
      $region22: #{fsrcnn20_forward.5} parent=11 // pred_check_branch
        %163 = sbr.rel (%p161) target = $region24
      $region23: #{fsrcnn20_forward.5} parent=11 // pred_region
        _
      $region24: #{fsrcnn20_forward.5} parent=11 // pred_fallthru
        _
    $region12: #{fsrcnn20_forward.5} parent=5 // pred_fallthru
      _
    %p164 = scmp.lt.s32.totalorder %s11, 2
    // Predicated region
    $region25: #{fsrcnn20_forward.5} parent=5 // pred_check
      %p165 = pneg %p164
    $region26: #{fsrcnn20_forward.5} parent=5 // pred_check_branch
      %167 = sbr.rel (%p165) target = $region28
    $region27: #{fsrcnn20_forward.5} parent=5 // pred_region
      // Predicated region
      $region29: #{fsrcnn20_forward.5} parent=27 // pred_check
        %p168 = pneg %p43
      $region30: #{fsrcnn20_forward.5} parent=27 // pred_check_branch
        %170 = sbr.rel (%p168) target = $region32
      $region31: #{fsrcnn20_forward.5} parent=27 // pred_region
        %p171 = scmp.lt.s32.totalorder %s18, 1
        %s172 = scalar_select %p171, %s18, 1
        %s173 = smul.addr %s172, 4
        %s174 = smul.addr %s173, 8
        %s175 = scalar_lea.vmem %s0, %s174
      $region32: #{fsrcnn20_forward.5} parent=27 // pred_fallthru
        _
    $region28: #{fsrcnn20_forward.5} parent=5 // pred_fallthru
      _
    %p176 = scmp.le.s32.totalorder 1, %s11
    %p177 = scmp.lt.s32.totalorder %s11, 3
    %p178 = pnand %p176, %p177
    %p179 = pneg %p178
    // Predicated region
    $region33: #{fsrcnn20_forward.5} parent=5 // pred_check
      _
    $region34: #{fsrcnn20_forward.5} parent=5 // pred_check_branch
      %181 = sbr.rel (%p178) target = $region36
    $region35: #{fsrcnn20_forward.5} parent=5 // pred_region
      %s182 = ssub.s32 %s11, 1
      %p183 = scmp.lt.s32.totalorder %s20, 1
      %s184 = scalar_select %p183, %s20, 1
      %s185 = smul.addr %s184, 4
      %s186 = smul.addr %s185, 8
      %s187 = scalar_lea.vmem %s0, %s186
      %p188 = pneg %p49
      %p189 = pneg %p46
      %p190 = pneg %p70
      %p191 = pneg %p67
      %p192 = pneg %p91
      %p193 = pneg %p88
      %p194 = pneg %p112
      %p195 = pneg %p109
      %p196 = pneg %p140
      %p197 = pneg %p137
      %s198 = smul.u32 3, %s21
      %p199 = scmp.lt.s32.totalorder %s20, 1
      %s200 = scalar_select %p199, %s20, 1
      %p201 = scmp.lt.s32.totalorder %s198, 2
      %s202 = scalar_select %p201, %s198, 2
      %s203 = smul.addr %s200, 3
      %s204 = sadd.s32 %s202, %s203
      %s205 = smul.addr %s204, 8
      %s206 = scalar_lea.vmem %s4, %s205
      %p207 = scmp.lt.s32.totalorder %s20, 1
      %s208 = scalar_select %p207, %s20, 1
      %s209 = smul.addr %s208, 4
      %s210 = smul.addr %s209, 8
      %s211 = scalar_lea.vmem %s0, %s210
      %s212 = smul.u32 3, %s21
      %p213 = scmp.lt.s32.totalorder %s20, 1
      %s214 = scalar_select %p213, %s20, 1
      %p215 = scmp.lt.s32.totalorder %s212, 2
      %s216 = scalar_select %p215, %s212, 2
      %s217 = smul.addr %s214, 3
      %s218 = sadd.s32 %s216, %s217
      %s219 = smul.addr %s218, 8
      %s220 = scalar_lea.vmem %s4, %s219
      %s221 = smul.u32 3, %s21
      %v223 = vld [vmem:[%s211] sm:$0xff]
      %v224 = vld [vmem:[%s211 + $0x8] sm:$0xff]
      %v225 = vld [vmem:[%s211 + $0x10] sm:$0xff]
      %v226 = vld [vmem:[%s211 + $0x18] sm:$0xff]
      %231 = vrot.lane.b32.xlu0 %v223, 127
      %v232 = vpop.permute.xlu0 %231
      %233 = vrot.lane.b32.xlu0 %v224, 127
      %v234 = vpop.permute.xlu0 %233
      %235 = vrot.lane.b32.xlu0 %v225, 127
      %v236 = vpop.permute.xlu0 %235
      %237 = vrot.lane.b32.xlu0 %v226, 127
      %v238 = vpop.permute.xlu0 %237
      %vm239 = vcmask 1039360
      %v240 = vsel %vm239, %v232, %v234
      %v241 = vsel %vm239, %v234, %v236
      %v242 = vsel %vm239, %v236, %v238
      %246 = vrot.lane.b32.xlu0 %v223, 126
      %v247 = vpop.permute.xlu0 %246
      %248 = vrot.lane.b32.xlu0 %v224, 126
      %v249 = vpop.permute.xlu0 %248
      %250 = vrot.lane.b32.xlu0 %v225, 126
      %v251 = vpop.permute.xlu0 %250
      %252 = vrot.lane.b32.xlu0 %v226, 126
      %v253 = vpop.permute.xlu0 %252
      %vm254 = vcmask 1031168
      %v255 = vsel %vm254, %v247, %v249
      %v256 = vsel %vm254, %v249, %v251
      %v257 = vsel %vm254, %v251, %v253
      %261 = vrot.lane.b32.xlu0 %v223, 110
      %v262 = vpop.permute.xlu0 %261
      %263 = vrot.lane.b32.xlu0 %v224, 110
      %v264 = vpop.permute.xlu0 %263
      %265 = vrot.lane.b32.xlu0 %v225, 110
      %v266 = vpop.permute.xlu0 %265
      %267 = vrot.lane.b32.xlu0 %v226, 110
      %v268 = vpop.permute.xlu0 %267
      %vm269 = vcmask 900096
      %v270 = vsel %vm269, %v262, %v264
      %v271 = vsel %vm269, %v264, %v266
      %v272 = vsel %vm269, %v266, %v268
      %276 = vrot.lane.b32.xlu0 %v223, 109
      %v277 = vpop.permute.xlu0 %276
      %278 = vrot.lane.b32.xlu0 %v224, 109
      %v279 = vpop.permute.xlu0 %278
      %280 = vrot.lane.b32.xlu0 %v225, 109
      %v281 = vpop.permute.xlu0 %280
      %282 = vrot.lane.b32.xlu0 %v226, 109
      %v283 = vpop.permute.xlu0 %282
      %vm284 = vcmask 891904
      %v285 = vsel %vm284, %v277, %v279
      %v286 = vsel %vm284, %v279, %v281
      %v287 = vsel %vm284, %v281, %v283
      %291 = vrot.lane.b32.xlu0 %v223, 108
      %v292 = vpop.permute.xlu0 %291
      %293 = vrot.lane.b32.xlu0 %v224, 108
      %v294 = vpop.permute.xlu0 %293
      %295 = vrot.lane.b32.xlu0 %v225, 108
      %v296 = vpop.permute.xlu0 %295
      %297 = vrot.lane.b32.xlu0 %v226, 108
      %v298 = vpop.permute.xlu0 %297
      %vm299 = vcmask 883712
      %v300 = vsel %vm299, %v292, %v294
      %v301 = vsel %vm299, %v294, %v296
      %v302 = vsel %vm299, %v296, %v298
      %306 = vrot.lane.b32.xlu0 %v223, 92
      %v307 = vpop.permute.xlu0 %306
      %308 = vrot.lane.b32.xlu0 %v224, 92
      %v309 = vpop.permute.xlu0 %308
      %310 = vrot.lane.b32.xlu0 %v225, 92
      %v311 = vpop.permute.xlu0 %310
      %312 = vrot.lane.b32.xlu0 %v226, 92
      %v313 = vpop.permute.xlu0 %312
      %vm314 = vcmask 752640
      %v315 = vsel %vm314, %v307, %v309
      %v316 = vsel %vm314, %v309, %v311
      %v317 = vsel %vm314, %v311, %v313
      %321 = vrot.lane.b32.xlu0 %v223, 91
      %v322 = vpop.permute.xlu0 %321
      %323 = vrot.lane.b32.xlu0 %v224, 91
      %v324 = vpop.permute.xlu0 %323
      %325 = vrot.lane.b32.xlu0 %v225, 91
      %v326 = vpop.permute.xlu0 %325
      %327 = vrot.lane.b32.xlu0 %v226, 91
      %v328 = vpop.permute.xlu0 %327
      %vm329 = vcmask 744448
      %v330 = vsel %vm329, %v322, %v324
      %v331 = vsel %vm329, %v324, %v326
      %v332 = vsel %vm329, %v326, %v328
      %336 = vrot.lane.b32.xlu0 %v223, 90
      %v337 = vpop.permute.xlu0 %336
      %338 = vrot.lane.b32.xlu0 %v224, 90
      %v339 = vpop.permute.xlu0 %338
      %340 = vrot.lane.b32.xlu0 %v225, 90
      %v341 = vpop.permute.xlu0 %340
      %342 = vrot.lane.b32.xlu0 %v226, 90
      %v343 = vpop.permute.xlu0 %342
      %vm344 = vcmask 736256
      %v345 = vsel %vm344, %v337, %v339
      %v346 = vsel %vm344, %v339, %v341
      %v347 = vsel %vm344, %v341, %v343
      %v351 = vpack.c.bf16 %v240, %v223
      %v352 = vpack.c.bf16 %v241, %v224
      %v353 = vpack.c.bf16 %v242, %v225
      %v354 = vpack.c.bf16 %v270, %v255
      %v355 = vpack.c.bf16 %v271, %v256
      %v356 = vpack.c.bf16 %v272, %v257
      %v357 = vpack.c.bf16 %v300, %v285
      %v358 = vpack.c.bf16 %v301, %v286
      %v359 = vpack.c.bf16 %v302, %v287
      %v360 = vpack.c.bf16 %v330, %v315
      %v361 = vpack.c.bf16 %v331, %v316
      %v362 = vpack.c.bf16 %v332, %v317
      %v363 = vpack.c.bf16 0.0, %v345
      %v364 = vpack.c.bf16 0.0, %v346
      %v365 = vpack.c.bf16 0.0, %v347
      %v366 = vld [vmem:[%s1] sm:$0xf]
      %v367 = vld [vmem:[%s2] sm:$0xff]
      %369 = vset.pattern.permute.xlu0 0
      %370 = vperm.xlu0 %369, %v367
      %v371 = vpop.permute.xlu0 %370
      %vm373 = vcmask 654336
      %v375 = vsel %vm373, %v366, 0
      %377 = vmatprep.subr.bf16.mxu0 %v352
      %378 = vmatpush1.bf16.msra.mxu0 %v351
      %379 = vmatprep.subr.bf16.mxu0 %v355
      %380 = vmatpush1.bf16.msra.mxu0 %v354
      %381 = vmatprep.subr.bf16.mxu0 %v358
      %382 = vmatpush1.bf16.msra.mxu0 %v357
      %383 = vmatprep.subr.bf16.mxu0 %v361
      %384 = vmatpush1.bf16.msra.mxu0 %v360
      %385 = vmatprep.subr.bf16.mxu0 %v364
      %386 = vmatpush1.bf16.msra.mxu0 %v363
      %387 = vmatprep.subr.bf16.mxu0 0
      %388 = vmatpush1.bf16.msra.mxu0 0
      %389 = vmatprep.subr.bf16.mxu0 0
      %390 = vmatpush1.bf16.msra.mxu0 0
      %391 = vmatprep.subr.bf16.mxu0 0
      %392 = vmatpush1.bf16.msra.mxu0 0
      %393 = vmatprep.subr.bf16.mxu0 0
      %394 = vmatpush1.bf16.msra.mxu0 0
      %395 = vmatprep.subr.bf16.mxu0 0
      %396 = vmatpush1.bf16.msra.mxu0 0
      %397 = vmatprep.subr.bf16.mxu0 0
      %398 = vmatpush1.bf16.msra.mxu0 0
      %399 = vmatprep.subr.bf16.mxu0 0
      %400 = vmatpush1.bf16.msra.mxu0 0
      %401 = vmatprep.subr.bf16.mxu0 0
      %402 = vmatpush1.bf16.msra.mxu0 0
      %403 = vmatprep.subr.bf16.mxu0 0
      %404 = vmatpush1.bf16.msra.mxu0 0
      %405 = vmatprep.subr.bf16.mxu0 0
      %406 = vmatpush1.bf16.msra.mxu0 0
      %407 = vmatprep.subr.bf16.mxu0 0
      %408 = vmatpush1.bf16.msra.mxu0 0
      %409 = vmatprep.mubr.bf16.mxu0 0
      %410 = vmatmul.mubr.bf16.gmra.mrb[0].mxu0 %v375
      %v411 = vpop.f32.mrb[0].mxu0
      %v412 = vadd.f32 %v371, %v411
      %v413 = vpop.f32.mrb[0].mxu0
      %v414 = vadd.f32 %v371, %v413
      %v415 = vpop.f32.mrb[0].mxu0
      %v416 = vpop.f32.mrb[0].mxu0
      %417 = vdwg.mxu0
      %418 = vmatprep.subr.bf16.mxu0 0
      %419 = vmatpush1.bf16.msra.mxu0 %v353
      %420 = vmatprep.subr.bf16.mxu0 0
      %421 = vmatpush1.bf16.msra.mxu0 %v356
      %422 = vmatprep.subr.bf16.mxu0 0
      %423 = vmatpush1.bf16.msra.mxu0 %v359
      %424 = vmatprep.subr.bf16.mxu0 0
      %425 = vmatpush1.bf16.msra.mxu0 %v362
      %426 = vmatprep.subr.bf16.mxu0 0
      %427 = vmatpush1.bf16.msra.mxu0 %v365
      %428 = vmatprep.subr.bf16.mxu0 0
      %429 = vmatpush1.bf16.msra.mxu0 0
      %430 = vmatprep.subr.bf16.mxu0 0
      %431 = vmatpush1.bf16.msra.mxu0 0
      %432 = vmatprep.subr.bf16.mxu0 0
      %433 = vmatpush1.bf16.msra.mxu0 0
      %434 = vmatprep.subr.bf16.mxu0 0
      %435 = vmatpush1.bf16.msra.mxu0 0
      %436 = vmatprep.subr.bf16.mxu0 0
      %437 = vmatpush1.bf16.msra.mxu0 0
      %438 = vmatprep.subr.bf16.mxu0 0
      %439 = vmatpush1.bf16.msra.mxu0 0
      %440 = vmatprep.subr.bf16.mxu0 0
      %441 = vmatpush1.bf16.msra.mxu0 0
      %442 = vmatprep.subr.bf16.mxu0 0
      %443 = vmatpush1.bf16.msra.mxu0 0
      %444 = vmatprep.subr.bf16.mxu0 0
      %445 = vmatpush1.bf16.msra.mxu0 0
      %446 = vmatprep.subr.bf16.mxu0 0
      %447 = vmatpush1.bf16.msra.mxu0 0
      %448 = vmatprep.subr.bf16.mxu0 0
      %449 = vmatpush1.bf16.msra.mxu0 0
      %450 = vmatprep.mubr.bf16.mxu0 0
      %451 = vmatmul.mubr.bf16.gmra.mrb[0].mxu0 %v375
      %v452 = vpop.f32.mrb[0].mxu0
      %v453 = vadd.f32 %v371, %v452
      %v454 = vpop.f32.mrb[0].mxu0
      %v455 = vpop.f32.mrb[0].mxu0
      %v456 = vpop.f32.mrb[0].mxu0
      %457 = vdwg.mxu0
      %vm458 = vcmp.ge.f32.partialorder %v412, 0.0
      %vm459 = vcmp.ge.f32.partialorder %v414, 0.0
      %vm460 = vcmp.ge.f32.partialorder %v453, 0.0
      %s461 = sld [smem:[#allocation2]]
      %v462 = vstv %s461
      %v463 = vmul.f32 %v462, %v412
      %v464 = vmul.f32 %v462, %v414
      %v465 = vmul.f32 %v462, %v453
      %v466 = vsel %vm458, %v412, %v463
      %v467 = vsel %vm459, %v414, %v464
      %v468 = vsel %vm460, %v453, %v465
      %469 = vst [vmem:[%s220] sm:$0xff] %v466
      %470 = vst [vmem:[%s220 + $0x8] sm:$0xff] %v467
      %471 = vst [vmem:[%s220 + $0x10] sm:$0xff] %v468
      %s472 = smul.u32 3, %s21
      %p473 = scmp.lt.s32.totalorder %s20, 1
      %s474 = scalar_select %p473, %s20, 1
      %p475 = scmp.lt.s32.totalorder %s472, 2
      %s476 = scalar_select %p475, %s472, 2
      %s477 = smul.addr %s474, 3
      %s478 = sadd.s32 %s476, %s477
      %s479 = smul.addr %s478, 8
      %s480 = scalar_lea.vmem %s4, %s479
      // Predicated region
      $region37: #{fsrcnn20_forward.5} parent=35 // pred_check
        %p481 = pneg %p137
      $region38: #{fsrcnn20_forward.5} parent=35 // pred_check_branch
        %483 = sbr.rel (%p481) target = $region40
      $region39: #{fsrcnn20_forward.5} parent=35 // pred_region
        %s484 = smul.u32 3, %s21
      $region40: #{fsrcnn20_forward.5} parent=35 // pred_fallthru
        _
    $region36: #{fsrcnn20_forward.5} parent=5 // pred_fallthru
      _
    %p485 = scmp.le.s32.totalorder 2, %s11
    // Predicated region
    $region41: #{fsrcnn20_forward.5} parent=5 // pred_check
      %p486 = pneg %p485
    $region42: #{fsrcnn20_forward.5} parent=5 // pred_check_branch
      %488 = sbr.rel (%p486) target = $region44
    $region43: #{fsrcnn20_forward.5} parent=5 // pred_region
      %s489 = ssub.s32 %s11, 2
      // Predicated region
      $region45: #{fsrcnn20_forward.5} parent=43 // pred_check
        %p490 = pneg %p143
      $region46: #{fsrcnn20_forward.5} parent=43 // pred_check_branch
        %492 = sbr.rel (%p490) target = $region48
      $region47: #{fsrcnn20_forward.5} parent=43 // pred_region
        %s493 = smul.u32 3, %s23
        %p494 = scmp.lt.s32.totalorder %s22, 1
        %s495 = scalar_select %p494, %s22, 1
        %p496 = scmp.lt.s32.totalorder %s493, 2
        %s497 = scalar_select %p496, %s493, 2
        %s498 = smul.addr %s495, 3
        %s499 = sadd.s32 %s497, %s498
        %s500 = smul.addr %s499, 8
        %s501 = scalar_lea.vmem %s4, %s500
      $region48: #{fsrcnn20_forward.5} parent=43 // pred_fallthru
        _
    $region44: #{fsrcnn20_forward.5} parent=5 // pred_fallthru
      _
  $region6: #{fsrcnn20_forward.5} parent=0 // loop_footer
    %s15 = sadd.s32 1, %s11
  $region7: #{fsrcnn20_forward.5} parent=0 // loop_footer_branch
    %10 = sbr.rel target = $region3
  $region8: #{fsrcnn20_forward.5} parent=0 // loop_exit
    _

// kernel: fsrcnn20_forward.4
$region0: #{fsrcnn20_forward.4}
  #allocation0 [shape = 'u32[]', space=smem, size = 0x4, offset = 0x4, fixed_abs, tag = 'smem constant byte address 0x4 - core index']
  #allocation1 [shape = 'u32[144,128]{1,0:T(1,128)}', space=vmem, size = 0x12000, scoped, tag = 'internal scratch']
  %s0 = inlined_call_operand.vmem [shape: f32[2,1,468], index: 0, kind: input, shape index: {}]
  %s1 = inlined_call_operand.vmem [shape: bf16[32,32], index: 1, kind: input, shape index: {}]
  %s2 = inlined_call_operand.vmem [shape: f32[32,1], index: 2, kind: input, shape index: {}]
  %s3 = inlined_call_operand.vmem [shape: bf16[8,32], index: 3, kind: input, shape index: {}]
  %s4 = inlined_call_operand.vmem [shape: f32[8,1], index: 4, kind: input, shape index: {}]
  %s5 = inlined_call_operand.vmem [shape: f32[2], index: 5, kind: input, shape index: {}]
  %s6 = inlined_call_operand.vmem [shape: f32[2,8,384], index: 6, kind: output, shape index: {}]
  %s7 = sld [smem:[#allocation0]]
  $region61: #{fsrcnn20_forward.4} parent=0
    _
  %s9 = ssub.s32 1, %s7
  %s10 = scalar_select 0, %s9, %s7
  $region1: #{fsrcnn20_forward.4} parent=0
    #allocation2 [shape = 'u8[512]{0}', space=smem, size = 0x200, scoped, tag = 'input window, operand 5, single buffered']
    #allocation3 [shape = 's32[2]{0}', space=sflag, size = 0x8, scoped, tag = 'scoped memory for fsrcnn20_forward.4']
    %11 = vsyncpa [#allocation3], 0
    loop: start=0, step=1, limit=4
    $region2: #{fsrcnn20_forward.4} parent=1 // loop_pre_header
      _
    $region3: #{fsrcnn20_forward.4} parent=1 // loop_header
      %s13 = sphi 0, %s17
      %p14 = scmp.ge.s32.totalorder %s13, 4
      %s20 = sphi 0, %s32
      %s21 = sphi 0, %s28
      %s22 = sphi 0, %s20
      %s23 = sphi 0, %s21
      %s24 = sphi 0, %s22
      %s25 = sphi 0, %s23
      %s35 = sphi 0, %s37
      %s38 = sphi 0, %s35
      %s39 = sphi 0, %s38
      %s55 = sphi 0, %s39
      %s59 = sphi 0, %s59
      %s61 = sphi 0, %s59
      %s62 = sphi 0, %s61
      %s76 = sphi 0, %s62
      %s80 = sphi 0, %s80
      %s82 = sphi 0, %s80
      %s83 = sphi 0, %s82
      %s97 = sphi 0, %s83
      %s101 = sphi 0, %s101
      %s103 = sphi 0, %s101
      %s104 = sphi 0, %s103
      %s118 = sphi 0, %s104
      %s122 = sphi 0, %s122
      %s124 = sphi 0, %s122
      %s125 = sphi 0, %s124
      %s139 = sphi 0, %s125
      %s143 = sphi 0, %s143
      %s145 = sphi 0, %s143
      %s146 = sphi 0, %s145
      %s160 = sphi 0, %s146
      %s168 = sphi 0, %s170
      %s171 = sphi 0, %s168
      %s172 = sphi 0, %s171
      %s188 = sphi 0, %s172
    $region4: #{fsrcnn20_forward.4} parent=1 // loop_header_branch
      %16 = sbr.rel (%p14) target = $region8
    $region5: #{fsrcnn20_forward.4} parent=1 // loop_body
      %s18 = ssub.s32 %s13, 1
      %s19 = ssub.s32 %s13, 2
      %s26 = sadd.s32 1, %s21
      %p27 = scmp.ge.s32.totalorder %s26, 1
      %s28 = scalar_select %p27, 0, %s26
      %s29 = sadd.s32 1, %s20
      %s30 = scalar_select %p27, %s29, %s20
      %p31 = scmp.ge.s32.totalorder %s30, 2
      %s32 = scalar_select %p31, 0, %s30
      %s33 = ssub.s32 %s20, %s32
      %p34 = scmp.eq.s32.totalorder %s33, 0
      %s36 = sadd.s32 %s35, 1
      %s37 = scalar_select %p34, %s35, %s36
      %p40 = pneg %p34
      %p41 = scmp.eq.s32.totalorder %s13, 1
      %p42 = por %p40, %p41
      %p43 = scmp.ne.s32.totalorder %s35, %s38
      %p44 = scmp.eq.s32.totalorder %s13, 0
      %p45 = por %p43, %p44
      %p46 = scmp.ne.s32.totalorder %s35, %s38
      %p47 = scmp.eq.s32.totalorder %s18, 1
      %p48 = por %p46, %p47
      %p49 = scmp.ne.s32.totalorder %s38, %s39
      %p50 = scmp.eq.s32.totalorder %s18, 0
      %p51 = por %p49, %p50
      %p52 = scmp.ne.s32.totalorder %s38, %s39
      %p53 = scmp.eq.s32.totalorder %s19, 1
      %p54 = por %p52, %p53
      %p56 = scmp.ne.s32.totalorder %s39, %s55
      %p57 = scmp.eq.s32.totalorder %s19, 0
      %p58 = por %p56, %p57
      %s60 = sadd.s32 %s59, 1
      %p63 = scmp.eq.s32.totalorder %s13, 1
      %p64 = scmp.ne.s32.totalorder %s59, %s61
      %p65 = scmp.eq.s32.totalorder %s13, 0
      %p66 = por %p64, %p65
      %p67 = scmp.ne.s32.totalorder %s59, %s61
      %p68 = scmp.eq.s32.totalorder %s18, 1
      %p69 = por %p67, %p68
      %p70 = scmp.ne.s32.totalorder %s61, %s62
      %p71 = scmp.eq.s32.totalorder %s18, 0
      %p72 = por %p70, %p71
      %p73 = scmp.ne.s32.totalorder %s61, %s62
      %p74 = scmp.eq.s32.totalorder %s19, 1
      %p75 = por %p73, %p74
      %p77 = scmp.ne.s32.totalorder %s62, %s76
      %p78 = scmp.eq.s32.totalorder %s19, 0
      %p79 = por %p77, %p78
      %s81 = sadd.s32 %s80, 1
      %p84 = scmp.eq.s32.totalorder %s13, 1
      %p85 = scmp.ne.s32.totalorder %s80, %s82
      %p86 = scmp.eq.s32.totalorder %s13, 0
      %p87 = por %p85, %p86
      %p88 = scmp.ne.s32.totalorder %s80, %s82
      %p89 = scmp.eq.s32.totalorder %s18, 1
      %p90 = por %p88, %p89
      %p91 = scmp.ne.s32.totalorder %s82, %s83
      %p92 = scmp.eq.s32.totalorder %s18, 0
      %p93 = por %p91, %p92
      %p94 = scmp.ne.s32.totalorder %s82, %s83
      %p95 = scmp.eq.s32.totalorder %s19, 1
      %p96 = por %p94, %p95
      %p98 = scmp.ne.s32.totalorder %s83, %s97
      %p99 = scmp.eq.s32.totalorder %s19, 0
      %p100 = por %p98, %p99
      %s102 = sadd.s32 %s101, 1
      %p105 = scmp.eq.s32.totalorder %s13, 1
      %p106 = scmp.ne.s32.totalorder %s101, %s103
      %p107 = scmp.eq.s32.totalorder %s13, 0
      %p108 = por %p106, %p107
      %p109 = scmp.ne.s32.totalorder %s101, %s103
      %p110 = scmp.eq.s32.totalorder %s18, 1
      %p111 = por %p109, %p110
      %p112 = scmp.ne.s32.totalorder %s103, %s104
      %p113 = scmp.eq.s32.totalorder %s18, 0
      %p114 = por %p112, %p113
      %p115 = scmp.ne.s32.totalorder %s103, %s104
      %p116 = scmp.eq.s32.totalorder %s19, 1
      %p117 = por %p115, %p116
      %p119 = scmp.ne.s32.totalorder %s104, %s118
      %p120 = scmp.eq.s32.totalorder %s19, 0
      %p121 = por %p119, %p120
      %s123 = sadd.s32 %s122, 1
      %p126 = scmp.eq.s32.totalorder %s13, 1
      %p127 = scmp.ne.s32.totalorder %s122, %s124
      %p128 = scmp.eq.s32.totalorder %s13, 0
      %p129 = por %p127, %p128
      %p130 = scmp.ne.s32.totalorder %s122, %s124
      %p131 = scmp.eq.s32.totalorder %s18, 1
      %p132 = por %p130, %p131
      %p133 = scmp.ne.s32.totalorder %s124, %s125
      %p134 = scmp.eq.s32.totalorder %s18, 0
      %p135 = por %p133, %p134
      %p136 = scmp.ne.s32.totalorder %s124, %s125
      %p137 = scmp.eq.s32.totalorder %s19, 1
      %p138 = por %p136, %p137
      %p140 = scmp.ne.s32.totalorder %s125, %s139
      %p141 = scmp.eq.s32.totalorder %s19, 0
      %p142 = por %p140, %p141
      %s144 = sadd.s32 %s143, 1
      %p147 = scmp.eq.s32.totalorder %s13, 1
      %p148 = scmp.ne.s32.totalorder %s143, %s145
      %p149 = scmp.eq.s32.totalorder %s13, 0
      %p150 = por %p148, %p149
      %p151 = scmp.ne.s32.totalorder %s143, %s145
      %p152 = scmp.eq.s32.totalorder %s18, 1
      %p153 = por %p151, %p152
      %p154 = scmp.ne.s32.totalorder %s145, %s146
      %p155 = scmp.eq.s32.totalorder %s18, 0
      %p156 = por %p154, %p155
      %p157 = scmp.ne.s32.totalorder %s145, %s146
      %p158 = scmp.eq.s32.totalorder %s19, 1
      %p159 = por %p157, %p158
      %p161 = scmp.ne.s32.totalorder %s146, %s160
      %p162 = scmp.eq.s32.totalorder %s19, 0
      %p163 = por %p161, %p162
      %s164 = ssub.s32 %s20, %s32
      %s165 = ssub.s32 %s21, %s28
      %s166 = sor.u32 %s164, %s165
      %p167 = scmp.eq.s32.totalorder %s166, 0
      %s169 = sadd.s32 %s168, 1
      %s170 = scalar_select %p167, %s168, %s169
      %p173 = pneg %p167
      %p174 = scmp.eq.s32.totalorder %s13, 1
      %p175 = por %p173, %p174
      %p176 = scmp.ne.s32.totalorder %s168, %s171
      %p177 = scmp.eq.s32.totalorder %s13, 0
      %p178 = por %p176, %p177
      %p179 = scmp.ne.s32.totalorder %s168, %s171
      %p180 = scmp.eq.s32.totalorder %s18, 1
      %p181 = por %p179, %p180
      %p182 = scmp.ne.s32.totalorder %s171, %s172
      %p183 = scmp.eq.s32.totalorder %s18, 0
      %p184 = por %p182, %p183
      %p185 = scmp.ne.s32.totalorder %s171, %s172
      %p186 = scmp.eq.s32.totalorder %s19, 1
      %p187 = por %p185, %p186
      %p189 = scmp.ne.s32.totalorder %s172, %s188
      %p190 = scmp.eq.s32.totalorder %s19, 0
      %p191 = por %p189, %p190
      %p192 = scmp.le.s32.totalorder 1, %s13
      %p193 = scmp.lt.s32.totalorder %s13, 3
      %p194 = pnand %p192, %p193
      %p195 = pneg %p194
      // Predicated region
      $region9: #{fsrcnn20_forward.4} parent=5 // pred_check
        _
      $region10: #{fsrcnn20_forward.4} parent=5 // pred_check_branch
        %197 = sbr.rel (%p194) target = $region12
      $region11: #{fsrcnn20_forward.4} parent=5 // pred_region
        %s198 = ssub.s32 %s13, 1
        // Predicated region
        $region13: #{fsrcnn20_forward.4} parent=11 // pred_check
          %p199 = pneg %p72
        $region14: #{fsrcnn20_forward.4} parent=11 // pred_check_branch
          %201 = sbr.rel (%p199) target = $region16
        $region15: #{fsrcnn20_forward.4} parent=11 // pred_region
          _
        $region16: #{fsrcnn20_forward.4} parent=11 // pred_fallthru
          _
        // Predicated region
        $region17: #{fsrcnn20_forward.4} parent=11 // pred_check
          %p202 = pneg %p93
        $region18: #{fsrcnn20_forward.4} parent=11 // pred_check_branch
          %204 = sbr.rel (%p202) target = $region20
        $region19: #{fsrcnn20_forward.4} parent=11 // pred_region
          _
        $region20: #{fsrcnn20_forward.4} parent=11 // pred_fallthru
          _
        // Predicated region
        $region21: #{fsrcnn20_forward.4} parent=11 // pred_check
          %p205 = pneg %p114
        $region22: #{fsrcnn20_forward.4} parent=11 // pred_check_branch
          %207 = sbr.rel (%p205) target = $region24
        $region23: #{fsrcnn20_forward.4} parent=11 // pred_region
          _
        $region24: #{fsrcnn20_forward.4} parent=11 // pred_fallthru
          _
        // Predicated region
        $region25: #{fsrcnn20_forward.4} parent=11 // pred_check
          %p208 = pneg %p135
        $region26: #{fsrcnn20_forward.4} parent=11 // pred_check_branch
          %210 = sbr.rel (%p208) target = $region28
        $region27: #{fsrcnn20_forward.4} parent=11 // pred_region
          _
        $region28: #{fsrcnn20_forward.4} parent=11 // pred_fallthru
          _
        // Predicated region
        $region29: #{fsrcnn20_forward.4} parent=11 // pred_check
          %p211 = pneg %p156
        $region30: #{fsrcnn20_forward.4} parent=11 // pred_check_branch
          %213 = sbr.rel (%p211) target = $region32
        $region31: #{fsrcnn20_forward.4} parent=11 // pred_region
          %s215 = ssub.s32 16, 16
          %216 = vsyncadd [#allocation3], %s215
          %s218 = sshll.u32 %s5, 4
          %s219 = int_to_ptr.vmem [resolvable:$true] %s218
          %221 = dma.vmem_to_smem %s219, 16, [#allocation2], [#allocation3]
        $region32: #{fsrcnn20_forward.4} parent=11 // pred_fallthru
          _
      $region12: #{fsrcnn20_forward.4} parent=5 // pred_fallthru
        _
      %p222 = scmp.lt.s32.totalorder %s13, 2
      // Predicated region
      $region33: #{fsrcnn20_forward.4} parent=5 // pred_check
        %p223 = pneg %p222
      $region34: #{fsrcnn20_forward.4} parent=5 // pred_check_branch
        %225 = sbr.rel (%p223) target = $region36
      $region35: #{fsrcnn20_forward.4} parent=5 // pred_region
        // Predicated region
        $region37: #{fsrcnn20_forward.4} parent=35 // pred_check
          %p226 = pneg %p45
        $region38: #{fsrcnn20_forward.4} parent=35 // pred_check_branch
          %228 = sbr.rel (%p226) target = $region40
        $region39: #{fsrcnn20_forward.4} parent=35 // pred_region
          %p229 = scmp.lt.s32.totalorder %s20, 1
          %s230 = scalar_select %p229, %s20, 1
          %s231 = smul.addr %s230, 4
          %s232 = scalar_lea.vmem %s0, %s231
        $region40: #{fsrcnn20_forward.4} parent=35 // pred_fallthru
          _
      $region36: #{fsrcnn20_forward.4} parent=5 // pred_fallthru
        _
      %p233 = scmp.le.s32.totalorder 1, %s13
      %p234 = scmp.lt.s32.totalorder %s13, 3
      %p235 = pnand %p233, %p234
      %p236 = pneg %p235
      // Predicated region
      $region41: #{fsrcnn20_forward.4} parent=5 // pred_check
        _
      $region42: #{fsrcnn20_forward.4} parent=5 // pred_check_branch
        %238 = sbr.rel (%p235) target = $region44
      $region43: #{fsrcnn20_forward.4} parent=5 // pred_region
        %s239 = ssub.s32 %s13, 1
        // Predicated region
        $region45: #{fsrcnn20_forward.4} parent=43 // pred_check
          %p240 = pneg %p156
        $region46: #{fsrcnn20_forward.4} parent=43 // pred_check_branch
          %242 = sbr.rel (%p240) target = $region48
        $region47: #{fsrcnn20_forward.4} parent=43 // pred_region
          %243 = dma.done [#allocation3], 16
        $region48: #{fsrcnn20_forward.4} parent=43 // pred_fallthru
          _
        %244 = sfence
        %p245 = scmp.lt.s32.totalorder %s22, 1
        %s246 = scalar_select %p245, %s22, 1
        %s247 = smul.addr %s246, 4
        %s248 = scalar_lea.vmem %s0, %s247
        %p249 = pneg %p51
        %p250 = pneg %p48
        %p251 = pneg %p72
        %p252 = pneg %p69
        %p253 = pneg %p93
        %p254 = pneg %p90
        %p255 = pneg %p114
        %p256 = pneg %p111
        %p257 = pneg %p135
        %p258 = pneg %p132
        %p259 = pneg %p156
        %p260 = pneg %p153
        %p261 = pneg %p184
        %p262 = pneg %p181
        %s263 = smul.u32 3, %s23
        %p264 = scmp.lt.s32.totalorder %s22, 1
        %s265 = scalar_select %p264, %s22, 1
        %p266 = scmp.lt.s32.totalorder %s263, 2
        %s267 = scalar_select %p266, %s263, 2
        %s268 = smul.addr %s265, 3
        %s269 = sadd.s32 %s267, %s268
        %s270 = smul.addr %s269, 8
        %s271 = scalar_lea.vmem %s6, %s270
        %p272 = scmp.lt.s32.totalorder %s22, 1
        %s273 = scalar_select %p272, %s22, 1
        %s274 = smul.addr %s273, 4
        %s275 = scalar_lea.vmem %s0, %s274
        %s276 = smul.u32 3, %s23
        %p277 = scmp.lt.s32.totalorder %s22, 1
        %s278 = scalar_select %p277, %s22, 1
        %p279 = scmp.lt.s32.totalorder %s276, 2
        %s280 = scalar_select %p279, %s276, 2
        %s281 = smul.addr %s278, 3
        %s282 = sadd.s32 %s280, %s281
        %s283 = smul.addr %s282, 8
        %s284 = scalar_lea.vmem %s6, %s283
        %s285 = smul.u32 3, %s23
        %v287 = vld [vmem:[%s275] sm:$0x7]
        %v288 = vld [vmem:[%s275] sm:$0xf]
        %v290 = vlaneseq
        %v291 = vshrl.u32 %v290, 7
        %v292 = vsub.s32 0, %v291
        %v293 = vrot.slane %v287, %v292
        %v294 = vlaneseq
        %v295 = vshrl.u32 %v294, 7
        %v296 = vsub.s32 1, %v295
        %v297 = vrot.slane %v287, %v296
        %v298 = vlaneseq
        %v299 = vshrl.u32 %v298, 7
        %v300 = vsub.s32 2, %v299
        %v301 = vrot.slane %v287, %v300
        %v306 = vlaneseq
        %v307 = vshrl.u32 %v306, 7
        %v308 = vsub.s32 0, %v307
        %v309 = vrot.slane %v288, %v308
        %v310 = vlaneseq
        %v311 = vshrl.u32 %v310, 7
        %v312 = vsub.s32 1, %v311
        %v313 = vrot.slane %v288, %v312
        %v314 = vlaneseq
        %v315 = vshrl.u32 %v314, 7
        %v316 = vsub.s32 2, %v315
        %v317 = vrot.slane %v288, %v316
        %v318 = vlaneseq
        %v319 = vshrl.u32 %v318, 7
        %v320 = vsub.s32 3, %v319
        %v321 = vrot.slane %v288, %v320
        %322 = vrot.lane.b32.xlu0 %v309, 127
        %v323 = vpop.permute.xlu0 %322
        %324 = vrot.lane.b32.xlu0 %v313, 127
        %v325 = vpop.permute.xlu0 %324
        %326 = vrot.lane.b32.xlu0 %v317, 127
        %v327 = vpop.permute.xlu0 %326
        %328 = vrot.lane.b32.xlu0 %v321, 127
        %v329 = vpop.permute.xlu0 %328
        %vm330 = vcmask 1039360
        %v331 = vsel %vm330, %v323, %v325
        %v332 = vsel %vm330, %v325, %v327
        %v333 = vsel %vm330, %v327, %v329
        %337 = vrot.lane.b32.xlu0 %v309, 126
        %v338 = vpop.permute.xlu0 %337
        %339 = vrot.lane.b32.xlu0 %v313, 126
        %v340 = vpop.permute.xlu0 %339
        %341 = vrot.lane.b32.xlu0 %v317, 126
        %v342 = vpop.permute.xlu0 %341
        %343 = vrot.lane.b32.xlu0 %v321, 126
        %v344 = vpop.permute.xlu0 %343
        %vm345 = vcmask 1031168
        %v346 = vsel %vm345, %v338, %v340
        %v347 = vsel %vm345, %v340, %v342
        %v348 = vsel %vm345, %v342, %v344
        %352 = vrot.lane.b32.xlu0 %v309, 125
        %v353 = vpop.permute.xlu0 %352
        %354 = vrot.lane.b32.xlu0 %v313, 125
        %v355 = vpop.permute.xlu0 %354
        %356 = vrot.lane.b32.xlu0 %v317, 125
        %v357 = vpop.permute.xlu0 %356
        %358 = vrot.lane.b32.xlu0 %v321, 125
        %v359 = vpop.permute.xlu0 %358
        %vm360 = vcmask 1022976
        %v361 = vsel %vm360, %v353, %v355
        %v362 = vsel %vm360, %v355, %v357
        %v363 = vsel %vm360, %v357, %v359
        %367 = vrot.lane.b32.xlu0 %v309, 124
        %v368 = vpop.permute.xlu0 %367
        %369 = vrot.lane.b32.xlu0 %v313, 124
        %v370 = vpop.permute.xlu0 %369
        %371 = vrot.lane.b32.xlu0 %v317, 124
        %v372 = vpop.permute.xlu0 %371
        %373 = vrot.lane.b32.xlu0 %v321, 124
        %v374 = vpop.permute.xlu0 %373
        %vm375 = vcmask 1014784
        %v376 = vsel %vm375, %v368, %v370
        %v377 = vsel %vm375, %v370, %v372
        %v378 = vsel %vm375, %v372, %v374
        %382 = vrot.lane.b32.xlu0 %v309, 108
        %v383 = vpop.permute.xlu0 %382
        %384 = vrot.lane.b32.xlu0 %v313, 108
        %v385 = vpop.permute.xlu0 %384
        %386 = vrot.lane.b32.xlu0 %v317, 108
        %v387 = vpop.permute.xlu0 %386
        %388 = vrot.lane.b32.xlu0 %v321, 108
        %v389 = vpop.permute.xlu0 %388
        %vm390 = vcmask 883712
        %v391 = vsel %vm390, %v383, %v385
        %v392 = vsel %vm390, %v385, %v387
        %v393 = vsel %vm390, %v387, %v389
        %397 = vrot.lane.b32.xlu0 %v309, 107
        %v398 = vpop.permute.xlu0 %397
        %399 = vrot.lane.b32.xlu0 %v313, 107
        %v400 = vpop.permute.xlu0 %399
        %401 = vrot.lane.b32.xlu0 %v317, 107
        %v402 = vpop.permute.xlu0 %401
        %403 = vrot.lane.b32.xlu0 %v321, 107
        %v404 = vpop.permute.xlu0 %403
        %vm405 = vcmask 875520
        %v406 = vsel %vm405, %v398, %v400
        %v407 = vsel %vm405, %v400, %v402
        %v408 = vsel %vm405, %v402, %v404
        %412 = vrot.lane.b32.xlu0 %v309, 106
        %v413 = vpop.permute.xlu0 %412
        %414 = vrot.lane.b32.xlu0 %v313, 106
        %v415 = vpop.permute.xlu0 %414
        %416 = vrot.lane.b32.xlu0 %v317, 106
        %v417 = vpop.permute.xlu0 %416
        %418 = vrot.lane.b32.xlu0 %v321, 106
        %v419 = vpop.permute.xlu0 %418
        %vm420 = vcmask 867328
        %v421 = vsel %vm420, %v413, %v415
        %v422 = vsel %vm420, %v415, %v417
        %v423 = vsel %vm420, %v417, %v419
        %427 = vrot.lane.b32.xlu0 %v309, 105
        %v428 = vpop.permute.xlu0 %427
        %429 = vrot.lane.b32.xlu0 %v313, 105
        %v430 = vpop.permute.xlu0 %429
        %431 = vrot.lane.b32.xlu0 %v317, 105
        %v432 = vpop.permute.xlu0 %431
        %433 = vrot.lane.b32.xlu0 %v321, 105
        %v434 = vpop.permute.xlu0 %433
        %vm435 = vcmask 859136
        %v436 = vsel %vm435, %v428, %v430
        %v437 = vsel %vm435, %v430, %v432
        %v438 = vsel %vm435, %v432, %v434
        %442 = vrot.lane.b32.xlu0 %v309, 104
        %v443 = vpop.permute.xlu0 %442
        %444 = vrot.lane.b32.xlu0 %v313, 104
        %v445 = vpop.permute.xlu0 %444
        %446 = vrot.lane.b32.xlu0 %v317, 104
        %v447 = vpop.permute.xlu0 %446
        %448 = vrot.lane.b32.xlu0 %v321, 104
        %v449 = vpop.permute.xlu0 %448
        %vm450 = vcmask 850944
        %v451 = vsel %vm450, %v443, %v445
        %v452 = vsel %vm450, %v445, %v447
        %v453 = vsel %vm450, %v447, %v449
        %457 = vrot.lane.b32.xlu0 %v309, 88
        %v458 = vpop.permute.xlu0 %457
        %459 = vrot.lane.b32.xlu0 %v313, 88
        %v460 = vpop.permute.xlu0 %459
        %461 = vrot.lane.b32.xlu0 %v317, 88
        %v462 = vpop.permute.xlu0 %461
        %463 = vrot.lane.b32.xlu0 %v321, 88
        %v464 = vpop.permute.xlu0 %463
        %vm465 = vcmask 719872
        %v466 = vsel %vm465, %v458, %v460
        %v467 = vsel %vm465, %v460, %v462
        %v468 = vsel %vm465, %v462, %v464
        %472 = vrot.lane.b32.xlu0 %v309, 87
        %v473 = vpop.permute.xlu0 %472
        %474 = vrot.lane.b32.xlu0 %v313, 87
        %v475 = vpop.permute.xlu0 %474
        %476 = vrot.lane.b32.xlu0 %v317, 87
        %v477 = vpop.permute.xlu0 %476
        %478 = vrot.lane.b32.xlu0 %v321, 87
        %v479 = vpop.permute.xlu0 %478
        %vm480 = vcmask 711680
        %v481 = vsel %vm480, %v473, %v475
        %v482 = vsel %vm480, %v475, %v477
        %v483 = vsel %vm480, %v477, %v479
        %487 = vrot.lane.b32.xlu0 %v309, 86
        %v488 = vpop.permute.xlu0 %487
        %489 = vrot.lane.b32.xlu0 %v313, 86
        %v490 = vpop.permute.xlu0 %489
        %491 = vrot.lane.b32.xlu0 %v317, 86
        %v492 = vpop.permute.xlu0 %491
        %493 = vrot.lane.b32.xlu0 %v321, 86
        %v494 = vpop.permute.xlu0 %493
        %vm495 = vcmask 703488
        %v496 = vsel %vm495, %v488, %v490
        %v497 = vsel %vm495, %v490, %v492
        %v498 = vsel %vm495, %v492, %v494
        %502 = vrot.lane.b32.xlu0 %v309, 85
        %v503 = vpop.permute.xlu0 %502
        %504 = vrot.lane.b32.xlu0 %v313, 85
        %v505 = vpop.permute.xlu0 %504
        %506 = vrot.lane.b32.xlu0 %v317, 85
        %v507 = vpop.permute.xlu0 %506
        %508 = vrot.lane.b32.xlu0 %v321, 85
        %v509 = vpop.permute.xlu0 %508
        %vm510 = vcmask 695296
        %v511 = vsel %vm510, %v503, %v505
        %v512 = vsel %vm510, %v505, %v507
        %v513 = vsel %vm510, %v507, %v509
        %517 = vrot.lane.b32.xlu0 %v309, 84
        %v518 = vpop.permute.xlu0 %517
        %519 = vrot.lane.b32.xlu0 %v313, 84
        %v520 = vpop.permute.xlu0 %519
        %521 = vrot.lane.b32.xlu0 %v317, 84
        %v522 = vpop.permute.xlu0 %521
        %523 = vrot.lane.b32.xlu0 %v321, 84
        %v524 = vpop.permute.xlu0 %523
        %vm525 = vcmask 687104
        %v526 = vsel %vm525, %v518, %v520
        %v527 = vsel %vm525, %v520, %v522
        %v528 = vsel %vm525, %v522, %v524
        %532 = vrot.lane.b32.xlu0 %v309, 68
        %v533 = vpop.permute.xlu0 %532
        %534 = vrot.lane.b32.xlu0 %v313, 68
        %v535 = vpop.permute.xlu0 %534
        %536 = vrot.lane.b32.xlu0 %v317, 68
        %v537 = vpop.permute.xlu0 %536
        %538 = vrot.lane.b32.xlu0 %v321, 68
        %v539 = vpop.permute.xlu0 %538
        %vm540 = vcmask 556032
        %v541 = vsel %vm540, %v533, %v535
        %v542 = vsel %vm540, %v535, %v537
        %v543 = vsel %vm540, %v537, %v539
        %vm547 = vcmask 1040384
        %v548 = vsel %vm547, %v293, %v331
        %v549 = vsel %vm547, %v297, %v332
        %v550 = vsel %vm547, %v301, %v333
        %vm551 = vcmask 1041408
        %v552 = vsel %vm551, %v548, %v346
        %v553 = vsel %vm551, %v549, %v347
        %v554 = vsel %vm551, %v550, %v348
        %vm555 = vcmask 1042432
        %v556 = vsel %vm555, %v552, %v361
        %v557 = vsel %vm555, %v553, %v362
        %v558 = vsel %vm555, %v554, %v363
        %vm559 = vcmask 1043456
        %v560 = vsel %vm559, %v556, %v376
        %v561 = vsel %vm559, %v557, %v377
        %v562 = vsel %vm559, %v558, %v378
        %vm563 = vcmask 1044480
        %v564 = vsel %vm563, %v560, %v391
        %v565 = vsel %vm563, %v561, %v392
        %v566 = vsel %vm563, %v562, %v393
        %vm567 = vcmask 1045504
        %v568 = vsel %vm567, %v564, %v406
        %v569 = vsel %vm567, %v565, %v407
        %v570 = vsel %vm567, %v566, %v408
        %vm571 = vcmask 1046528
        %v572 = vsel %vm571, %v568, %v421
        %v573 = vsel %vm571, %v569, %v422
        %v574 = vsel %vm571, %v570, %v423
        %v575 = vsel %vm547, %v436, %v451
        %v576 = vsel %vm547, %v437, %v452
        %v577 = vsel %vm547, %v438, %v453
        %v578 = vsel %vm551, %v575, %v466
        %v579 = vsel %vm551, %v576, %v467
        %v580 = vsel %vm551, %v577, %v468
        %v581 = vsel %vm555, %v578, %v481
        %v582 = vsel %vm555, %v579, %v482
        %v583 = vsel %vm555, %v580, %v483
        %v584 = vsel %vm559, %v581, %v496
        %v585 = vsel %vm559, %v582, %v497
        %v586 = vsel %vm559, %v583, %v498
        %v587 = vsel %vm563, %v584, %v511
        %v588 = vsel %vm563, %v585, %v512
        %v589 = vsel %vm563, %v586, %v513
        %v590 = vsel %vm567, %v587, %v526
        %v591 = vsel %vm567, %v588, %v527
        %v592 = vsel %vm567, %v589, %v528
        %v593 = vsel %vm571, %v590, %v541
        %v594 = vsel %vm571, %v591, %v542
        %v595 = vsel %vm571, %v592, %v543
        %603 = vrot.lane.b32.xlu0 %v309, 109
        %v604 = vpop.permute.xlu0 %603
        %605 = vrot.lane.b32.xlu0 %v313, 109
        %v606 = vpop.permute.xlu0 %605
        %607 = vrot.lane.b32.xlu0 %v317, 109
        %v608 = vpop.permute.xlu0 %607
        %609 = vrot.lane.b32.xlu0 %v321, 109
        %v610 = vpop.permute.xlu0 %609
        %vm611 = vcmask 891904
        %v612 = vsel %vm611, %v604, %v606
        %v613 = vsel %vm611, %v606, %v608
        %v614 = vsel %vm611, %v608, %v610
        %v623 = vsel %vm547, %v309, %v331
        %v624 = vsel %vm547, %v313, %v332
        %v625 = vsel %vm547, %v317, %v333
        %v626 = vsel %vm547, %v321, %v329
        %v627 = vsel %vm551, %v623, %v346
        %v628 = vsel %vm551, %v624, %v347
        %v629 = vsel %vm551, %v625, %v348
        %v630 = vsel %vm551, %v626, %v344
        %v631 = vsel %vm555, %v627, %v361
        %v632 = vsel %vm555, %v628, %v362
        %v633 = vsel %vm555, %v629, %v363
        %v634 = vsel %vm555, %v630, %v359
        %v635 = vsel %vm559, %v631, %v612
        %v636 = vsel %vm559, %v632, %v613
        %v637 = vsel %vm559, %v633, %v614
        %v638 = vsel %vm559, %v634, %v610
        %v639 = vsel %vm563, %v635, %v391
        %v640 = vsel %vm563, %v636, %v392
        %v641 = vsel %vm563, %v637, %v393
        %v642 = vsel %vm563, %v638, %v389
        %v643 = vsel %vm567, %v639, %v406
        %v644 = vsel %vm567, %v640, %v407
        %v645 = vsel %vm567, %v641, %v408
        %v646 = vsel %vm567, %v642, %v404
        %v647 = vsel %vm571, %v643, %v421
        %v648 = vsel %vm571, %v644, %v422
        %v649 = vsel %vm571, %v645, %v423
        %v650 = vsel %vm571, %v646, %v419
        %v651 = vsel %vm547, %v436, 0.0
        %v652 = vsel %vm547, %v437, 0.0
        %v653 = vsel %vm547, %v438, 0.0
        %v654 = vsel %vm547, %v434, 0.0
        %663 = vrot.lane.b32.xlu0 %v647, 67
        %v664 = vpop.permute.xlu0 %663
        %665 = vrot.lane.b32.xlu0 %v648, 67
        %v666 = vpop.permute.xlu0 %665
        %667 = vrot.lane.b32.xlu0 %v649, 67
        %v668 = vpop.permute.xlu0 %667
        %669 = vrot.lane.b32.xlu0 %v650, 67
        %v670 = vpop.permute.xlu0 %669
        %671 = vrot.lane.b32.xlu0 %v651, 67
        %v672 = vpop.permute.xlu0 %671
        %673 = vrot.lane.b32.xlu0 %v652, 67
        %v674 = vpop.permute.xlu0 %673
        %675 = vrot.lane.b32.xlu0 %v653, 67
        %v676 = vpop.permute.xlu0 %675
        %677 = vrot.lane.b32.xlu0 %v654, 67
        %v678 = vpop.permute.xlu0 %677
        %vm679 = vcmask 547840
        %v680 = vsel %vm679, %v664, %v666
        %v681 = vsel %vm679, %v666, %v668
        %v682 = vsel %vm679, %v668, %v670
        %v683 = vsel %vm679, %v672, %v674
        %v684 = vsel %vm679, %v674, %v676
        %v685 = vsel %vm679, %v676, %v678
        %v692 = vpack.c.bf16 %v593, %v572
        %v693 = vpack.c.bf16 %v594, %v573
        %v694 = vpack.c.bf16 %v595, %v574
        %v695 = vpack.c.bf16 %v683, %v680
        %v696 = vpack.c.bf16 %v684, %v681
        %v697 = vpack.c.bf16 %v685, %v682
        %v698 = vld [vmem:[%s1] sm:$0xf]
        %v699 = vld [vmem:[%s1 + $0x4] sm:$0xf]
        %v700 = vld [vmem:[%s1 + $0x8] sm:$0xf]
        %v701 = vld [vmem:[%s1 + $0xc] sm:$0xf]
        %v702 = vld [vmem:[%s2] sm:$0xff]
        %v703 = vld [vmem:[%s2 + $0x8] sm:$0xff]
        %v704 = vld [vmem:[%s2 + $0x10] sm:$0xff]
        %v705 = vld [vmem:[%s2 + $0x18] sm:$0xff]
        %707 = vset.pattern.permute.xlu0 0
        %708 = vperm.xlu0 %707, %v702
        %v709 = vpop.permute.xlu0 %708
        %712 = vset.pattern.permute.xlu0 0
        %713 = vperm.xlu0 %712, %v703
        %v714 = vpop.permute.xlu0 %713
        %717 = vset.pattern.permute.xlu0 0
        %718 = vperm.xlu0 %717, %v704
        %v719 = vpop.permute.xlu0 %718
        %722 = vset.pattern.permute.xlu0 0
        %723 = vperm.xlu0 %722, %v705
        %v724 = vpop.permute.xlu0 %723
        %v730 = vunpack.c.l.b16 %v698
        %v731 = vunpack.c.l.b16 %v699
        %v732 = vunpack.c.l.b16 %v700
        %v733 = vunpack.c.l.b16 %v701
        %v734 = vpack.c.b16 %v731, %v730
        %v735 = vpack.c.b16 %v733, %v732
        %vm736 = vcmask 261120
        %v738 = vsel %vm736, %v734, 0
        %v741 = vsel %vm736, %v735, 0
        %743 = vmatprep.subr.bf16.mxu0 %v693
        %744 = vmatpush1.bf16.msra.mxu0 %v692
        %745 = vmatprep.subr.bf16.mxu0 %v696
        %746 = vmatpush1.bf16.msra.mxu0 %v695
        %747 = vmatprep.subr.bf16.mxu0 0
        %748 = vmatpush1.bf16.msra.mxu0 0
        %749 = vmatprep.subr.bf16.mxu0 0
        %750 = vmatpush1.bf16.msra.mxu0 0
        %751 = vmatprep.subr.bf16.mxu0 0
        %752 = vmatpush1.bf16.msra.mxu0 0
        %753 = vmatprep.subr.bf16.mxu0 0
        %754 = vmatpush1.bf16.msra.mxu0 0
        %755 = vmatprep.subr.bf16.mxu0 0
        %756 = vmatpush1.bf16.msra.mxu0 0
        %757 = vmatprep.subr.bf16.mxu0 0
        %758 = vmatpush1.bf16.msra.mxu0 0
        %759 = vmatprep.subr.bf16.mxu0 0
        %760 = vmatpush1.bf16.msra.mxu0 0
        %761 = vmatprep.subr.bf16.mxu0 0
        %762 = vmatpush1.bf16.msra.mxu0 0
        %763 = vmatprep.subr.bf16.mxu0 0
        %764 = vmatpush1.bf16.msra.mxu0 0
        %765 = vmatprep.subr.bf16.mxu0 0
        %766 = vmatpush1.bf16.msra.mxu0 0
        %767 = vmatprep.subr.bf16.mxu0 0
        %768 = vmatpush1.bf16.msra.mxu0 0
        %769 = vmatprep.subr.bf16.mxu0 0
        %770 = vmatpush1.bf16.msra.mxu0 0
        %771 = vmatprep.subr.bf16.mxu0 0
        %772 = vmatpush1.bf16.msra.mxu0 0
        %773 = vmatprep.subr.bf16.mxu0 0
        %774 = vmatpush1.bf16.msra.mxu0 0
        %775 = vmatprep.mubr.bf16.mxu0 0
        %776 = vmatmul.mubr.bf16.gmra.mrb[0].mxu0 %v738
        %v777 = vpop.f32.mrb[0].mxu0
        %v778 = vadd.f32 %v709, %v777
        %v779 = vpop.f32.mrb[0].mxu0
        %v780 = vadd.f32 %v709, %v779
        %v781 = vpop.f32.mrb[0].mxu0
        %v782 = vadd.f32 %v714, %v781
        %v783 = vpop.f32.mrb[0].mxu0
        %v784 = vadd.f32 %v714, %v783
        %785 = vmatprep.mubr.bf16.mxu0 0
        %786 = vmatmul.mubr.bf16.gmra.mrb[0].mxu0 %v741
        %v787 = vpop.f32.mrb[0].mxu0
        %v788 = vadd.f32 %v719, %v787
        %v789 = vpop.f32.mrb[0].mxu0
        %v790 = vadd.f32 %v719, %v789
        %v791 = vpop.f32.mrb[0].mxu0
        %v792 = vadd.f32 %v724, %v791
        %v793 = vpop.f32.mrb[0].mxu0
        %v794 = vadd.f32 %v724, %v793
        %795 = vdwg.mxu0
        %796 = vmatprep.subr.bf16.mxu0 0
        %797 = vmatpush1.bf16.msra.mxu0 %v694
        %798 = vmatprep.subr.bf16.mxu0 0
        %799 = vmatpush1.bf16.msra.mxu0 %v697
        %800 = vmatprep.subr.bf16.mxu0 0
        %801 = vmatpush1.bf16.msra.mxu0 0
        %802 = vmatprep.subr.bf16.mxu0 0
        %803 = vmatpush1.bf16.msra.mxu0 0
        %804 = vmatprep.subr.bf16.mxu0 0
        %805 = vmatpush1.bf16.msra.mxu0 0
        %806 = vmatprep.subr.bf16.mxu0 0
        %807 = vmatpush1.bf16.msra.mxu0 0
        %808 = vmatprep.subr.bf16.mxu0 0
        %809 = vmatpush1.bf16.msra.mxu0 0
        %810 = vmatprep.subr.bf16.mxu0 0
        %811 = vmatpush1.bf16.msra.mxu0 0
        %812 = vmatprep.subr.bf16.mxu0 0
        %813 = vmatpush1.bf16.msra.mxu0 0
        %814 = vmatprep.subr.bf16.mxu0 0
        %815 = vmatpush1.bf16.msra.mxu0 0
        %816 = vmatprep.subr.bf16.mxu0 0
        %817 = vmatpush1.bf16.msra.mxu0 0
        %818 = vmatprep.subr.bf16.mxu0 0
        %819 = vmatpush1.bf16.msra.mxu0 0
        %820 = vmatprep.subr.bf16.mxu0 0
        %821 = vmatpush1.bf16.msra.mxu0 0
        %822 = vmatprep.subr.bf16.mxu0 0
        %823 = vmatpush1.bf16.msra.mxu0 0
        %824 = vmatprep.subr.bf16.mxu0 0
        %825 = vmatpush1.bf16.msra.mxu0 0
        %826 = vmatprep.subr.bf16.mxu0 0
        %827 = vmatpush1.bf16.msra.mxu0 0
        %828 = vmatprep.mubr.bf16.mxu0 0
        %829 = vmatmul.mubr.bf16.gmra.mrb[0].mxu0 %v738
        %v830 = vpop.f32.mrb[0].mxu0
        %v831 = vadd.f32 %v709, %v830
        %v832 = vpop.f32.mrb[0].mxu0
        %v833 = vpop.f32.mrb[0].mxu0
        %v834 = vadd.f32 %v714, %v833
        %v835 = vpop.f32.mrb[0].mxu0
        %836 = vmatprep.mubr.bf16.mxu0 0
        %837 = vmatmul.mubr.bf16.gmra.mrb[0].mxu0 %v741
        %v838 = vpop.f32.mrb[0].mxu0
        %v839 = vadd.f32 %v719, %v838
        %v840 = vpop.f32.mrb[0].mxu0
        %v841 = vpop.f32.mrb[0].mxu0
        %v842 = vadd.f32 %v724, %v841
        %v843 = vpop.f32.mrb[0].mxu0
        %844 = vdwg.mxu0
        %vm845 = vcmp.ge.f32.partialorder %v778, 0.0
        %vm846 = vcmp.ge.f32.partialorder %v780, 0.0
        %vm847 = vcmp.ge.f32.partialorder %v831, 0.0
        %vm848 = vcmp.ge.f32.partialorder %v782, 0.0
        %vm849 = vcmp.ge.f32.partialorder %v784, 0.0
        %vm850 = vcmp.ge.f32.partialorder %v834, 0.0
        %vm851 = vcmp.ge.f32.partialorder %v788, 0.0
        %vm852 = vcmp.ge.f32.partialorder %v790, 0.0
        %vm853 = vcmp.ge.f32.partialorder %v839, 0.0
        %vm854 = vcmp.ge.f32.partialorder %v792, 0.0
        %vm855 = vcmp.ge.f32.partialorder %v794, 0.0
        %vm856 = vcmp.ge.f32.partialorder %v842, 0.0
        %s857 = sld [smem:[#allocation2]]
        %v858 = vstv %s857
        %v859 = vmul.f32 %v858, %v778
        %v860 = vmul.f32 %v858, %v780
        %v861 = vmul.f32 %v858, %v831
        %v862 = vmul.f32 %v858, %v782
        %v863 = vmul.f32 %v858, %v784
        %v864 = vmul.f32 %v858, %v834
        %v865 = vmul.f32 %v858, %v788
        %v866 = vmul.f32 %v858, %v790
        %v867 = vmul.f32 %v858, %v839
        %v868 = vmul.f32 %v858, %v792
        %v869 = vmul.f32 %v858, %v794
        %v870 = vmul.f32 %v858, %v842
        %v871 = vsel %vm845, %v778, %v859
        %v872 = vsel %vm846, %v780, %v860
        %v873 = vsel %vm847, %v831, %v861
        %v874 = vsel %vm848, %v782, %v862
        %v875 = vsel %vm849, %v784, %v863
        %v876 = vsel %vm850, %v834, %v864
        %v877 = vsel %vm851, %v788, %v865
        %v878 = vsel %vm852, %v790, %v866
        %v879 = vsel %vm853, %v839, %v867
        %v880 = vsel %vm854, %v792, %v868
        %v881 = vsel %vm855, %v794, %v869
        %v882 = vsel %vm856, %v842, %v870
        %v883 = vpack.c.bf16 %v874, %v871
        %v884 = vpack.c.bf16 %v875, %v872
        %v885 = vpack.c.bf16 %v876, %v873
        %v886 = vpack.c.bf16 %v880, %v877
        %v887 = vpack.c.bf16 %v881, %v878
        %v888 = vpack.c.bf16 %v882, %v879
        %v889 = vld [vmem:[%s3] sm:$0xf]
        %v890 = vld [vmem:[%s4] sm:$0xff]
        %892 = vset.pattern.permute.xlu0 0
        %893 = vperm.xlu0 %892, %v890
        %v894 = vpop.permute.xlu0 %893
        %v897 = vsel %vm736, %v889, 0
        %899 = vmatprep.subr.bf16.mxu0 %v884
        %900 = vmatpush1.bf16.msra.mxu0 %v883
        %901 = vmatprep.subr.bf16.mxu0 %v887
        %902 = vmatpush1.bf16.msra.mxu0 %v886
        %903 = vmatprep.subr.bf16.mxu0 0
        %904 = vmatpush1.bf16.msra.mxu0 0
        %905 = vmatprep.subr.bf16.mxu0 0
        %906 = vmatpush1.bf16.msra.mxu0 0
        %907 = vmatprep.subr.bf16.mxu0 0
        %908 = vmatpush1.bf16.msra.mxu0 0
        %909 = vmatprep.subr.bf16.mxu0 0
        %910 = vmatpush1.bf16.msra.mxu0 0
        %911 = vmatprep.subr.bf16.mxu0 0
        %912 = vmatpush1.bf16.msra.mxu0 0
        %913 = vmatprep.subr.bf16.mxu0 0
        %914 = vmatpush1.bf16.msra.mxu0 0
        %915 = vmatprep.subr.bf16.mxu0 0
        %916 = vmatpush1.bf16.msra.mxu0 0
        %917 = vmatprep.subr.bf16.mxu0 0
        %918 = vmatpush1.bf16.msra.mxu0 0
        %919 = vmatprep.subr.bf16.mxu0 0
        %920 = vmatpush1.bf16.msra.mxu0 0
        %921 = vmatprep.subr.bf16.mxu0 0
        %922 = vmatpush1.bf16.msra.mxu0 0
        %923 = vmatprep.subr.bf16.mxu0 0
        %924 = vmatpush1.bf16.msra.mxu0 0
        %925 = vmatprep.subr.bf16.mxu0 0
        %926 = vmatpush1.bf16.msra.mxu0 0
        %927 = vmatprep.subr.bf16.mxu0 0
        %928 = vmatpush1.bf16.msra.mxu0 0
        %929 = vmatprep.subr.bf16.mxu0 0
        %930 = vmatpush1.bf16.msra.mxu0 0
        %931 = vmatprep.mubr.bf16.mxu0 0
        %932 = vmatmul.mubr.bf16.gmra.mrb[0].mxu0 %v897
        %v933 = vpop.f32.mrb[0].mxu0
        %v934 = vadd.f32 %v894, %v933
        %v935 = vpop.f32.mrb[0].mxu0
        %v936 = vadd.f32 %v894, %v935
        %v937 = vpop.f32.mrb[0].mxu0
        %v938 = vpop.f32.mrb[0].mxu0
        %939 = vdwg.mxu0
        %940 = vmatprep.subr.bf16.mxu0 0
        %941 = vmatpush1.bf16.msra.mxu0 %v885
        %942 = vmatprep.subr.bf16.mxu0 0
        %943 = vmatpush1.bf16.msra.mxu0 %v888
        %944 = vmatprep.subr.bf16.mxu0 0
        %945 = vmatpush1.bf16.msra.mxu0 0
        %946 = vmatprep.subr.bf16.mxu0 0
        %947 = vmatpush1.bf16.msra.mxu0 0
        %948 = vmatprep.subr.bf16.mxu0 0
        %949 = vmatpush1.bf16.msra.mxu0 0
        %950 = vmatprep.subr.bf16.mxu0 0
        %951 = vmatpush1.bf16.msra.mxu0 0
        %952 = vmatprep.subr.bf16.mxu0 0
        %953 = vmatpush1.bf16.msra.mxu0 0
        %954 = vmatprep.subr.bf16.mxu0 0
        %955 = vmatpush1.bf16.msra.mxu0 0
        %956 = vmatprep.subr.bf16.mxu0 0
        %957 = vmatpush1.bf16.msra.mxu0 0
        %958 = vmatprep.subr.bf16.mxu0 0
        %959 = vmatpush1.bf16.msra.mxu0 0
        %960 = vmatprep.subr.bf16.mxu0 0
        %961 = vmatpush1.bf16.msra.mxu0 0
        %962 = vmatprep.subr.bf16.mxu0 0
        %963 = vmatpush1.bf16.msra.mxu0 0
        %964 = vmatprep.subr.bf16.mxu0 0
        %965 = vmatpush1.bf16.msra.mxu0 0
        %966 = vmatprep.subr.bf16.mxu0 0
        %967 = vmatpush1.bf16.msra.mxu0 0
        %968 = vmatprep.subr.bf16.mxu0 0
        %969 = vmatpush1.bf16.msra.mxu0 0
        %970 = vmatprep.subr.bf16.mxu0 0
        %971 = vmatpush1.bf16.msra.mxu0 0
        %972 = vmatprep.mubr.bf16.mxu0 0
        %973 = vmatmul.mubr.bf16.gmra.mrb[0].mxu0 %v897
        %v974 = vpop.f32.mrb[0].mxu0
        %v975 = vadd.f32 %v894, %v974
        %v976 = vpop.f32.mrb[0].mxu0
        %v977 = vpop.f32.mrb[0].mxu0
        %v978 = vpop.f32.mrb[0].mxu0
        %979 = vdwg.mxu0
        %vm980 = vcmp.ge.f32.partialorder %v934, 0.0
        %vm981 = vcmp.ge.f32.partialorder %v936, 0.0
        %vm982 = vcmp.ge.f32.partialorder %v975, 0.0
        %s983 = sld [smem:[#allocation2 + $0x1]]
        %v984 = vstv %s983
        %v985 = vmul.f32 %v984, %v934
        %v986 = vmul.f32 %v984, %v936
        %v987 = vmul.f32 %v984, %v975
        %v988 = vsel %vm980, %v934, %v985
        %v989 = vsel %vm981, %v936, %v986
        %v990 = vsel %vm982, %v975, %v987
        %991 = vst [vmem:[%s284] sm:$0xff] %v988
        %992 = vst [vmem:[%s284 + $0x8] sm:$0xff] %v989
        %993 = vst [vmem:[%s284 + $0x10] sm:$0xff] %v990
        %s994 = smul.u32 3, %s23
        %p995 = scmp.lt.s32.totalorder %s22, 1
        %s996 = scalar_select %p995, %s22, 1
        %p997 = scmp.lt.s32.totalorder %s994, 2
        %s998 = scalar_select %p997, %s994, 2
        %s999 = smul.addr %s996, 3
        %s1000 = sadd.s32 %s998, %s999
        %s1001 = smul.addr %s1000, 8
        %s1002 = scalar_lea.vmem %s6, %s1001
        // Predicated region
        $region49: #{fsrcnn20_forward.4} parent=43 // pred_check
          %p1003 = pneg %p181
        $region50: #{fsrcnn20_forward.4} parent=43 // pred_check_branch
          %1005 = sbr.rel (%p1003) target = $region52
        $region51: #{fsrcnn20_forward.4} parent=43 // pred_region
          %s1006 = smul.u32 3, %s23
        $region52: #{fsrcnn20_forward.4} parent=43 // pred_fallthru
          _
      $region44: #{fsrcnn20_forward.4} parent=5 // pred_fallthru
        _
      %p1007 = scmp.le.s32.totalorder 2, %s13
      // Predicated region
      $region53: #{fsrcnn20_forward.4} parent=5 // pred_check
        %p1008 = pneg %p1007
      $region54: #{fsrcnn20_forward.4} parent=5 // pred_check_branch
        %1010 = sbr.rel (%p1008) target = $region56
      $region55: #{fsrcnn20_forward.4} parent=5 // pred_region
        %s1011 = ssub.s32 %s13, 2
        // Predicated region
        $region57: #{fsrcnn20_forward.4} parent=55 // pred_check
          %p1012 = pneg %p187
        $region58: #{fsrcnn20_forward.4} parent=55 // pred_check_branch
          %1014 = sbr.rel (%p1012) target = $region60
        $region59: #{fsrcnn20_forward.4} parent=55 // pred_region
          %s1015 = smul.u32 3, %s25
          %p1016 = scmp.lt.s32.totalorder %s24, 1
          %s1017 = scalar_select %p1016, %s24, 1
          %p1018 = scmp.lt.s32.totalorder %s1015, 2
          %s1019 = scalar_select %p1018, %s1015, 2
          %s1020 = smul.addr %s1017, 3
          %s1021 = sadd.s32 %s1019, %s1020
          %s1022 = smul.addr %s1021, 8
          %s1023 = scalar_lea.vmem %s6, %s1022
        $region60: #{fsrcnn20_forward.4} parent=55 // pred_fallthru
          _
      $region56: #{fsrcnn20_forward.4} parent=5 // pred_fallthru
        _
    $region6: #{fsrcnn20_forward.4} parent=1 // loop_footer
      %s17 = sadd.s32 1, %s13
    $region7: #{fsrcnn20_forward.4} parent=1 // loop_footer_branch
      %12 = sbr.rel target = $region3
    $region8: #{fsrcnn20_forward.4} parent=1 // loop_exit
      _
    %1024 = vsyncpa [#allocation3], 1
    %s1025 = scalar_lea.sflag [#allocation3], 1
    %1026 = vsyncpa %s1025, 1

// kernel: fsrcnn20_forward.6
$region0: #{fsrcnn20_forward.6}
  #allocation0 [shape = 'u32[]', space=smem, size = 0x4, offset = 0x4, fixed_abs, tag = 'smem constant byte address 0x4 - core index']
  #allocation1 [shape = 'u32[144,128]{1,0:T(1,128)}', space=vmem, size = 0x12000, scoped, tag = 'internal scratch']
  %s0 = inlined_call_operand.vmem [shape: f32[2,8,422], index: 0, kind: input, shape index: {}]
  %s1 = inlined_call_operand.vmem [shape: bf16[8,80], index: 1, kind: input, shape index: {}]
  %s2 = inlined_call_operand.vmem [shape: f32[8,1], index: 2, kind: input, shape index: {}]
  %s3 = inlined_call_operand.vmem [shape: bf16[32,8], index: 3, kind: input, shape index: {}]
  %s4 = inlined_call_operand.vmem [shape: f32[32,1], index: 4, kind: input, shape index: {}]
  %s5 = inlined_call_operand.vmem [shape: f32[2], index: 5, kind: input, shape index: {}]
  %s6 = inlined_call_operand.vmem [shape: f32[2,32,384], index: 6, kind: output, shape index: {}]
  %s7 = sld [smem:[#allocation0]]
  $region61: #{fsrcnn20_forward.6} parent=0
    _
  %s9 = ssub.s32 1, %s7
  %s10 = scalar_select 0, %s9, %s7
  $region1: #{fsrcnn20_forward.6} parent=0
    #allocation2 [shape = 'u8[512]{0}', space=smem, size = 0x200, scoped, tag = 'input window, operand 5, single buffered']
    #allocation3 [shape = 's32[2]{0}', space=sflag, size = 0x8, scoped, tag = 'scoped memory for fsrcnn20_forward.6']
    %11 = vsyncpa [#allocation3], 0
    loop: start=0, step=1, limit=4
    $region2: #{fsrcnn20_forward.6} parent=1 // loop_pre_header
      _
    $region3: #{fsrcnn20_forward.6} parent=1 // loop_header
      %s13 = sphi 0, %s17
      %p14 = scmp.ge.s32.totalorder %s13, 4
      %s20 = sphi 0, %s32
      %s21 = sphi 0, %s28
      %s22 = sphi 0, %s20
      %s23 = sphi 0, %s21
      %s24 = sphi 0, %s22
      %s25 = sphi 0, %s23
      %s35 = sphi 0, %s37
      %s38 = sphi 0, %s35
      %s39 = sphi 0, %s38
      %s55 = sphi 0, %s39
      %s59 = sphi 0, %s59
      %s61 = sphi 0, %s59
      %s62 = sphi 0, %s61
      %s76 = sphi 0, %s62
      %s80 = sphi 0, %s80
      %s82 = sphi 0, %s80
      %s83 = sphi 0, %s82
      %s97 = sphi 0, %s83
      %s101 = sphi 0, %s101
      %s103 = sphi 0, %s101
      %s104 = sphi 0, %s103
      %s118 = sphi 0, %s104
      %s122 = sphi 0, %s122
      %s124 = sphi 0, %s122
      %s125 = sphi 0, %s124
      %s139 = sphi 0, %s125
      %s143 = sphi 0, %s143
      %s145 = sphi 0, %s143
      %s146 = sphi 0, %s145
      %s160 = sphi 0, %s146
      %s168 = sphi 0, %s170
      %s171 = sphi 0, %s168
      %s172 = sphi 0, %s171
      %s188 = sphi 0, %s172
    $region4: #{fsrcnn20_forward.6} parent=1 // loop_header_branch
      %16 = sbr.rel (%p14) target = $region8
    $region5: #{fsrcnn20_forward.6} parent=1 // loop_body
      %s18 = ssub.s32 %s13, 1
      %s19 = ssub.s32 %s13, 2
      %s26 = sadd.s32 1, %s21
      %p27 = scmp.ge.s32.totalorder %s26, 1
      %s28 = scalar_select %p27, 0, %s26
      %s29 = sadd.s32 1, %s20
      %s30 = scalar_select %p27, %s29, %s20
      %p31 = scmp.ge.s32.totalorder %s30, 2
      %s32 = scalar_select %p31, 0, %s30
      %s33 = ssub.s32 %s20, %s32
      %p34 = scmp.eq.s32.totalorder %s33, 0
      %s36 = sadd.s32 %s35, 1
      %s37 = scalar_select %p34, %s35, %s36
      %p40 = pneg %p34
      %p41 = scmp.eq.s32.totalorder %s13, 1
      %p42 = por %p40, %p41
      %p43 = scmp.ne.s32.totalorder %s35, %s38
      %p44 = scmp.eq.s32.totalorder %s13, 0
      %p45 = por %p43, %p44
      %p46 = scmp.ne.s32.totalorder %s35, %s38
      %p47 = scmp.eq.s32.totalorder %s18, 1
      %p48 = por %p46, %p47
      %p49 = scmp.ne.s32.totalorder %s38, %s39
      %p50 = scmp.eq.s32.totalorder %s18, 0
      %p51 = por %p49, %p50
      %p52 = scmp.ne.s32.totalorder %s38, %s39
      %p53 = scmp.eq.s32.totalorder %s19, 1
      %p54 = por %p52, %p53
      %p56 = scmp.ne.s32.totalorder %s39, %s55
      %p57 = scmp.eq.s32.totalorder %s19, 0
      %p58 = por %p56, %p57
      %s60 = sadd.s32 %s59, 1
      %p63 = scmp.eq.s32.totalorder %s13, 1
      %p64 = scmp.ne.s32.totalorder %s59, %s61
      %p65 = scmp.eq.s32.totalorder %s13, 0
      %p66 = por %p64, %p65
      %p67 = scmp.ne.s32.totalorder %s59, %s61
      %p68 = scmp.eq.s32.totalorder %s18, 1
      %p69 = por %p67, %p68
      %p70 = scmp.ne.s32.totalorder %s61, %s62
      %p71 = scmp.eq.s32.totalorder %s18, 0
      %p72 = por %p70, %p71
      %p73 = scmp.ne.s32.totalorder %s61, %s62
      %p74 = scmp.eq.s32.totalorder %s19, 1
      %p75 = por %p73, %p74
      %p77 = scmp.ne.s32.totalorder %s62, %s76
      %p78 = scmp.eq.s32.totalorder %s19, 0
      %p79 = por %p77, %p78
      %s81 = sadd.s32 %s80, 1
      %p84 = scmp.eq.s32.totalorder %s13, 1
      %p85 = scmp.ne.s32.totalorder %s80, %s82
      %p86 = scmp.eq.s32.totalorder %s13, 0
      %p87 = por %p85, %p86
      %p88 = scmp.ne.s32.totalorder %s80, %s82
      %p89 = scmp.eq.s32.totalorder %s18, 1
      %p90 = por %p88, %p89
      %p91 = scmp.ne.s32.totalorder %s82, %s83
      %p92 = scmp.eq.s32.totalorder %s18, 0
      %p93 = por %p91, %p92
      %p94 = scmp.ne.s32.totalorder %s82, %s83
      %p95 = scmp.eq.s32.totalorder %s19, 1
      %p96 = por %p94, %p95
      %p98 = scmp.ne.s32.totalorder %s83, %s97
      %p99 = scmp.eq.s32.totalorder %s19, 0
      %p100 = por %p98, %p99
      %s102 = sadd.s32 %s101, 1
      %p105 = scmp.eq.s32.totalorder %s13, 1
      %p106 = scmp.ne.s32.totalorder %s101, %s103
      %p107 = scmp.eq.s32.totalorder %s13, 0
      %p108 = por %p106, %p107
      %p109 = scmp.ne.s32.totalorder %s101, %s103
      %p110 = scmp.eq.s32.totalorder %s18, 1
      %p111 = por %p109, %p110
      %p112 = scmp.ne.s32.totalorder %s103, %s104
      %p113 = scmp.eq.s32.totalorder %s18, 0
      %p114 = por %p112, %p113
      %p115 = scmp.ne.s32.totalorder %s103, %s104
      %p116 = scmp.eq.s32.totalorder %s19, 1
      %p117 = por %p115, %p116
      %p119 = scmp.ne.s32.totalorder %s104, %s118
      %p120 = scmp.eq.s32.totalorder %s19, 0
      %p121 = por %p119, %p120
      %s123 = sadd.s32 %s122, 1
      %p126 = scmp.eq.s32.totalorder %s13, 1
      %p127 = scmp.ne.s32.totalorder %s122, %s124
      %p128 = scmp.eq.s32.totalorder %s13, 0
      %p129 = por %p127, %p128
      %p130 = scmp.ne.s32.totalorder %s122, %s124
      %p131 = scmp.eq.s32.totalorder %s18, 1
      %p132 = por %p130, %p131
      %p133 = scmp.ne.s32.totalorder %s124, %s125
      %p134 = scmp.eq.s32.totalorder %s18, 0
      %p135 = por %p133, %p134
      %p136 = scmp.ne.s32.totalorder %s124, %s125
      %p137 = scmp.eq.s32.totalorder %s19, 1
      %p138 = por %p136, %p137
      %p140 = scmp.ne.s32.totalorder %s125, %s139
      %p141 = scmp.eq.s32.totalorder %s19, 0
      %p142 = por %p140, %p141
      %s144 = sadd.s32 %s143, 1
      %p147 = scmp.eq.s32.totalorder %s13, 1
      %p148 = scmp.ne.s32.totalorder %s143, %s145
      %p149 = scmp.eq.s32.totalorder %s13, 0
      %p150 = por %p148, %p149
      %p151 = scmp.ne.s32.totalorder %s143, %s145
      %p152 = scmp.eq.s32.totalorder %s18, 1
      %p153 = por %p151, %p152
      %p154 = scmp.ne.s32.totalorder %s145, %s146
      %p155 = scmp.eq.s32.totalorder %s18, 0
      %p156 = por %p154, %p155
      %p157 = scmp.ne.s32.totalorder %s145, %s146
      %p158 = scmp.eq.s32.totalorder %s19, 1
      %p159 = por %p157, %p158
      %p161 = scmp.ne.s32.totalorder %s146, %s160
      %p162 = scmp.eq.s32.totalorder %s19, 0
      %p163 = por %p161, %p162
      %s164 = ssub.s32 %s20, %s32
      %s165 = ssub.s32 %s21, %s28
      %s166 = sor.u32 %s164, %s165
      %p167 = scmp.eq.s32.totalorder %s166, 0
      %s169 = sadd.s32 %s168, 1
      %s170 = scalar_select %p167, %s168, %s169
      %p173 = pneg %p167
      %p174 = scmp.eq.s32.totalorder %s13, 1
      %p175 = por %p173, %p174
      %p176 = scmp.ne.s32.totalorder %s168, %s171
      %p177 = scmp.eq.s32.totalorder %s13, 0
      %p178 = por %p176, %p177
      %p179 = scmp.ne.s32.totalorder %s168, %s171
      %p180 = scmp.eq.s32.totalorder %s18, 1
      %p181 = por %p179, %p180
      %p182 = scmp.ne.s32.totalorder %s171, %s172
      %p183 = scmp.eq.s32.totalorder %s18, 0
      %p184 = por %p182, %p183
      %p185 = scmp.ne.s32.totalorder %s171, %s172
      %p186 = scmp.eq.s32.totalorder %s19, 1
      %p187 = por %p185, %p186
      %p189 = scmp.ne.s32.totalorder %s172, %s188
      %p190 = scmp.eq.s32.totalorder %s19, 0
      %p191 = por %p189, %p190
      %p192 = scmp.le.s32.totalorder 1, %s13
      %p193 = scmp.lt.s32.totalorder %s13, 3
      %p194 = pnand %p192, %p193
      %p195 = pneg %p194
      // Predicated region
      $region9: #{fsrcnn20_forward.6} parent=5 // pred_check
        _
      $region10: #{fsrcnn20_forward.6} parent=5 // pred_check_branch
        %197 = sbr.rel (%p194) target = $region12
      $region11: #{fsrcnn20_forward.6} parent=5 // pred_region
        %s198 = ssub.s32 %s13, 1
        // Predicated region
        $region13: #{fsrcnn20_forward.6} parent=11 // pred_check
          %p199 = pneg %p72
        $region14: #{fsrcnn20_forward.6} parent=11 // pred_check_branch
          %201 = sbr.rel (%p199) target = $region16
        $region15: #{fsrcnn20_forward.6} parent=11 // pred_region
          _
        $region16: #{fsrcnn20_forward.6} parent=11 // pred_fallthru
          _
        // Predicated region
        $region17: #{fsrcnn20_forward.6} parent=11 // pred_check
          %p202 = pneg %p93
        $region18: #{fsrcnn20_forward.6} parent=11 // pred_check_branch
          %204 = sbr.rel (%p202) target = $region20
        $region19: #{fsrcnn20_forward.6} parent=11 // pred_region
          _
        $region20: #{fsrcnn20_forward.6} parent=11 // pred_fallthru
          _
        // Predicated region
        $region21: #{fsrcnn20_forward.6} parent=11 // pred_check
          %p205 = pneg %p114
        $region22: #{fsrcnn20_forward.6} parent=11 // pred_check_branch
          %207 = sbr.rel (%p205) target = $region24
        $region23: #{fsrcnn20_forward.6} parent=11 // pred_region
          _
        $region24: #{fsrcnn20_forward.6} parent=11 // pred_fallthru
          _
        // Predicated region
        $region25: #{fsrcnn20_forward.6} parent=11 // pred_check
          %p208 = pneg %p135
        $region26: #{fsrcnn20_forward.6} parent=11 // pred_check_branch
          %210 = sbr.rel (%p208) target = $region28
        $region27: #{fsrcnn20_forward.6} parent=11 // pred_region
          _
        $region28: #{fsrcnn20_forward.6} parent=11 // pred_fallthru
          _
        // Predicated region
        $region29: #{fsrcnn20_forward.6} parent=11 // pred_check
          %p211 = pneg %p156
        $region30: #{fsrcnn20_forward.6} parent=11 // pred_check_branch
          %213 = sbr.rel (%p211) target = $region32
        $region31: #{fsrcnn20_forward.6} parent=11 // pred_region
          %s215 = ssub.s32 16, 16
          %216 = vsyncadd [#allocation3], %s215
          %s218 = sshll.u32 %s5, 4
          %s219 = int_to_ptr.vmem [resolvable:$true] %s218
          %221 = dma.vmem_to_smem %s219, 16, [#allocation2], [#allocation3]
        $region32: #{fsrcnn20_forward.6} parent=11 // pred_fallthru
          _
      $region12: #{fsrcnn20_forward.6} parent=5 // pred_fallthru
        _
      %p222 = scmp.lt.s32.totalorder %s13, 2
      // Predicated region
      $region33: #{fsrcnn20_forward.6} parent=5 // pred_check
        %p223 = pneg %p222
      $region34: #{fsrcnn20_forward.6} parent=5 // pred_check_branch
        %225 = sbr.rel (%p223) target = $region36
      $region35: #{fsrcnn20_forward.6} parent=5 // pred_region
        // Predicated region
        $region37: #{fsrcnn20_forward.6} parent=35 // pred_check
          %p226 = pneg %p45
        $region38: #{fsrcnn20_forward.6} parent=35 // pred_check_branch
          %228 = sbr.rel (%p226) target = $region40
        $region39: #{fsrcnn20_forward.6} parent=35 // pred_region
          %p229 = scmp.lt.s32.totalorder %s20, 1
          %s230 = scalar_select %p229, %s20, 1
          %s231 = smul.addr %s230, 4
          %s232 = smul.addr %s231, 8
          %s233 = scalar_lea.vmem %s0, %s232
        $region40: #{fsrcnn20_forward.6} parent=35 // pred_fallthru
          _
      $region36: #{fsrcnn20_forward.6} parent=5 // pred_fallthru
        _
      %p234 = scmp.le.s32.totalorder 1, %s13
      %p235 = scmp.lt.s32.totalorder %s13, 3
      %p236 = pnand %p234, %p235
      %p237 = pneg %p236
      // Predicated region
      $region41: #{fsrcnn20_forward.6} parent=5 // pred_check
        _
      $region42: #{fsrcnn20_forward.6} parent=5 // pred_check_branch
        %239 = sbr.rel (%p236) target = $region44
      $region43: #{fsrcnn20_forward.6} parent=5 // pred_region
        %s240 = ssub.s32 %s13, 1
        // Predicated region
        $region45: #{fsrcnn20_forward.6} parent=43 // pred_check
          %p241 = pneg %p156
        $region46: #{fsrcnn20_forward.6} parent=43 // pred_check_branch
          %243 = sbr.rel (%p241) target = $region48
        $region47: #{fsrcnn20_forward.6} parent=43 // pred_region
          %244 = dma.done [#allocation3], 16
        $region48: #{fsrcnn20_forward.6} parent=43 // pred_fallthru
          _
        %245 = sfence
        %p246 = scmp.lt.s32.totalorder %s22, 1
        %s247 = scalar_select %p246, %s22, 1
        %s248 = smul.addr %s247, 4
        %s249 = smul.addr %s248, 8
        %s250 = scalar_lea.vmem %s0, %s249
        %p251 = pneg %p51
        %p252 = pneg %p48
        %p253 = pneg %p72
        %p254 = pneg %p69
        %p255 = pneg %p93
        %p256 = pneg %p90
        %p257 = pneg %p114
        %p258 = pneg %p111
        %p259 = pneg %p135
        %p260 = pneg %p132
        %p261 = pneg %p156
        %p262 = pneg %p153
        %p263 = pneg %p184
        %p264 = pneg %p181
        %s265 = smul.u32 3, %s23
        %p266 = scmp.lt.s32.totalorder %s22, 1
        %s267 = scalar_select %p266, %s22, 1
        %p268 = scmp.lt.s32.totalorder %s265, 2
        %s269 = scalar_select %p268, %s265, 2
        %s270 = smul.addr %s267, 12
        %s271 = sadd.s32 %s269, %s270
        %s272 = smul.addr %s271, 8
        %s273 = scalar_lea.vmem %s6, %s272
        %p274 = scmp.lt.s32.totalorder %s22, 1
        %s275 = scalar_select %p274, %s22, 1
        %s276 = smul.addr %s275, 4
        %s277 = smul.addr %s276, 8
        %s278 = scalar_lea.vmem %s0, %s277
        %s279 = smul.u32 3, %s23
        %p280 = scmp.lt.s32.totalorder %s22, 1
        %s281 = scalar_select %p280, %s22, 1
        %p282 = scmp.lt.s32.totalorder %s279, 2
        %s283 = scalar_select %p282, %s279, 2
        %s284 = smul.addr %s281, 12
        %s285 = sadd.s32 %s283, %s284
        %s286 = smul.addr %s285, 8
        %s287 = scalar_lea.vmem %s6, %s286
        %s288 = smul.u32 3, %s23
        %v290 = vld [vmem:[%s278] sm:$0xff]
        %v291 = vld [vmem:[%s278 + $0x8] sm:$0xff]
        %v292 = vld [vmem:[%s278 + $0x10] sm:$0xff]
        %v293 = vld [vmem:[%s278 + $0x18] sm:$0xff]
        %298 = vrot.lane.b32.xlu0 %v290, 127
        %v299 = vpop.permute.xlu0 %298
        %300 = vrot.lane.b32.xlu0 %v291, 127
        %v301 = vpop.permute.xlu0 %300
        %302 = vrot.lane.b32.xlu0 %v292, 127
        %v303 = vpop.permute.xlu0 %302
        %304 = vrot.lane.b32.xlu0 %v293, 127
        %v305 = vpop.permute.xlu0 %304
        %vm306 = vcmask 1039360
        %v307 = vsel %vm306, %v299, %v301
        %v308 = vsel %vm306, %v301, %v303
        %v309 = vsel %vm306, %v303, %v305
        %313 = vrot.lane.b32.xlu0 %v290, 126
        %v314 = vpop.permute.xlu0 %313
        %315 = vrot.lane.b32.xlu0 %v291, 126
        %v316 = vpop.permute.xlu0 %315
        %317 = vrot.lane.b32.xlu0 %v292, 126
        %v318 = vpop.permute.xlu0 %317
        %319 = vrot.lane.b32.xlu0 %v293, 126
        %v320 = vpop.permute.xlu0 %319
        %vm321 = vcmask 1031168
        %v322 = vsel %vm321, %v314, %v316
        %v323 = vsel %vm321, %v316, %v318
        %v324 = vsel %vm321, %v318, %v320
        %328 = vrot.lane.b32.xlu0 %v290, 110
        %v329 = vpop.permute.xlu0 %328
        %330 = vrot.lane.b32.xlu0 %v291, 110
        %v331 = vpop.permute.xlu0 %330
        %332 = vrot.lane.b32.xlu0 %v292, 110
        %v333 = vpop.permute.xlu0 %332
        %334 = vrot.lane.b32.xlu0 %v293, 110
        %v335 = vpop.permute.xlu0 %334
        %vm336 = vcmask 900096
        %v337 = vsel %vm336, %v329, %v331
        %v338 = vsel %vm336, %v331, %v333
        %v339 = vsel %vm336, %v333, %v335
        %343 = vrot.lane.b32.xlu0 %v290, 109
        %v344 = vpop.permute.xlu0 %343
        %345 = vrot.lane.b32.xlu0 %v291, 109
        %v346 = vpop.permute.xlu0 %345
        %347 = vrot.lane.b32.xlu0 %v292, 109
        %v348 = vpop.permute.xlu0 %347
        %349 = vrot.lane.b32.xlu0 %v293, 109
        %v350 = vpop.permute.xlu0 %349
        %vm351 = vcmask 891904
        %v352 = vsel %vm351, %v344, %v346
        %v353 = vsel %vm351, %v346, %v348
        %v354 = vsel %vm351, %v348, %v350
        %358 = vrot.lane.b32.xlu0 %v290, 108
        %v359 = vpop.permute.xlu0 %358
        %360 = vrot.lane.b32.xlu0 %v291, 108
        %v361 = vpop.permute.xlu0 %360
        %362 = vrot.lane.b32.xlu0 %v292, 108
        %v363 = vpop.permute.xlu0 %362
        %364 = vrot.lane.b32.xlu0 %v293, 108
        %v365 = vpop.permute.xlu0 %364
        %vm366 = vcmask 883712
        %v367 = vsel %vm366, %v359, %v361
        %v368 = vsel %vm366, %v361, %v363
        %v369 = vsel %vm366, %v363, %v365
        %373 = vrot.lane.b32.xlu0 %v290, 92
        %v374 = vpop.permute.xlu0 %373
        %375 = vrot.lane.b32.xlu0 %v291, 92
        %v376 = vpop.permute.xlu0 %375
        %377 = vrot.lane.b32.xlu0 %v292, 92
        %v378 = vpop.permute.xlu0 %377
        %379 = vrot.lane.b32.xlu0 %v293, 92
        %v380 = vpop.permute.xlu0 %379
        %vm381 = vcmask 752640
        %v382 = vsel %vm381, %v374, %v376
        %v383 = vsel %vm381, %v376, %v378
        %v384 = vsel %vm381, %v378, %v380
        %388 = vrot.lane.b32.xlu0 %v290, 91
        %v389 = vpop.permute.xlu0 %388
        %390 = vrot.lane.b32.xlu0 %v291, 91
        %v391 = vpop.permute.xlu0 %390
        %392 = vrot.lane.b32.xlu0 %v292, 91
        %v393 = vpop.permute.xlu0 %392
        %394 = vrot.lane.b32.xlu0 %v293, 91
        %v395 = vpop.permute.xlu0 %394
        %vm396 = vcmask 744448
        %v397 = vsel %vm396, %v389, %v391
        %v398 = vsel %vm396, %v391, %v393
        %v399 = vsel %vm396, %v393, %v395
        %403 = vrot.lane.b32.xlu0 %v290, 90
        %v404 = vpop.permute.xlu0 %403
        %405 = vrot.lane.b32.xlu0 %v291, 90
        %v406 = vpop.permute.xlu0 %405
        %407 = vrot.lane.b32.xlu0 %v292, 90
        %v408 = vpop.permute.xlu0 %407
        %409 = vrot.lane.b32.xlu0 %v293, 90
        %v410 = vpop.permute.xlu0 %409
        %vm411 = vcmask 736256
        %v412 = vsel %vm411, %v404, %v406
        %v413 = vsel %vm411, %v406, %v408
        %v414 = vsel %vm411, %v408, %v410
        %v418 = vpack.c.bf16 %v307, %v290
        %v419 = vpack.c.bf16 %v308, %v291
        %v420 = vpack.c.bf16 %v309, %v292
        %v421 = vpack.c.bf16 %v337, %v322
        %v422 = vpack.c.bf16 %v338, %v323
        %v423 = vpack.c.bf16 %v339, %v324
        %v424 = vpack.c.bf16 %v367, %v352
        %v425 = vpack.c.bf16 %v368, %v353
        %v426 = vpack.c.bf16 %v369, %v354
        %v427 = vpack.c.bf16 %v397, %v382
        %v428 = vpack.c.bf16 %v398, %v383
        %v429 = vpack.c.bf16 %v399, %v384
        %v430 = vpack.c.bf16 0.0, %v412
        %v431 = vpack.c.bf16 0.0, %v413
        %v432 = vpack.c.bf16 0.0, %v414
        %v433 = vld [vmem:[%s1] sm:$0xf]
        %v434 = vld [vmem:[%s2] sm:$0xff]
        %436 = vset.pattern.permute.xlu0 0
        %437 = vperm.xlu0 %436, %v434
        %v438 = vpop.permute.xlu0 %437
        %vm440 = vcmask 654336
        %v442 = vsel %vm440, %v433, 0
        %444 = vmatprep.subr.bf16.mxu0 %v419
        %445 = vmatpush1.bf16.msra.mxu0 %v418
        %446 = vmatprep.subr.bf16.mxu0 %v422
        %447 = vmatpush1.bf16.msra.mxu0 %v421
        %448 = vmatprep.subr.bf16.mxu0 %v425
        %449 = vmatpush1.bf16.msra.mxu0 %v424
        %450 = vmatprep.subr.bf16.mxu0 %v428
        %451 = vmatpush1.bf16.msra.mxu0 %v427
        %452 = vmatprep.subr.bf16.mxu0 %v431
        %453 = vmatpush1.bf16.msra.mxu0 %v430
        %454 = vmatprep.subr.bf16.mxu0 0
        %455 = vmatpush1.bf16.msra.mxu0 0
        %456 = vmatprep.subr.bf16.mxu0 0
        %457 = vmatpush1.bf16.msra.mxu0 0
        %458 = vmatprep.subr.bf16.mxu0 0
        %459 = vmatpush1.bf16.msra.mxu0 0
        %460 = vmatprep.subr.bf16.mxu0 0
        %461 = vmatpush1.bf16.msra.mxu0 0
        %462 = vmatprep.subr.bf16.mxu0 0
        %463 = vmatpush1.bf16.msra.mxu0 0
        %464 = vmatprep.subr.bf16.mxu0 0
        %465 = vmatpush1.bf16.msra.mxu0 0
        %466 = vmatprep.subr.bf16.mxu0 0
        %467 = vmatpush1.bf16.msra.mxu0 0
        %468 = vmatprep.subr.bf16.mxu0 0
        %469 = vmatpush1.bf16.msra.mxu0 0
        %470 = vmatprep.subr.bf16.mxu0 0
        %471 = vmatpush1.bf16.msra.mxu0 0
        %472 = vmatprep.subr.bf16.mxu0 0
        %473 = vmatpush1.bf16.msra.mxu0 0
        %474 = vmatprep.subr.bf16.mxu0 0
        %475 = vmatpush1.bf16.msra.mxu0 0
        %476 = vmatprep.mubr.bf16.mxu0 0
        %477 = vmatmul.mubr.bf16.gmra.mrb[0].mxu0 %v442
        %v478 = vpop.f32.mrb[0].mxu0
        %v479 = vadd.f32 %v438, %v478
        %v480 = vpop.f32.mrb[0].mxu0
        %v481 = vadd.f32 %v438, %v480
        %v482 = vpop.f32.mrb[0].mxu0
        %v483 = vpop.f32.mrb[0].mxu0
        %484 = vdwg.mxu0
        %485 = vmatprep.subr.bf16.mxu0 0
        %486 = vmatpush1.bf16.msra.mxu0 %v420
        %487 = vmatprep.subr.bf16.mxu0 0
        %488 = vmatpush1.bf16.msra.mxu0 %v423
        %489 = vmatprep.subr.bf16.mxu0 0
        %490 = vmatpush1.bf16.msra.mxu0 %v426
        %491 = vmatprep.subr.bf16.mxu0 0
        %492 = vmatpush1.bf16.msra.mxu0 %v429
        %493 = vmatprep.subr.bf16.mxu0 0
        %494 = vmatpush1.bf16.msra.mxu0 %v432
        %495 = vmatprep.subr.bf16.mxu0 0
        %496 = vmatpush1.bf16.msra.mxu0 0
        %497 = vmatprep.subr.bf16.mxu0 0
        %498 = vmatpush1.bf16.msra.mxu0 0
        %499 = vmatprep.subr.bf16.mxu0 0
        %500 = vmatpush1.bf16.msra.mxu0 0
        %501 = vmatprep.subr.bf16.mxu0 0
        %502 = vmatpush1.bf16.msra.mxu0 0
        %503 = vmatprep.subr.bf16.mxu0 0
        %504 = vmatpush1.bf16.msra.mxu0 0
        %505 = vmatprep.subr.bf16.mxu0 0
        %506 = vmatpush1.bf16.msra.mxu0 0
        %507 = vmatprep.subr.bf16.mxu0 0
        %508 = vmatpush1.bf16.msra.mxu0 0
        %509 = vmatprep.subr.bf16.mxu0 0
        %510 = vmatpush1.bf16.msra.mxu0 0
        %511 = vmatprep.subr.bf16.mxu0 0
        %512 = vmatpush1.bf16.msra.mxu0 0
        %513 = vmatprep.subr.bf16.mxu0 0
        %514 = vmatpush1.bf16.msra.mxu0 0
        %515 = vmatprep.subr.bf16.mxu0 0
        %516 = vmatpush1.bf16.msra.mxu0 0
        %517 = vmatprep.mubr.bf16.mxu0 0
        %518 = vmatmul.mubr.bf16.gmra.mrb[0].mxu0 %v442
        %v519 = vpop.f32.mrb[0].mxu0
        %v520 = vadd.f32 %v438, %v519
        %v521 = vpop.f32.mrb[0].mxu0
        %v522 = vpop.f32.mrb[0].mxu0
        %v523 = vpop.f32.mrb[0].mxu0
        %524 = vdwg.mxu0
        %vm525 = vcmp.ge.f32.partialorder %v479, 0.0
        %vm526 = vcmp.ge.f32.partialorder %v481, 0.0
        %vm527 = vcmp.ge.f32.partialorder %v520, 0.0
        %s528 = sld [smem:[#allocation2]]
        %v529 = vstv %s528
        %v530 = vmul.f32 %v529, %v479
        %v531 = vmul.f32 %v529, %v481
        %v532 = vmul.f32 %v529, %v520
        %v533 = vsel %vm525, %v479, %v530
        %v534 = vsel %vm526, %v481, %v531
        %v535 = vsel %vm527, %v520, %v532
        %v536 = vpack.c.bf16 %v533, %v533
        %v537 = vpack.c.bf16 %v534, %v534
        %v538 = vpack.c.bf16 %v535, %v535
        %v539 = vld [vmem:[%s3] sm:$0xf]
        %v540 = vld [vmem:[%s3 + $0x4] sm:$0xf]
        %v541 = vld [vmem:[%s3 + $0x8] sm:$0xf]
        %v542 = vld [vmem:[%s3 + $0xc] sm:$0xf]
        %v543 = vld [vmem:[%s4] sm:$0xff]
        %v544 = vld [vmem:[%s4 + $0x8] sm:$0xff]
        %v545 = vld [vmem:[%s4 + $0x10] sm:$0xff]
        %v546 = vld [vmem:[%s4 + $0x18] sm:$0xff]
        %548 = vset.pattern.permute.xlu0 0
        %549 = vperm.xlu0 %548, %v543
        %v550 = vpop.permute.xlu0 %549
        %553 = vset.pattern.permute.xlu0 0
        %554 = vperm.xlu0 %553, %v544
        %v555 = vpop.permute.xlu0 %554
        %558 = vset.pattern.permute.xlu0 0
        %559 = vperm.xlu0 %558, %v545
        %v560 = vpop.permute.xlu0 %559
        %563 = vset.pattern.permute.xlu0 0
        %564 = vperm.xlu0 %563, %v546
        %v565 = vpop.permute.xlu0 %564
        %v571 = vunpack.c.l.b16 %v539
        %v572 = vunpack.c.l.b16 %v540
        %v573 = vunpack.c.l.b16 %v541
        %v574 = vunpack.c.l.b16 %v542
        %v575 = vpack.c.b16 %v572, %v571
        %v576 = vpack.c.b16 %v574, %v573
        %vm577 = vcmask 64512
        %v579 = vsel %vm577, %v575, 0
        %v582 = vsel %vm577, %v576, 0
        %vm584 = vcmask 1043456
        %v586 = vsel %vm584, %v536, 0
        %v589 = vsel %vm584, %v537, 0
        %v592 = vsel %vm584, %v538, 0
        %594 = vmatprep.subr.bf16.mxu0 %v589
        %595 = vmatpush1.bf16.msra.mxu0 %v586
        %596 = vmatprep.subr.bf16.mxu0 0
        %597 = vmatpush1.bf16.msra.mxu0 0
        %598 = vmatprep.subr.bf16.mxu0 0
        %599 = vmatpush1.bf16.msra.mxu0 0
        %600 = vmatprep.subr.bf16.mxu0 0
        %601 = vmatpush1.bf16.msra.mxu0 0
        %602 = vmatprep.subr.bf16.mxu0 0
        %603 = vmatpush1.bf16.msra.mxu0 0
        %604 = vmatprep.subr.bf16.mxu0 0
        %605 = vmatpush1.bf16.msra.mxu0 0
        %606 = vmatprep.subr.bf16.mxu0 0
        %607 = vmatpush1.bf16.msra.mxu0 0
        %608 = vmatprep.subr.bf16.mxu0 0
        %609 = vmatpush1.bf16.msra.mxu0 0
        %610 = vmatprep.subr.bf16.mxu0 0
        %611 = vmatpush1.bf16.msra.mxu0 0
        %612 = vmatprep.subr.bf16.mxu0 0
        %613 = vmatpush1.bf16.msra.mxu0 0
        %614 = vmatprep.subr.bf16.mxu0 0
        %615 = vmatpush1.bf16.msra.mxu0 0
        %616 = vmatprep.subr.bf16.mxu0 0
        %617 = vmatpush1.bf16.msra.mxu0 0
        %618 = vmatprep.subr.bf16.mxu0 0
        %619 = vmatpush1.bf16.msra.mxu0 0
        %620 = vmatprep.subr.bf16.mxu0 0
        %621 = vmatpush1.bf16.msra.mxu0 0
        %622 = vmatprep.subr.bf16.mxu0 0
        %623 = vmatpush1.bf16.msra.mxu0 0
        %624 = vmatprep.subr.bf16.mxu0 0
        %625 = vmatpush1.bf16.msra.mxu0 0
        %626 = vmatprep.mubr.bf16.mxu0 0
        %627 = vmatmul.mubr.bf16.gmra.mrb[0].mxu0 %v579
        %v628 = vpop.f32.mrb[0].mxu0
        %v629 = vadd.f32 %v550, %v628
        %v630 = vpop.f32.mrb[0].mxu0
        %v631 = vadd.f32 %v550, %v630
        %v632 = vpop.f32.mrb[0].mxu0
        %v633 = vadd.f32 %v555, %v632
        %v634 = vpop.f32.mrb[0].mxu0
        %v635 = vadd.f32 %v555, %v634
        %636 = vmatprep.mubr.bf16.mxu0 0
        %637 = vmatmul.mubr.bf16.gmra.mrb[0].mxu0 %v582
        %v638 = vpop.f32.mrb[0].mxu0
        %v639 = vadd.f32 %v560, %v638
        %v640 = vpop.f32.mrb[0].mxu0
        %v641 = vadd.f32 %v560, %v640
        %v642 = vpop.f32.mrb[0].mxu0
        %v643 = vadd.f32 %v565, %v642
        %v644 = vpop.f32.mrb[0].mxu0
        %v645 = vadd.f32 %v565, %v644
        %646 = vdwg.mxu0
        %647 = vmatprep.subr.bf16.mxu0 0
        %648 = vmatpush1.bf16.msra.mxu0 %v592
        %649 = vmatprep.subr.bf16.mxu0 0
        %650 = vmatpush1.bf16.msra.mxu0 0
        %651 = vmatprep.subr.bf16.mxu0 0
        %652 = vmatpush1.bf16.msra.mxu0 0
        %653 = vmatprep.subr.bf16.mxu0 0
        %654 = vmatpush1.bf16.msra.mxu0 0
        %655 = vmatprep.subr.bf16.mxu0 0
        %656 = vmatpush1.bf16.msra.mxu0 0
        %657 = vmatprep.subr.bf16.mxu0 0
        %658 = vmatpush1.bf16.msra.mxu0 0
        %659 = vmatprep.subr.bf16.mxu0 0
        %660 = vmatpush1.bf16.msra.mxu0 0
        %661 = vmatprep.subr.bf16.mxu0 0
        %662 = vmatpush1.bf16.msra.mxu0 0
        %663 = vmatprep.subr.bf16.mxu0 0
        %664 = vmatpush1.bf16.msra.mxu0 0
        %665 = vmatprep.subr.bf16.mxu0 0
        %666 = vmatpush1.bf16.msra.mxu0 0
        %667 = vmatprep.subr.bf16.mxu0 0
        %668 = vmatpush1.bf16.msra.mxu0 0
        %669 = vmatprep.subr.bf16.mxu0 0
        %670 = vmatpush1.bf16.msra.mxu0 0
        %671 = vmatprep.subr.bf16.mxu0 0
        %672 = vmatpush1.bf16.msra.mxu0 0
        %673 = vmatprep.subr.bf16.mxu0 0
        %674 = vmatpush1.bf16.msra.mxu0 0
        %675 = vmatprep.subr.bf16.mxu0 0
        %676 = vmatpush1.bf16.msra.mxu0 0
        %677 = vmatprep.subr.bf16.mxu0 0
        %678 = vmatpush1.bf16.msra.mxu0 0
        %679 = vmatprep.mubr.bf16.mxu0 0
        %680 = vmatmul.mubr.bf16.gmra.mrb[0].mxu0 %v579
        %v681 = vpop.f32.mrb[0].mxu0
        %v682 = vadd.f32 %v550, %v681
        %v683 = vpop.f32.mrb[0].mxu0
        %v684 = vpop.f32.mrb[0].mxu0
        %v685 = vadd.f32 %v555, %v684
        %v686 = vpop.f32.mrb[0].mxu0
        %687 = vmatprep.mubr.bf16.mxu0 0
        %688 = vmatmul.mubr.bf16.gmra.mrb[0].mxu0 %v582
        %v689 = vpop.f32.mrb[0].mxu0
        %v690 = vadd.f32 %v560, %v689
        %v691 = vpop.f32.mrb[0].mxu0
        %v692 = vpop.f32.mrb[0].mxu0
        %v693 = vadd.f32 %v565, %v692
        %v694 = vpop.f32.mrb[0].mxu0
        %695 = vdwg.mxu0
        %vm696 = vcmp.ge.f32.partialorder %v629, 0.0
        %vm697 = vcmp.ge.f32.partialorder %v631, 0.0
        %vm698 = vcmp.ge.f32.partialorder %v682, 0.0
        %vm699 = vcmp.ge.f32.partialorder %v633, 0.0
        %vm700 = vcmp.ge.f32.partialorder %v635, 0.0
        %vm701 = vcmp.ge.f32.partialorder %v685, 0.0
        %vm702 = vcmp.ge.f32.partialorder %v639, 0.0
        %vm703 = vcmp.ge.f32.partialorder %v641, 0.0
        %vm704 = vcmp.ge.f32.partialorder %v690, 0.0
        %vm705 = vcmp.ge.f32.partialorder %v643, 0.0
        %vm706 = vcmp.ge.f32.partialorder %v645, 0.0
        %vm707 = vcmp.ge.f32.partialorder %v693, 0.0
        %s708 = sld [smem:[#allocation2 + $0x1]]
        %v709 = vstv %s708
        %v710 = vmul.f32 %v709, %v629
        %v711 = vmul.f32 %v709, %v631
        %v712 = vmul.f32 %v709, %v682
        %v713 = vmul.f32 %v709, %v633
        %v714 = vmul.f32 %v709, %v635
        %v715 = vmul.f32 %v709, %v685
        %v716 = vmul.f32 %v709, %v639
        %v717 = vmul.f32 %v709, %v641
        %v718 = vmul.f32 %v709, %v690
        %v719 = vmul.f32 %v709, %v643
        %v720 = vmul.f32 %v709, %v645
        %v721 = vmul.f32 %v709, %v693
        %v722 = vsel %vm696, %v629, %v710
        %v723 = vsel %vm697, %v631, %v711
        %v724 = vsel %vm698, %v682, %v712
        %v725 = vsel %vm699, %v633, %v713
        %v726 = vsel %vm700, %v635, %v714
        %v727 = vsel %vm701, %v685, %v715
        %v728 = vsel %vm702, %v639, %v716
        %v729 = vsel %vm703, %v641, %v717
        %v730 = vsel %vm704, %v690, %v718
        %v731 = vsel %vm705, %v643, %v719
        %v732 = vsel %vm706, %v645, %v720
        %v733 = vsel %vm707, %v693, %v721
        %734 = vst [vmem:[%s287] sm:$0xff] %v722
        %735 = vst [vmem:[%s287 + $0x8] sm:$0xff] %v723
        %736 = vst [vmem:[%s287 + $0x10] sm:$0xff] %v724
        %737 = vst [vmem:[%s287 + $0x18] sm:$0xff] %v725
        %738 = vst [vmem:[%s287 + $0x20] sm:$0xff] %v726
        %739 = vst [vmem:[%s287 + $0x28] sm:$0xff] %v727
        %740 = vst [vmem:[%s287 + $0x30] sm:$0xff] %v728
        %741 = vst [vmem:[%s287 + $0x38] sm:$0xff] %v729
        %742 = vst [vmem:[%s287 + $0x40] sm:$0xff] %v730
        %743 = vst [vmem:[%s287 + $0x48] sm:$0xff] %v731
        %744 = vst [vmem:[%s287 + $0x50] sm:$0xff] %v732
        %745 = vst [vmem:[%s287 + $0x58] sm:$0xff] %v733
        %s746 = smul.u32 3, %s23
        %p747 = scmp.lt.s32.totalorder %s22, 1
        %s748 = scalar_select %p747, %s22, 1
        %p749 = scmp.lt.s32.totalorder %s746, 2
        %s750 = scalar_select %p749, %s746, 2
        %s751 = smul.addr %s748, 12
        %s752 = sadd.s32 %s750, %s751
        %s753 = smul.addr %s752, 8
        %s754 = scalar_lea.vmem %s6, %s753
        // Predicated region
        $region49: #{fsrcnn20_forward.6} parent=43 // pred_check
          %p755 = pneg %p181
        $region50: #{fsrcnn20_forward.6} parent=43 // pred_check_branch
          %757 = sbr.rel (%p755) target = $region52
        $region51: #{fsrcnn20_forward.6} parent=43 // pred_region
          %s758 = smul.u32 3, %s23
        $region52: #{fsrcnn20_forward.6} parent=43 // pred_fallthru
          _
      $region44: #{fsrcnn20_forward.6} parent=5 // pred_fallthru
        _
      %p759 = scmp.le.s32.totalorder 2, %s13
      // Predicated region
      $region53: #{fsrcnn20_forward.6} parent=5 // pred_check
        %p760 = pneg %p759
      $region54: #{fsrcnn20_forward.6} parent=5 // pred_check_branch
        %762 = sbr.rel (%p760) target = $region56
      $region55: #{fsrcnn20_forward.6} parent=5 // pred_region
        %s763 = ssub.s32 %s13, 2
        // Predicated region
        $region57: #{fsrcnn20_forward.6} parent=55 // pred_check
          %p764 = pneg %p187
        $region58: #{fsrcnn20_forward.6} parent=55 // pred_check_branch
          %766 = sbr.rel (%p764) target = $region60
        $region59: #{fsrcnn20_forward.6} parent=55 // pred_region
          %s767 = smul.u32 3, %s25
          %p768 = scmp.lt.s32.totalorder %s24, 1
          %s769 = scalar_select %p768, %s24, 1
          %p770 = scmp.lt.s32.totalorder %s767, 2
          %s771 = scalar_select %p770, %s767, 2
          %s772 = smul.addr %s769, 12
          %s773 = sadd.s32 %s771, %s772
          %s774 = smul.addr %s773, 8
          %s775 = scalar_lea.vmem %s6, %s774
        $region60: #{fsrcnn20_forward.6} parent=55 // pred_fallthru
          _
      $region56: #{fsrcnn20_forward.6} parent=5 // pred_fallthru
        _
    $region6: #{fsrcnn20_forward.6} parent=1 // loop_footer
      %s17 = sadd.s32 1, %s13
    $region7: #{fsrcnn20_forward.6} parent=1 // loop_footer_branch
      %12 = sbr.rel target = $region3
    $region8: #{fsrcnn20_forward.6} parent=1 // loop_exit
      _
    %776 = vsyncpa [#allocation3], 1
    %s777 = scalar_lea.sflag [#allocation3], 1
    %778 = vsyncpa %s777, 1

// kernel: tile.0
$region0: #{tile.0}
  %s0 = inlined_call_operand.vmem [shape: f32[4,4], index: 0, kind: input, shape index: {}]
  %s1 = inlined_call_operand.vmem [shape: f32[16,1], index: 1, kind: output, shape index: {}]
  $region1: #{tile.0} parent=0
    #allocation0 [shape = 'u8[4096]{0}', space=vmem, size = 0x1000, scoped, tag = 'scoped mem for input reshape']
    %s3 = sshllo.u32 0, 4
    %v4 = vld [vmem:[%s0] sm:%s3]
    %5 = vst [vmem:[#allocation0] sm:%s3] %v4
    %v6 = vld [vmem:[#allocation0] sm:$0xf]
    %vm7 = vcmask 7168
    %8 = vst.msk [vmem:[%s1] ss:$4 sm:$0xf] %vm7, %v6
    %v9 = vld [vmem:[#allocation0] sm:$0xf]
    %10 = vrot.lane.b32.xlu0 %v9, 127
    %v11 = vpop.permute.xlu0 %10
    %vm12 = vcmask 7168
    %s13 = scalar_lea.vmem %s1, 1
    %14 = vst.msk [vmem:[%s13] ss:$4 sm:$0xf] %vm12, %v11
    %v15 = vld [vmem:[#allocation0] sm:$0xf]
    %16 = vrot.lane.b32.xlu0 %v15, 126
    %v17 = vpop.permute.xlu0 %16
    %vm18 = vcmask 7168
    %s19 = scalar_lea.vmem %s1, 2
    %20 = vst.msk [vmem:[%s19] ss:$4 sm:$0xf] %vm18, %v17
    %v21 = vld [vmem:[#allocation0] sm:$0xf]
    %22 = vrot.lane.b32.xlu0 %v21, 125
    %v23 = vpop.permute.xlu0 %22
    %vm24 = vcmask 7168
    %s25 = scalar_lea.vmem %s1, 3
    %26 = vst.msk [vmem:[%s25] ss:$4 sm:$0xf] %vm24, %v23

// kernel: tile.16
$region0: #{tile.16}
  #allocation0 [shape = 's32[1]{0}', space=sflag, size = 0x4, scoped, tag = 'scoped memory for tile.16']
  %s0 = inlined_call_operand.<no memory space> [shape: f32[], index: 0, kind: input, shape index: {}]
  %s1 = inlined_call_operand.vmem [shape: f32[4,1], index: 1, kind: output, shape index: {}]
  %v2 = vstv %s0
  %3 = vst [vmem:[%s1] sm:$0xf] %v2

// kernel: fsrcnn20_forward.7
$region0: #{fsrcnn20_forward.7}
  #allocation0 [shape = 'u32[]', space=smem, size = 0x4, offset = 0x4, fixed_abs, tag = 'smem constant byte address 0x4 - core index']
  #allocation1 [shape = 'u32[144,128]{1,0:T(1,128)}', space=vmem, size = 0x12000, scoped, tag = 'internal scratch']
  %s0 = inlined_call_operand.vmem [shape: f32[2,32,468], index: 0, kind: input, shape index: {}]
  %s1 = inlined_call_operand.vmem [shape: bf16[16,800], index: 1, kind: input, shape index: {}]
  %s2 = inlined_call_operand.vmem [shape: f32[16,1], index: 2, kind: input, shape index: {}]
  %s3 = inlined_call_operand.vmem [shape: bf16[4,16], index: 3, kind: input, shape index: {}]
  %s4 = inlined_call_operand.vmem [shape: f32[4,1], index: 4, kind: input, shape index: {}]
  %s5 = inlined_call_operand.vmem [shape: f32[2], index: 5, kind: input, shape index: {}]
  %s6 = inlined_call_operand.vmem [shape: f32[2,4,384], index: 6, kind: output, shape index: {}]
  %s7 = sld [smem:[#allocation0]]
  $region61: #{fsrcnn20_forward.7} parent=0
    _
  %s9 = ssub.s32 1, %s7
  %s10 = scalar_select 0, %s9, %s7
  $region1: #{fsrcnn20_forward.7} parent=0
    #allocation2 [shape = 'u8[512]{0}', space=smem, size = 0x200, scoped, tag = 'input window, operand 5, single buffered']
    #allocation3 [shape = 's32[2]{0}', space=sflag, size = 0x8, scoped, tag = 'scoped memory for fsrcnn20_forward.7']
    %11 = vsyncpa [#allocation3], 0
    loop: start=0, step=1, limit=4
    $region2: #{fsrcnn20_forward.7} parent=1 // loop_pre_header
      _
    $region3: #{fsrcnn20_forward.7} parent=1 // loop_header
      %s13 = sphi 0, %s17
      %p14 = scmp.ge.s32.totalorder %s13, 4
      %s20 = sphi 0, %s32
      %s21 = sphi 0, %s28
      %s22 = sphi 0, %s20
      %s23 = sphi 0, %s21
      %s24 = sphi 0, %s22
      %s25 = sphi 0, %s23
      %s35 = sphi 0, %s37
      %s38 = sphi 0, %s35
      %s39 = sphi 0, %s38
      %s55 = sphi 0, %s39
      %s59 = sphi 0, %s59
      %s61 = sphi 0, %s59
      %s62 = sphi 0, %s61
      %s76 = sphi 0, %s62
      %s80 = sphi 0, %s80
      %s82 = sphi 0, %s80
      %s83 = sphi 0, %s82
      %s97 = sphi 0, %s83
      %s101 = sphi 0, %s101
      %s103 = sphi 0, %s101
      %s104 = sphi 0, %s103
      %s118 = sphi 0, %s104
      %s122 = sphi 0, %s122
      %s124 = sphi 0, %s122
      %s125 = sphi 0, %s124
      %s139 = sphi 0, %s125
      %s143 = sphi 0, %s143
      %s145 = sphi 0, %s143
      %s146 = sphi 0, %s145
      %s160 = sphi 0, %s146
      %s168 = sphi 0, %s170
      %s171 = sphi 0, %s168
      %s172 = sphi 0, %s171
      %s188 = sphi 0, %s172
    $region4: #{fsrcnn20_forward.7} parent=1 // loop_header_branch
      %16 = sbr.rel (%p14) target = $region8
    $region5: #{fsrcnn20_forward.7} parent=1 // loop_body
      %s18 = ssub.s32 %s13, 1
      %s19 = ssub.s32 %s13, 2
      %s26 = sadd.s32 1, %s21
      %p27 = scmp.ge.s32.totalorder %s26, 1
      %s28 = scalar_select %p27, 0, %s26
      %s29 = sadd.s32 1, %s20
      %s30 = scalar_select %p27, %s29, %s20
      %p31 = scmp.ge.s32.totalorder %s30, 2
      %s32 = scalar_select %p31, 0, %s30
      %s33 = ssub.s32 %s20, %s32
      %p34 = scmp.eq.s32.totalorder %s33, 0
      %s36 = sadd.s32 %s35, 1
      %s37 = scalar_select %p34, %s35, %s36
      %p40 = pneg %p34
      %p41 = scmp.eq.s32.totalorder %s13, 1
      %p42 = por %p40, %p41
      %p43 = scmp.ne.s32.totalorder %s35, %s38
      %p44 = scmp.eq.s32.totalorder %s13, 0
      %p45 = por %p43, %p44
      %p46 = scmp.ne.s32.totalorder %s35, %s38
      %p47 = scmp.eq.s32.totalorder %s18, 1
      %p48 = por %p46, %p47
      %p49 = scmp.ne.s32.totalorder %s38, %s39
      %p50 = scmp.eq.s32.totalorder %s18, 0
      %p51 = por %p49, %p50
      %p52 = scmp.ne.s32.totalorder %s38, %s39
      %p53 = scmp.eq.s32.totalorder %s19, 1
      %p54 = por %p52, %p53
      %p56 = scmp.ne.s32.totalorder %s39, %s55
      %p57 = scmp.eq.s32.totalorder %s19, 0
      %p58 = por %p56, %p57
      %s60 = sadd.s32 %s59, 1
      %p63 = scmp.eq.s32.totalorder %s13, 1
      %p64 = scmp.ne.s32.totalorder %s59, %s61
      %p65 = scmp.eq.s32.totalorder %s13, 0
      %p66 = por %p64, %p65
      %p67 = scmp.ne.s32.totalorder %s59, %s61
      %p68 = scmp.eq.s32.totalorder %s18, 1
      %p69 = por %p67, %p68
      %p70 = scmp.ne.s32.totalorder %s61, %s62
      %p71 = scmp.eq.s32.totalorder %s18, 0
      %p72 = por %p70, %p71
      %p73 = scmp.ne.s32.totalorder %s61, %s62
      %p74 = scmp.eq.s32.totalorder %s19, 1
      %p75 = por %p73, %p74
      %p77 = scmp.ne.s32.totalorder %s62, %s76
      %p78 = scmp.eq.s32.totalorder %s19, 0
      %p79 = por %p77, %p78
      %s81 = sadd.s32 %s80, 1
      %p84 = scmp.eq.s32.totalorder %s13, 1
      %p85 = scmp.ne.s32.totalorder %s80, %s82
      %p86 = scmp.eq.s32.totalorder %s13, 0
      %p87 = por %p85, %p86
      %p88 = scmp.ne.s32.totalorder %s80, %s82
      %p89 = scmp.eq.s32.totalorder %s18, 1
      %p90 = por %p88, %p89
      %p91 = scmp.ne.s32.totalorder %s82, %s83
      %p92 = scmp.eq.s32.totalorder %s18, 0
      %p93 = por %p91, %p92
      %p94 = scmp.ne.s32.totalorder %s82, %s83
      %p95 = scmp.eq.s32.totalorder %s19, 1
      %p96 = por %p94, %p95
      %p98 = scmp.ne.s32.totalorder %s83, %s97
      %p99 = scmp.eq.s32.totalorder %s19, 0
      %p100 = por %p98, %p99
      %s102 = sadd.s32 %s101, 1
      %p105 = scmp.eq.s32.totalorder %s13, 1
      %p106 = scmp.ne.s32.totalorder %s101, %s103
      %p107 = scmp.eq.s32.totalorder %s13, 0
      %p108 = por %p106, %p107
      %p109 = scmp.ne.s32.totalorder %s101, %s103
      %p110 = scmp.eq.s32.totalorder %s18, 1
      %p111 = por %p109, %p110
      %p112 = scmp.ne.s32.totalorder %s103, %s104
      %p113 = scmp.eq.s32.totalorder %s18, 0
      %p114 = por %p112, %p113
      %p115 = scmp.ne.s32.totalorder %s103, %s104
      %p116 = scmp.eq.s32.totalorder %s19, 1
      %p117 = por %p115, %p116
      %p119 = scmp.ne.s32.totalorder %s104, %s118
      %p120 = scmp.eq.s32.totalorder %s19, 0
      %p121 = por %p119, %p120
      %s123 = sadd.s32 %s122, 1
      %p126 = scmp.eq.s32.totalorder %s13, 1
      %p127 = scmp.ne.s32.totalorder %s122, %s124
      %p128 = scmp.eq.s32.totalorder %s13, 0
      %p129 = por %p127, %p128
      %p130 = scmp.ne.s32.totalorder %s122, %s124
      %p131 = scmp.eq.s32.totalorder %s18, 1
      %p132 = por %p130, %p131
      %p133 = scmp.ne.s32.totalorder %s124, %s125
      %p134 = scmp.eq.s32.totalorder %s18, 0
      %p135 = por %p133, %p134
      %p136 = scmp.ne.s32.totalorder %s124, %s125
      %p137 = scmp.eq.s32.totalorder %s19, 1
      %p138 = por %p136, %p137
      %p140 = scmp.ne.s32.totalorder %s125, %s139
      %p141 = scmp.eq.s32.totalorder %s19, 0
      %p142 = por %p140, %p141
      %s144 = sadd.s32 %s143, 1
      %p147 = scmp.eq.s32.totalorder %s13, 1
      %p148 = scmp.ne.s32.totalorder %s143, %s145
      %p149 = scmp.eq.s32.totalorder %s13, 0
      %p150 = por %p148, %p149
      %p151 = scmp.ne.s32.totalorder %s143, %s145
      %p152 = scmp.eq.s32.totalorder %s18, 1
      %p153 = por %p151, %p152
      %p154 = scmp.ne.s32.totalorder %s145, %s146
      %p155 = scmp.eq.s32.totalorder %s18, 0
      %p156 = por %p154, %p155
      %p157 = scmp.ne.s32.totalorder %s145, %s146
      %p158 = scmp.eq.s32.totalorder %s19, 1
      %p159 = por %p157, %p158
      %p161 = scmp.ne.s32.totalorder %s146, %s160
      %p162 = scmp.eq.s32.totalorder %s19, 0
      %p163 = por %p161, %p162
      %s164 = ssub.s32 %s20, %s32
      %s165 = ssub.s32 %s21, %s28
      %s166 = sor.u32 %s164, %s165
      %p167 = scmp.eq.s32.totalorder %s166, 0
      %s169 = sadd.s32 %s168, 1
      %s170 = scalar_select %p167, %s168, %s169
      %p173 = pneg %p167
      %p174 = scmp.eq.s32.totalorder %s13, 1
      %p175 = por %p173, %p174
      %p176 = scmp.ne.s32.totalorder %s168, %s171
      %p177 = scmp.eq.s32.totalorder %s13, 0
      %p178 = por %p176, %p177
      %p179 = scmp.ne.s32.totalorder %s168, %s171
      %p180 = scmp.eq.s32.totalorder %s18, 1
      %p181 = por %p179, %p180
      %p182 = scmp.ne.s32.totalorder %s171, %s172
      %p183 = scmp.eq.s32.totalorder %s18, 0
      %p184 = por %p182, %p183
      %p185 = scmp.ne.s32.totalorder %s171, %s172
      %p186 = scmp.eq.s32.totalorder %s19, 1
      %p187 = por %p185, %p186
      %p189 = scmp.ne.s32.totalorder %s172, %s188
      %p190 = scmp.eq.s32.totalorder %s19, 0
      %p191 = por %p189, %p190
      %p192 = scmp.le.s32.totalorder 1, %s13
      %p193 = scmp.lt.s32.totalorder %s13, 3
      %p194 = pnand %p192, %p193
      %p195 = pneg %p194
      // Predicated region
      $region9: #{fsrcnn20_forward.7} parent=5 // pred_check
        _
      $region10: #{fsrcnn20_forward.7} parent=5 // pred_check_branch
        %197 = sbr.rel (%p194) target = $region12
      $region11: #{fsrcnn20_forward.7} parent=5 // pred_region
        %s198 = ssub.s32 %s13, 1
        // Predicated region
        $region13: #{fsrcnn20_forward.7} parent=11 // pred_check
          %p199 = pneg %p72
        $region14: #{fsrcnn20_forward.7} parent=11 // pred_check_branch
          %201 = sbr.rel (%p199) target = $region16
        $region15: #{fsrcnn20_forward.7} parent=11 // pred_region
          _
        $region16: #{fsrcnn20_forward.7} parent=11 // pred_fallthru
          _
        // Predicated region
        $region17: #{fsrcnn20_forward.7} parent=11 // pred_check
          %p202 = pneg %p93
        $region18: #{fsrcnn20_forward.7} parent=11 // pred_check_branch
          %204 = sbr.rel (%p202) target = $region20
        $region19: #{fsrcnn20_forward.7} parent=11 // pred_region
          _
        $region20: #{fsrcnn20_forward.7} parent=11 // pred_fallthru
          _
        // Predicated region
        $region21: #{fsrcnn20_forward.7} parent=11 // pred_check
          %p205 = pneg %p114
        $region22: #{fsrcnn20_forward.7} parent=11 // pred_check_branch
          %207 = sbr.rel (%p205) target = $region24
        $region23: #{fsrcnn20_forward.7} parent=11 // pred_region
          _
        $region24: #{fsrcnn20_forward.7} parent=11 // pred_fallthru
          _
        // Predicated region
        $region25: #{fsrcnn20_forward.7} parent=11 // pred_check
          %p208 = pneg %p135
        $region26: #{fsrcnn20_forward.7} parent=11 // pred_check_branch
          %210 = sbr.rel (%p208) target = $region28
        $region27: #{fsrcnn20_forward.7} parent=11 // pred_region
          _
        $region28: #{fsrcnn20_forward.7} parent=11 // pred_fallthru
          _
        // Predicated region
        $region29: #{fsrcnn20_forward.7} parent=11 // pred_check
          %p211 = pneg %p156
        $region30: #{fsrcnn20_forward.7} parent=11 // pred_check_branch
          %213 = sbr.rel (%p211) target = $region32
        $region31: #{fsrcnn20_forward.7} parent=11 // pred_region
          %s215 = ssub.s32 16, 16
          %216 = vsyncadd [#allocation3], %s215
          %s218 = sshll.u32 %s5, 4
          %s219 = int_to_ptr.vmem [resolvable:$true] %s218
          %221 = dma.vmem_to_smem %s219, 16, [#allocation2], [#allocation3]
        $region32: #{fsrcnn20_forward.7} parent=11 // pred_fallthru
          _
      $region12: #{fsrcnn20_forward.7} parent=5 // pred_fallthru
        _
      %p222 = scmp.lt.s32.totalorder %s13, 2
      // Predicated region
      $region33: #{fsrcnn20_forward.7} parent=5 // pred_check
        %p223 = pneg %p222
      $region34: #{fsrcnn20_forward.7} parent=5 // pred_check_branch
        %225 = sbr.rel (%p223) target = $region36
      $region35: #{fsrcnn20_forward.7} parent=5 // pred_region
        // Predicated region
        $region37: #{fsrcnn20_forward.7} parent=35 // pred_check
          %p226 = pneg %p45
        $region38: #{fsrcnn20_forward.7} parent=35 // pred_check_branch
          %228 = sbr.rel (%p226) target = $region40
        $region39: #{fsrcnn20_forward.7} parent=35 // pred_region
          %p229 = scmp.lt.s32.totalorder %s20, 1
          %s230 = scalar_select %p229, %s20, 1
          %s231 = smul.addr %s230, 16
          %s232 = smul.addr %s231, 8
          %s233 = scalar_lea.vmem %s0, %s232
        $region40: #{fsrcnn20_forward.7} parent=35 // pred_fallthru
          _
      $region36: #{fsrcnn20_forward.7} parent=5 // pred_fallthru
        _
      %p234 = scmp.le.s32.totalorder 1, %s13
      %p235 = scmp.lt.s32.totalorder %s13, 3
      %p236 = pnand %p234, %p235
      %p237 = pneg %p236
      // Predicated region
      $region41: #{fsrcnn20_forward.7} parent=5 // pred_check
        _
      $region42: #{fsrcnn20_forward.7} parent=5 // pred_check_branch
        %239 = sbr.rel (%p236) target = $region44
      $region43: #{fsrcnn20_forward.7} parent=5 // pred_region
        %s240 = ssub.s32 %s13, 1
        // Predicated region
        $region45: #{fsrcnn20_forward.7} parent=43 // pred_check
          %p241 = pneg %p156
        $region46: #{fsrcnn20_forward.7} parent=43 // pred_check_branch
          %243 = sbr.rel (%p241) target = $region48
        $region47: #{fsrcnn20_forward.7} parent=43 // pred_region
          %244 = dma.done [#allocation3], 16
        $region48: #{fsrcnn20_forward.7} parent=43 // pred_fallthru
          _
        %245 = sfence
        %p246 = scmp.lt.s32.totalorder %s22, 1
        %s247 = scalar_select %p246, %s22, 1
        %s248 = smul.addr %s247, 16
        %s249 = smul.addr %s248, 8
        %s250 = scalar_lea.vmem %s0, %s249
        %p251 = pneg %p51
        %p252 = pneg %p48
        %p253 = pneg %p72
        %p254 = pneg %p69
        %p255 = pneg %p93
        %p256 = pneg %p90
        %p257 = pneg %p114
        %p258 = pneg %p111
        %p259 = pneg %p135
        %p260 = pneg %p132
        %p261 = pneg %p156
        %p262 = pneg %p153
        %p263 = pneg %p184
        %p264 = pneg %p181
        %s265 = smul.u32 3, %s23
        %p266 = scmp.lt.s32.totalorder %s22, 1
        %s267 = scalar_select %p266, %s22, 1
        %p268 = scmp.lt.s32.totalorder %s265, 2
        %s269 = scalar_select %p268, %s265, 2
        %s270 = smul.addr %s267, 3
        %s271 = sadd.s32 %s269, %s270
        %s272 = smul.addr %s271, 4
        %s273 = scalar_lea.vmem %s6, %s272
        %p274 = scmp.lt.s32.totalorder %s22, 1
        %s275 = scalar_select %p274, %s22, 1
        %s276 = smul.addr %s275, 16
        %s277 = smul.addr %s276, 8
        %s278 = scalar_lea.vmem %s0, %s277
        %s279 = smul.u32 3, %s23
        %p280 = scmp.lt.s32.totalorder %s22, 1
        %s281 = scalar_select %p280, %s22, 1
        %p282 = scmp.lt.s32.totalorder %s279, 2
        %s283 = scalar_select %p282, %s279, 2
        %s284 = smul.addr %s281, 3
        %s285 = sadd.s32 %s283, %s284
        %s286 = smul.addr %s285, 4
        %s287 = scalar_lea.vmem %s6, %s286
        %s288 = smul.u32 3, %s23
        %v290 = vld [vmem:[%s278] sm:$0xff]
        %v291 = vld [vmem:[%s278 + $0x8] sm:$0xff]
        %v292 = vld [vmem:[%s278 + $0x10] sm:$0xff]
        %v293 = vld [vmem:[%s278 + $0x20] sm:$0xff]
        %v294 = vld [vmem:[%s278 + $0x28] sm:$0xff]
        %v295 = vld [vmem:[%s278 + $0x30] sm:$0xff]
        %v296 = vld [vmem:[%s278 + $0x40] sm:$0xff]
        %v297 = vld [vmem:[%s278 + $0x48] sm:$0xff]
        %v298 = vld [vmem:[%s278 + $0x50] sm:$0xff]
        %v299 = vld [vmem:[%s278 + $0x60] sm:$0xff]
        %v300 = vld [vmem:[%s278 + $0x68] sm:$0xff]
        %v301 = vld [vmem:[%s278 + $0x70] sm:$0xff]
        %v302 = vld [vmem:[%s278 + $0x18] sm:$0xff]
        %v303 = vld [vmem:[%s278 + $0x38] sm:$0xff]
        %v304 = vld [vmem:[%s278 + $0x58] sm:$0xff]
        %v305 = vld [vmem:[%s278 + $0x78] sm:$0xff]
        %322 = vrot.lane.b32.xlu0 %v290, 127
        %v323 = vpop.permute.xlu0 %322
        %324 = vrot.lane.b32.xlu0 %v291, 127
        %v325 = vpop.permute.xlu0 %324
        %326 = vrot.lane.b32.xlu0 %v292, 127
        %v327 = vpop.permute.xlu0 %326
        %328 = vrot.lane.b32.xlu0 %v302, 127
        %v329 = vpop.permute.xlu0 %328
        %330 = vrot.lane.b32.xlu0 %v293, 127
        %v331 = vpop.permute.xlu0 %330
        %332 = vrot.lane.b32.xlu0 %v294, 127
        %v333 = vpop.permute.xlu0 %332
        %334 = vrot.lane.b32.xlu0 %v295, 127
        %v335 = vpop.permute.xlu0 %334
        %336 = vrot.lane.b32.xlu0 %v303, 127
        %v337 = vpop.permute.xlu0 %336
        %338 = vrot.lane.b32.xlu0 %v296, 127
        %v339 = vpop.permute.xlu0 %338
        %340 = vrot.lane.b32.xlu0 %v297, 127
        %v341 = vpop.permute.xlu0 %340
        %342 = vrot.lane.b32.xlu0 %v298, 127
        %v343 = vpop.permute.xlu0 %342
        %344 = vrot.lane.b32.xlu0 %v304, 127
        %v345 = vpop.permute.xlu0 %344
        %346 = vrot.lane.b32.xlu0 %v299, 127
        %v347 = vpop.permute.xlu0 %346
        %348 = vrot.lane.b32.xlu0 %v300, 127
        %v349 = vpop.permute.xlu0 %348
        %350 = vrot.lane.b32.xlu0 %v301, 127
        %v351 = vpop.permute.xlu0 %350
        %352 = vrot.lane.b32.xlu0 %v305, 127
        %v353 = vpop.permute.xlu0 %352
        %vm354 = vcmask 1039360
        %v355 = vsel %vm354, %v323, %v325
        %v356 = vsel %vm354, %v325, %v327
        %v357 = vsel %vm354, %v327, %v329
        %v358 = vsel %vm354, %v331, %v333
        %v359 = vsel %vm354, %v333, %v335
        %v360 = vsel %vm354, %v335, %v337
        %v361 = vsel %vm354, %v339, %v341
        %v362 = vsel %vm354, %v341, %v343
        %v363 = vsel %vm354, %v343, %v345
        %v364 = vsel %vm354, %v347, %v349
        %v365 = vsel %vm354, %v349, %v351
        %v366 = vsel %vm354, %v351, %v353
        %379 = vrot.lane.b32.xlu0 %v290, 126
        %v380 = vpop.permute.xlu0 %379
        %381 = vrot.lane.b32.xlu0 %v291, 126
        %v382 = vpop.permute.xlu0 %381
        %383 = vrot.lane.b32.xlu0 %v292, 126
        %v384 = vpop.permute.xlu0 %383
        %385 = vrot.lane.b32.xlu0 %v302, 126
        %v386 = vpop.permute.xlu0 %385
        %387 = vrot.lane.b32.xlu0 %v293, 126
        %v388 = vpop.permute.xlu0 %387
        %389 = vrot.lane.b32.xlu0 %v294, 126
        %v390 = vpop.permute.xlu0 %389
        %391 = vrot.lane.b32.xlu0 %v295, 126
        %v392 = vpop.permute.xlu0 %391
        %393 = vrot.lane.b32.xlu0 %v303, 126
        %v394 = vpop.permute.xlu0 %393
        %395 = vrot.lane.b32.xlu0 %v296, 126
        %v396 = vpop.permute.xlu0 %395
        %397 = vrot.lane.b32.xlu0 %v297, 126
        %v398 = vpop.permute.xlu0 %397
        %399 = vrot.lane.b32.xlu0 %v298, 126
        %v400 = vpop.permute.xlu0 %399
        %401 = vrot.lane.b32.xlu0 %v304, 126
        %v402 = vpop.permute.xlu0 %401
        %403 = vrot.lane.b32.xlu0 %v299, 126
        %v404 = vpop.permute.xlu0 %403
        %405 = vrot.lane.b32.xlu0 %v300, 126
        %v406 = vpop.permute.xlu0 %405
        %407 = vrot.lane.b32.xlu0 %v301, 126
        %v408 = vpop.permute.xlu0 %407
        %409 = vrot.lane.b32.xlu0 %v305, 126
        %v410 = vpop.permute.xlu0 %409
        %vm411 = vcmask 1031168
        %v412 = vsel %vm411, %v380, %v382
        %v413 = vsel %vm411, %v382, %v384
        %v414 = vsel %vm411, %v384, %v386
        %v415 = vsel %vm411, %v388, %v390
        %v416 = vsel %vm411, %v390, %v392
        %v417 = vsel %vm411, %v392, %v394
        %v418 = vsel %vm411, %v396, %v398
        %v419 = vsel %vm411, %v398, %v400
        %v420 = vsel %vm411, %v400, %v402
        %v421 = vsel %vm411, %v404, %v406
        %v422 = vsel %vm411, %v406, %v408
        %v423 = vsel %vm411, %v408, %v410
        %436 = vrot.lane.b32.xlu0 %v290, 125
        %v437 = vpop.permute.xlu0 %436
        %438 = vrot.lane.b32.xlu0 %v291, 125
        %v439 = vpop.permute.xlu0 %438
        %440 = vrot.lane.b32.xlu0 %v292, 125
        %v441 = vpop.permute.xlu0 %440
        %442 = vrot.lane.b32.xlu0 %v302, 125
        %v443 = vpop.permute.xlu0 %442
        %444 = vrot.lane.b32.xlu0 %v293, 125
        %v445 = vpop.permute.xlu0 %444
        %446 = vrot.lane.b32.xlu0 %v294, 125
        %v447 = vpop.permute.xlu0 %446
        %448 = vrot.lane.b32.xlu0 %v295, 125
        %v449 = vpop.permute.xlu0 %448
        %450 = vrot.lane.b32.xlu0 %v303, 125
        %v451 = vpop.permute.xlu0 %450
        %452 = vrot.lane.b32.xlu0 %v296, 125
        %v453 = vpop.permute.xlu0 %452
        %454 = vrot.lane.b32.xlu0 %v297, 125
        %v455 = vpop.permute.xlu0 %454
        %456 = vrot.lane.b32.xlu0 %v298, 125
        %v457 = vpop.permute.xlu0 %456
        %458 = vrot.lane.b32.xlu0 %v304, 125
        %v459 = vpop.permute.xlu0 %458
        %460 = vrot.lane.b32.xlu0 %v299, 125
        %v461 = vpop.permute.xlu0 %460
        %462 = vrot.lane.b32.xlu0 %v300, 125
        %v463 = vpop.permute.xlu0 %462
        %464 = vrot.lane.b32.xlu0 %v301, 125
        %v465 = vpop.permute.xlu0 %464
        %466 = vrot.lane.b32.xlu0 %v305, 125
        %v467 = vpop.permute.xlu0 %466
        %vm468 = vcmask 1022976
        %v469 = vsel %vm468, %v437, %v439
        %v470 = vsel %vm468, %v439, %v441
        %v471 = vsel %vm468, %v441, %v443
        %v472 = vsel %vm468, %v445, %v447
        %v473 = vsel %vm468, %v447, %v449
        %v474 = vsel %vm468, %v449, %v451
        %v475 = vsel %vm468, %v453, %v455
        %v476 = vsel %vm468, %v455, %v457
        %v477 = vsel %vm468, %v457, %v459
        %v478 = vsel %vm468, %v461, %v463
        %v479 = vsel %vm468, %v463, %v465
        %v480 = vsel %vm468, %v465, %v467
        %493 = vrot.lane.b32.xlu0 %v290, 124
        %v494 = vpop.permute.xlu0 %493
        %495 = vrot.lane.b32.xlu0 %v291, 124
        %v496 = vpop.permute.xlu0 %495
        %497 = vrot.lane.b32.xlu0 %v292, 124
        %v498 = vpop.permute.xlu0 %497
        %499 = vrot.lane.b32.xlu0 %v302, 124
        %v500 = vpop.permute.xlu0 %499
        %501 = vrot.lane.b32.xlu0 %v293, 124
        %v502 = vpop.permute.xlu0 %501
        %503 = vrot.lane.b32.xlu0 %v294, 124
        %v504 = vpop.permute.xlu0 %503
        %505 = vrot.lane.b32.xlu0 %v295, 124
        %v506 = vpop.permute.xlu0 %505
        %507 = vrot.lane.b32.xlu0 %v303, 124
        %v508 = vpop.permute.xlu0 %507
        %509 = vrot.lane.b32.xlu0 %v296, 124
        %v510 = vpop.permute.xlu0 %509
        %511 = vrot.lane.b32.xlu0 %v297, 124
        %v512 = vpop.permute.xlu0 %511
        %513 = vrot.lane.b32.xlu0 %v298, 124
        %v514 = vpop.permute.xlu0 %513
        %515 = vrot.lane.b32.xlu0 %v304, 124
        %v516 = vpop.permute.xlu0 %515
        %517 = vrot.lane.b32.xlu0 %v299, 124
        %v518 = vpop.permute.xlu0 %517
        %519 = vrot.lane.b32.xlu0 %v300, 124
        %v520 = vpop.permute.xlu0 %519
        %521 = vrot.lane.b32.xlu0 %v301, 124
        %v522 = vpop.permute.xlu0 %521
        %523 = vrot.lane.b32.xlu0 %v305, 124
        %v524 = vpop.permute.xlu0 %523
        %vm525 = vcmask 1014784
        %v526 = vsel %vm525, %v494, %v496
        %v527 = vsel %vm525, %v496, %v498
        %v528 = vsel %vm525, %v498, %v500
        %v529 = vsel %vm525, %v502, %v504
        %v530 = vsel %vm525, %v504, %v506
        %v531 = vsel %vm525, %v506, %v508
        %v532 = vsel %vm525, %v510, %v512
        %v533 = vsel %vm525, %v512, %v514
        %v534 = vsel %vm525, %v514, %v516
        %v535 = vsel %vm525, %v518, %v520
        %v536 = vsel %vm525, %v520, %v522
        %v537 = vsel %vm525, %v522, %v524
        %550 = vrot.lane.b32.xlu0 %v290, 108
        %v551 = vpop.permute.xlu0 %550
        %552 = vrot.lane.b32.xlu0 %v291, 108
        %v553 = vpop.permute.xlu0 %552
        %554 = vrot.lane.b32.xlu0 %v292, 108
        %v555 = vpop.permute.xlu0 %554
        %556 = vrot.lane.b32.xlu0 %v302, 108
        %v557 = vpop.permute.xlu0 %556
        %558 = vrot.lane.b32.xlu0 %v293, 108
        %v559 = vpop.permute.xlu0 %558
        %560 = vrot.lane.b32.xlu0 %v294, 108
        %v561 = vpop.permute.xlu0 %560
        %562 = vrot.lane.b32.xlu0 %v295, 108
        %v563 = vpop.permute.xlu0 %562
        %564 = vrot.lane.b32.xlu0 %v303, 108
        %v565 = vpop.permute.xlu0 %564
        %566 = vrot.lane.b32.xlu0 %v296, 108
        %v567 = vpop.permute.xlu0 %566
        %568 = vrot.lane.b32.xlu0 %v297, 108
        %v569 = vpop.permute.xlu0 %568
        %570 = vrot.lane.b32.xlu0 %v298, 108
        %v571 = vpop.permute.xlu0 %570
        %572 = vrot.lane.b32.xlu0 %v304, 108
        %v573 = vpop.permute.xlu0 %572
        %574 = vrot.lane.b32.xlu0 %v299, 108
        %v575 = vpop.permute.xlu0 %574
        %576 = vrot.lane.b32.xlu0 %v300, 108
        %v577 = vpop.permute.xlu0 %576
        %578 = vrot.lane.b32.xlu0 %v301, 108
        %v579 = vpop.permute.xlu0 %578
        %580 = vrot.lane.b32.xlu0 %v305, 108
        %v581 = vpop.permute.xlu0 %580
        %vm582 = vcmask 883712
        %v583 = vsel %vm582, %v551, %v553
        %v584 = vsel %vm582, %v553, %v555
        %v585 = vsel %vm582, %v555, %v557
        %v586 = vsel %vm582, %v559, %v561
        %v587 = vsel %vm582, %v561, %v563
        %v588 = vsel %vm582, %v563, %v565
        %v589 = vsel %vm582, %v567, %v569
        %v590 = vsel %vm582, %v569, %v571
        %v591 = vsel %vm582, %v571, %v573
        %v592 = vsel %vm582, %v575, %v577
        %v593 = vsel %vm582, %v577, %v579
        %v594 = vsel %vm582, %v579, %v581
        %607 = vrot.lane.b32.xlu0 %v290, 107
        %v608 = vpop.permute.xlu0 %607
        %609 = vrot.lane.b32.xlu0 %v291, 107
        %v610 = vpop.permute.xlu0 %609
        %611 = vrot.lane.b32.xlu0 %v292, 107
        %v612 = vpop.permute.xlu0 %611
        %613 = vrot.lane.b32.xlu0 %v302, 107
        %v614 = vpop.permute.xlu0 %613
        %615 = vrot.lane.b32.xlu0 %v293, 107
        %v616 = vpop.permute.xlu0 %615
        %617 = vrot.lane.b32.xlu0 %v294, 107
        %v618 = vpop.permute.xlu0 %617
        %619 = vrot.lane.b32.xlu0 %v295, 107
        %v620 = vpop.permute.xlu0 %619
        %621 = vrot.lane.b32.xlu0 %v303, 107
        %v622 = vpop.permute.xlu0 %621
        %623 = vrot.lane.b32.xlu0 %v296, 107
        %v624 = vpop.permute.xlu0 %623
        %625 = vrot.lane.b32.xlu0 %v297, 107
        %v626 = vpop.permute.xlu0 %625
        %627 = vrot.lane.b32.xlu0 %v298, 107
        %v628 = vpop.permute.xlu0 %627
        %629 = vrot.lane.b32.xlu0 %v304, 107
        %v630 = vpop.permute.xlu0 %629
        %631 = vrot.lane.b32.xlu0 %v299, 107
        %v632 = vpop.permute.xlu0 %631
        %633 = vrot.lane.b32.xlu0 %v300, 107
        %v634 = vpop.permute.xlu0 %633
        %635 = vrot.lane.b32.xlu0 %v301, 107
        %v636 = vpop.permute.xlu0 %635
        %637 = vrot.lane.b32.xlu0 %v305, 107
        %v638 = vpop.permute.xlu0 %637
        %vm639 = vcmask 875520
        %v640 = vsel %vm639, %v608, %v610
        %v641 = vsel %vm639, %v610, %v612
        %v642 = vsel %vm639, %v612, %v614
        %v643 = vsel %vm639, %v616, %v618
        %v644 = vsel %vm639, %v618, %v620
        %v645 = vsel %vm639, %v620, %v622
        %v646 = vsel %vm639, %v624, %v626
        %v647 = vsel %vm639, %v626, %v628
        %v648 = vsel %vm639, %v628, %v630
        %v649 = vsel %vm639, %v632, %v634
        %v650 = vsel %vm639, %v634, %v636
        %v651 = vsel %vm639, %v636, %v638
        %664 = vrot.lane.b32.xlu0 %v290, 106
        %v665 = vpop.permute.xlu0 %664
        %666 = vrot.lane.b32.xlu0 %v291, 106
        %v667 = vpop.permute.xlu0 %666
        %668 = vrot.lane.b32.xlu0 %v292, 106
        %v669 = vpop.permute.xlu0 %668
        %670 = vrot.lane.b32.xlu0 %v302, 106
        %v671 = vpop.permute.xlu0 %670
        %672 = vrot.lane.b32.xlu0 %v293, 106
        %v673 = vpop.permute.xlu0 %672
        %674 = vrot.lane.b32.xlu0 %v294, 106
        %v675 = vpop.permute.xlu0 %674
        %676 = vrot.lane.b32.xlu0 %v295, 106
        %v677 = vpop.permute.xlu0 %676
        %678 = vrot.lane.b32.xlu0 %v303, 106
        %v679 = vpop.permute.xlu0 %678
        %680 = vrot.lane.b32.xlu0 %v296, 106
        %v681 = vpop.permute.xlu0 %680
        %682 = vrot.lane.b32.xlu0 %v297, 106
        %v683 = vpop.permute.xlu0 %682
        %684 = vrot.lane.b32.xlu0 %v298, 106
        %v685 = vpop.permute.xlu0 %684
        %686 = vrot.lane.b32.xlu0 %v304, 106
        %v687 = vpop.permute.xlu0 %686
        %688 = vrot.lane.b32.xlu0 %v299, 106
        %v689 = vpop.permute.xlu0 %688
        %690 = vrot.lane.b32.xlu0 %v300, 106
        %v691 = vpop.permute.xlu0 %690
        %692 = vrot.lane.b32.xlu0 %v301, 106
        %v693 = vpop.permute.xlu0 %692
        %694 = vrot.lane.b32.xlu0 %v305, 106
        %v695 = vpop.permute.xlu0 %694
        %vm696 = vcmask 867328
        %v697 = vsel %vm696, %v665, %v667
        %v698 = vsel %vm696, %v667, %v669
        %v699 = vsel %vm696, %v669, %v671
        %v700 = vsel %vm696, %v673, %v675
        %v701 = vsel %vm696, %v675, %v677
        %v702 = vsel %vm696, %v677, %v679
        %v703 = vsel %vm696, %v681, %v683
        %v704 = vsel %vm696, %v683, %v685
        %v705 = vsel %vm696, %v685, %v687
        %v706 = vsel %vm696, %v689, %v691
        %v707 = vsel %vm696, %v691, %v693
        %v708 = vsel %vm696, %v693, %v695
        %721 = vrot.lane.b32.xlu0 %v290, 105
        %v722 = vpop.permute.xlu0 %721
        %723 = vrot.lane.b32.xlu0 %v291, 105
        %v724 = vpop.permute.xlu0 %723
        %725 = vrot.lane.b32.xlu0 %v292, 105
        %v726 = vpop.permute.xlu0 %725
        %727 = vrot.lane.b32.xlu0 %v302, 105
        %v728 = vpop.permute.xlu0 %727
        %729 = vrot.lane.b32.xlu0 %v293, 105
        %v730 = vpop.permute.xlu0 %729
        %731 = vrot.lane.b32.xlu0 %v294, 105
        %v732 = vpop.permute.xlu0 %731
        %733 = vrot.lane.b32.xlu0 %v295, 105
        %v734 = vpop.permute.xlu0 %733
        %735 = vrot.lane.b32.xlu0 %v303, 105
        %v736 = vpop.permute.xlu0 %735
        %737 = vrot.lane.b32.xlu0 %v296, 105
        %v738 = vpop.permute.xlu0 %737
        %739 = vrot.lane.b32.xlu0 %v297, 105
        %v740 = vpop.permute.xlu0 %739
        %741 = vrot.lane.b32.xlu0 %v298, 105
        %v742 = vpop.permute.xlu0 %741
        %743 = vrot.lane.b32.xlu0 %v304, 105
        %v744 = vpop.permute.xlu0 %743
        %745 = vrot.lane.b32.xlu0 %v299, 105
        %v746 = vpop.permute.xlu0 %745
        %747 = vrot.lane.b32.xlu0 %v300, 105
        %v748 = vpop.permute.xlu0 %747
        %749 = vrot.lane.b32.xlu0 %v301, 105
        %v750 = vpop.permute.xlu0 %749
        %751 = vrot.lane.b32.xlu0 %v305, 105
        %v752 = vpop.permute.xlu0 %751
        %vm753 = vcmask 859136
        %v754 = vsel %vm753, %v722, %v724
        %v755 = vsel %vm753, %v724, %v726
        %v756 = vsel %vm753, %v726, %v728
        %v757 = vsel %vm753, %v730, %v732
        %v758 = vsel %vm753, %v732, %v734
        %v759 = vsel %vm753, %v734, %v736
        %v760 = vsel %vm753, %v738, %v740
        %v761 = vsel %vm753, %v740, %v742
        %v762 = vsel %vm753, %v742, %v744
        %v763 = vsel %vm753, %v746, %v748
        %v764 = vsel %vm753, %v748, %v750
        %v765 = vsel %vm753, %v750, %v752
        %778 = vrot.lane.b32.xlu0 %v290, 104
        %v779 = vpop.permute.xlu0 %778
        %780 = vrot.lane.b32.xlu0 %v291, 104
        %v781 = vpop.permute.xlu0 %780
        %782 = vrot.lane.b32.xlu0 %v292, 104
        %v783 = vpop.permute.xlu0 %782
        %784 = vrot.lane.b32.xlu0 %v302, 104
        %v785 = vpop.permute.xlu0 %784
        %786 = vrot.lane.b32.xlu0 %v293, 104
        %v787 = vpop.permute.xlu0 %786
        %788 = vrot.lane.b32.xlu0 %v294, 104
        %v789 = vpop.permute.xlu0 %788
        %790 = vrot.lane.b32.xlu0 %v295, 104
        %v791 = vpop.permute.xlu0 %790
        %792 = vrot.lane.b32.xlu0 %v303, 104
        %v793 = vpop.permute.xlu0 %792
        %794 = vrot.lane.b32.xlu0 %v296, 104
        %v795 = vpop.permute.xlu0 %794
        %796 = vrot.lane.b32.xlu0 %v297, 104
        %v797 = vpop.permute.xlu0 %796
        %798 = vrot.lane.b32.xlu0 %v298, 104
        %v799 = vpop.permute.xlu0 %798
        %800 = vrot.lane.b32.xlu0 %v304, 104
        %v801 = vpop.permute.xlu0 %800
        %802 = vrot.lane.b32.xlu0 %v299, 104
        %v803 = vpop.permute.xlu0 %802
        %804 = vrot.lane.b32.xlu0 %v300, 104
        %v805 = vpop.permute.xlu0 %804
        %806 = vrot.lane.b32.xlu0 %v301, 104
        %v807 = vpop.permute.xlu0 %806
        %808 = vrot.lane.b32.xlu0 %v305, 104
        %v809 = vpop.permute.xlu0 %808
        %vm810 = vcmask 850944
        %v811 = vsel %vm810, %v779, %v781
        %v812 = vsel %vm810, %v781, %v783
        %v813 = vsel %vm810, %v783, %v785
        %v814 = vsel %vm810, %v787, %v789
        %v815 = vsel %vm810, %v789, %v791
        %v816 = vsel %vm810, %v791, %v793
        %v817 = vsel %vm810, %v795, %v797
        %v818 = vsel %vm810, %v797, %v799
        %v819 = vsel %vm810, %v799, %v801
        %v820 = vsel %vm810, %v803, %v805
        %v821 = vsel %vm810, %v805, %v807
        %v822 = vsel %vm810, %v807, %v809
        %835 = vrot.lane.b32.xlu0 %v290, 88
        %v836 = vpop.permute.xlu0 %835
        %837 = vrot.lane.b32.xlu0 %v291, 88
        %v838 = vpop.permute.xlu0 %837
        %839 = vrot.lane.b32.xlu0 %v292, 88
        %v840 = vpop.permute.xlu0 %839
        %841 = vrot.lane.b32.xlu0 %v302, 88
        %v842 = vpop.permute.xlu0 %841
        %843 = vrot.lane.b32.xlu0 %v293, 88
        %v844 = vpop.permute.xlu0 %843
        %845 = vrot.lane.b32.xlu0 %v294, 88
        %v846 = vpop.permute.xlu0 %845
        %847 = vrot.lane.b32.xlu0 %v295, 88
        %v848 = vpop.permute.xlu0 %847
        %849 = vrot.lane.b32.xlu0 %v303, 88
        %v850 = vpop.permute.xlu0 %849
        %851 = vrot.lane.b32.xlu0 %v296, 88
        %v852 = vpop.permute.xlu0 %851
        %853 = vrot.lane.b32.xlu0 %v297, 88
        %v854 = vpop.permute.xlu0 %853
        %855 = vrot.lane.b32.xlu0 %v298, 88
        %v856 = vpop.permute.xlu0 %855
        %857 = vrot.lane.b32.xlu0 %v304, 88
        %v858 = vpop.permute.xlu0 %857
        %859 = vrot.lane.b32.xlu0 %v299, 88
        %v860 = vpop.permute.xlu0 %859
        %861 = vrot.lane.b32.xlu0 %v300, 88
        %v862 = vpop.permute.xlu0 %861
        %863 = vrot.lane.b32.xlu0 %v301, 88
        %v864 = vpop.permute.xlu0 %863
        %865 = vrot.lane.b32.xlu0 %v305, 88
        %v866 = vpop.permute.xlu0 %865
        %vm867 = vcmask 719872
        %v868 = vsel %vm867, %v836, %v838
        %v869 = vsel %vm867, %v838, %v840
        %v870 = vsel %vm867, %v840, %v842
        %v871 = vsel %vm867, %v844, %v846
        %v872 = vsel %vm867, %v846, %v848
        %v873 = vsel %vm867, %v848, %v850
        %v874 = vsel %vm867, %v852, %v854
        %v875 = vsel %vm867, %v854, %v856
        %v876 = vsel %vm867, %v856, %v858
        %v877 = vsel %vm867, %v860, %v862
        %v878 = vsel %vm867, %v862, %v864
        %v879 = vsel %vm867, %v864, %v866
        %892 = vrot.lane.b32.xlu0 %v290, 87
        %v893 = vpop.permute.xlu0 %892
        %894 = vrot.lane.b32.xlu0 %v291, 87
        %v895 = vpop.permute.xlu0 %894
        %896 = vrot.lane.b32.xlu0 %v292, 87
        %v897 = vpop.permute.xlu0 %896
        %898 = vrot.lane.b32.xlu0 %v302, 87
        %v899 = vpop.permute.xlu0 %898
        %900 = vrot.lane.b32.xlu0 %v293, 87
        %v901 = vpop.permute.xlu0 %900
        %902 = vrot.lane.b32.xlu0 %v294, 87
        %v903 = vpop.permute.xlu0 %902
        %904 = vrot.lane.b32.xlu0 %v295, 87
        %v905 = vpop.permute.xlu0 %904
        %906 = vrot.lane.b32.xlu0 %v303, 87
        %v907 = vpop.permute.xlu0 %906
        %908 = vrot.lane.b32.xlu0 %v296, 87
        %v909 = vpop.permute.xlu0 %908
        %910 = vrot.lane.b32.xlu0 %v297, 87
        %v911 = vpop.permute.xlu0 %910
        %912 = vrot.lane.b32.xlu0 %v298, 87
        %v913 = vpop.permute.xlu0 %912
        %914 = vrot.lane.b32.xlu0 %v304, 87
        %v915 = vpop.permute.xlu0 %914
        %916 = vrot.lane.b32.xlu0 %v299, 87
        %v917 = vpop.permute.xlu0 %916
        %918 = vrot.lane.b32.xlu0 %v300, 87
        %v919 = vpop.permute.xlu0 %918
        %920 = vrot.lane.b32.xlu0 %v301, 87
        %v921 = vpop.permute.xlu0 %920
        %922 = vrot.lane.b32.xlu0 %v305, 87
        %v923 = vpop.permute.xlu0 %922
        %vm924 = vcmask 711680
        %v925 = vsel %vm924, %v893, %v895
        %v926 = vsel %vm924, %v895, %v897
        %v927 = vsel %vm924, %v897, %v899
        %v928 = vsel %vm924, %v901, %v903
        %v929 = vsel %vm924, %v903, %v905
        %v930 = vsel %vm924, %v905, %v907
        %v931 = vsel %vm924, %v909, %v911
        %v932 = vsel %vm924, %v911, %v913
        %v933 = vsel %vm924, %v913, %v915
        %v934 = vsel %vm924, %v917, %v919
        %v935 = vsel %vm924, %v919, %v921
        %v936 = vsel %vm924, %v921, %v923
        %949 = vrot.lane.b32.xlu0 %v290, 86
        %v950 = vpop.permute.xlu0 %949
        %951 = vrot.lane.b32.xlu0 %v291, 86
        %v952 = vpop.permute.xlu0 %951
        %953 = vrot.lane.b32.xlu0 %v292, 86
        %v954 = vpop.permute.xlu0 %953
        %955 = vrot.lane.b32.xlu0 %v302, 86
        %v956 = vpop.permute.xlu0 %955
        %957 = vrot.lane.b32.xlu0 %v293, 86
        %v958 = vpop.permute.xlu0 %957
        %959 = vrot.lane.b32.xlu0 %v294, 86
        %v960 = vpop.permute.xlu0 %959
        %961 = vrot.lane.b32.xlu0 %v295, 86
        %v962 = vpop.permute.xlu0 %961
        %963 = vrot.lane.b32.xlu0 %v303, 86
        %v964 = vpop.permute.xlu0 %963
        %965 = vrot.lane.b32.xlu0 %v296, 86
        %v966 = vpop.permute.xlu0 %965
        %967 = vrot.lane.b32.xlu0 %v297, 86
        %v968 = vpop.permute.xlu0 %967
        %969 = vrot.lane.b32.xlu0 %v298, 86
        %v970 = vpop.permute.xlu0 %969
        %971 = vrot.lane.b32.xlu0 %v304, 86
        %v972 = vpop.permute.xlu0 %971
        %973 = vrot.lane.b32.xlu0 %v299, 86
        %v974 = vpop.permute.xlu0 %973
        %975 = vrot.lane.b32.xlu0 %v300, 86
        %v976 = vpop.permute.xlu0 %975
        %977 = vrot.lane.b32.xlu0 %v301, 86
        %v978 = vpop.permute.xlu0 %977
        %979 = vrot.lane.b32.xlu0 %v305, 86
        %v980 = vpop.permute.xlu0 %979
        %vm981 = vcmask 703488
        %v982 = vsel %vm981, %v950, %v952
        %v983 = vsel %vm981, %v952, %v954
        %v984 = vsel %vm981, %v954, %v956
        %v985 = vsel %vm981, %v958, %v960
        %v986 = vsel %vm981, %v960, %v962
        %v987 = vsel %vm981, %v962, %v964
        %v988 = vsel %vm981, %v966, %v968
        %v989 = vsel %vm981, %v968, %v970
        %v990 = vsel %vm981, %v970, %v972
        %v991 = vsel %vm981, %v974, %v976
        %v992 = vsel %vm981, %v976, %v978
        %v993 = vsel %vm981, %v978, %v980
        %1006 = vrot.lane.b32.xlu0 %v290, 85
        %v1007 = vpop.permute.xlu0 %1006
        %1008 = vrot.lane.b32.xlu0 %v291, 85
        %v1009 = vpop.permute.xlu0 %1008
        %1010 = vrot.lane.b32.xlu0 %v292, 85
        %v1011 = vpop.permute.xlu0 %1010
        %1012 = vrot.lane.b32.xlu0 %v302, 85
        %v1013 = vpop.permute.xlu0 %1012
        %1014 = vrot.lane.b32.xlu0 %v293, 85
        %v1015 = vpop.permute.xlu0 %1014
        %1016 = vrot.lane.b32.xlu0 %v294, 85
        %v1017 = vpop.permute.xlu0 %1016
        %1018 = vrot.lane.b32.xlu0 %v295, 85
        %v1019 = vpop.permute.xlu0 %1018
        %1020 = vrot.lane.b32.xlu0 %v303, 85
        %v1021 = vpop.permute.xlu0 %1020
        %1022 = vrot.lane.b32.xlu0 %v296, 85
        %v1023 = vpop.permute.xlu0 %1022
        %1024 = vrot.lane.b32.xlu0 %v297, 85
        %v1025 = vpop.permute.xlu0 %1024
        %1026 = vrot.lane.b32.xlu0 %v298, 85
        %v1027 = vpop.permute.xlu0 %1026
        %1028 = vrot.lane.b32.xlu0 %v304, 85
        %v1029 = vpop.permute.xlu0 %1028
        %1030 = vrot.lane.b32.xlu0 %v299, 85
        %v1031 = vpop.permute.xlu0 %1030
        %1032 = vrot.lane.b32.xlu0 %v300, 85
        %v1033 = vpop.permute.xlu0 %1032
        %1034 = vrot.lane.b32.xlu0 %v301, 85
        %v1035 = vpop.permute.xlu0 %1034
        %1036 = vrot.lane.b32.xlu0 %v305, 85
        %v1037 = vpop.permute.xlu0 %1036
        %vm1038 = vcmask 695296
        %v1039 = vsel %vm1038, %v1007, %v1009
        %v1040 = vsel %vm1038, %v1009, %v1011
        %v1041 = vsel %vm1038, %v1011, %v1013
        %v1042 = vsel %vm1038, %v1015, %v1017
        %v1043 = vsel %vm1038, %v1017, %v1019
        %v1044 = vsel %vm1038, %v1019, %v1021
        %v1045 = vsel %vm1038, %v1023, %v1025
        %v1046 = vsel %vm1038, %v1025, %v1027
        %v1047 = vsel %vm1038, %v1027, %v1029
        %v1048 = vsel %vm1038, %v1031, %v1033
        %v1049 = vsel %vm1038, %v1033, %v1035
        %v1050 = vsel %vm1038, %v1035, %v1037
        %1063 = vrot.lane.b32.xlu0 %v290, 84
        %v1064 = vpop.permute.xlu0 %1063
        %1065 = vrot.lane.b32.xlu0 %v291, 84
        %v1066 = vpop.permute.xlu0 %1065
        %1067 = vrot.lane.b32.xlu0 %v292, 84
        %v1068 = vpop.permute.xlu0 %1067
        %1069 = vrot.lane.b32.xlu0 %v302, 84
        %v1070 = vpop.permute.xlu0 %1069
        %1071 = vrot.lane.b32.xlu0 %v293, 84
        %v1072 = vpop.permute.xlu0 %1071
        %1073 = vrot.lane.b32.xlu0 %v294, 84
        %v1074 = vpop.permute.xlu0 %1073
        %1075 = vrot.lane.b32.xlu0 %v295, 84
        %v1076 = vpop.permute.xlu0 %1075
        %1077 = vrot.lane.b32.xlu0 %v303, 84
        %v1078 = vpop.permute.xlu0 %1077
        %1079 = vrot.lane.b32.xlu0 %v296, 84
        %v1080 = vpop.permute.xlu0 %1079
        %1081 = vrot.lane.b32.xlu0 %v297, 84
        %v1082 = vpop.permute.xlu0 %1081
        %1083 = vrot.lane.b32.xlu0 %v298, 84
        %v1084 = vpop.permute.xlu0 %1083
        %1085 = vrot.lane.b32.xlu0 %v304, 84
        %v1086 = vpop.permute.xlu0 %1085
        %1087 = vrot.lane.b32.xlu0 %v299, 84
        %v1088 = vpop.permute.xlu0 %1087
        %1089 = vrot.lane.b32.xlu0 %v300, 84
        %v1090 = vpop.permute.xlu0 %1089
        %1091 = vrot.lane.b32.xlu0 %v301, 84
        %v1092 = vpop.permute.xlu0 %1091
        %1093 = vrot.lane.b32.xlu0 %v305, 84
        %v1094 = vpop.permute.xlu0 %1093
        %vm1095 = vcmask 687104
        %v1096 = vsel %vm1095, %v1064, %v1066
        %v1097 = vsel %vm1095, %v1066, %v1068
        %v1098 = vsel %vm1095, %v1068, %v1070
        %v1099 = vsel %vm1095, %v1072, %v1074
        %v1100 = vsel %vm1095, %v1074, %v1076
        %v1101 = vsel %vm1095, %v1076, %v1078
        %v1102 = vsel %vm1095, %v1080, %v1082
        %v1103 = vsel %vm1095, %v1082, %v1084
        %v1104 = vsel %vm1095, %v1084, %v1086
        %v1105 = vsel %vm1095, %v1088, %v1090
        %v1106 = vsel %vm1095, %v1090, %v1092
        %v1107 = vsel %vm1095, %v1092, %v1094
        %1120 = vrot.lane.b32.xlu0 %v290, 68
        %v1121 = vpop.permute.xlu0 %1120
        %1122 = vrot.lane.b32.xlu0 %v291, 68
        %v1123 = vpop.permute.xlu0 %1122
        %1124 = vrot.lane.b32.xlu0 %v292, 68
        %v1125 = vpop.permute.xlu0 %1124
        %1126 = vrot.lane.b32.xlu0 %v302, 68
        %v1127 = vpop.permute.xlu0 %1126
        %1128 = vrot.lane.b32.xlu0 %v293, 68
        %v1129 = vpop.permute.xlu0 %1128
        %1130 = vrot.lane.b32.xlu0 %v294, 68
        %v1131 = vpop.permute.xlu0 %1130
        %1132 = vrot.lane.b32.xlu0 %v295, 68
        %v1133 = vpop.permute.xlu0 %1132
        %1134 = vrot.lane.b32.xlu0 %v303, 68
        %v1135 = vpop.permute.xlu0 %1134
        %1136 = vrot.lane.b32.xlu0 %v296, 68
        %v1137 = vpop.permute.xlu0 %1136
        %1138 = vrot.lane.b32.xlu0 %v297, 68
        %v1139 = vpop.permute.xlu0 %1138
        %1140 = vrot.lane.b32.xlu0 %v298, 68
        %v1141 = vpop.permute.xlu0 %1140
        %1142 = vrot.lane.b32.xlu0 %v304, 68
        %v1143 = vpop.permute.xlu0 %1142
        %1144 = vrot.lane.b32.xlu0 %v299, 68
        %v1145 = vpop.permute.xlu0 %1144
        %1146 = vrot.lane.b32.xlu0 %v300, 68
        %v1147 = vpop.permute.xlu0 %1146
        %1148 = vrot.lane.b32.xlu0 %v301, 68
        %v1149 = vpop.permute.xlu0 %1148
        %1150 = vrot.lane.b32.xlu0 %v305, 68
        %v1151 = vpop.permute.xlu0 %1150
        %vm1152 = vcmask 556032
        %v1153 = vsel %vm1152, %v1121, %v1123
        %v1154 = vsel %vm1152, %v1123, %v1125
        %v1155 = vsel %vm1152, %v1125, %v1127
        %v1156 = vsel %vm1152, %v1129, %v1131
        %v1157 = vsel %vm1152, %v1131, %v1133
        %v1158 = vsel %vm1152, %v1133, %v1135
        %v1159 = vsel %vm1152, %v1137, %v1139
        %v1160 = vsel %vm1152, %v1139, %v1141
        %v1161 = vsel %vm1152, %v1141, %v1143
        %v1162 = vsel %vm1152, %v1145, %v1147
        %v1163 = vsel %vm1152, %v1147, %v1149
        %v1164 = vsel %vm1152, %v1149, %v1151
        %1177 = vrot.lane.b32.xlu0 %v290, 109
        %v1178 = vpop.permute.xlu0 %1177
        %1179 = vrot.lane.b32.xlu0 %v291, 109
        %v1180 = vpop.permute.xlu0 %1179
        %1181 = vrot.lane.b32.xlu0 %v292, 109
        %v1182 = vpop.permute.xlu0 %1181
        %1183 = vrot.lane.b32.xlu0 %v302, 109
        %v1184 = vpop.permute.xlu0 %1183
        %1185 = vrot.lane.b32.xlu0 %v293, 109
        %v1186 = vpop.permute.xlu0 %1185
        %1187 = vrot.lane.b32.xlu0 %v294, 109
        %v1188 = vpop.permute.xlu0 %1187
        %1189 = vrot.lane.b32.xlu0 %v295, 109
        %v1190 = vpop.permute.xlu0 %1189
        %1191 = vrot.lane.b32.xlu0 %v303, 109
        %v1192 = vpop.permute.xlu0 %1191
        %1193 = vrot.lane.b32.xlu0 %v296, 109
        %v1194 = vpop.permute.xlu0 %1193
        %1195 = vrot.lane.b32.xlu0 %v297, 109
        %v1196 = vpop.permute.xlu0 %1195
        %1197 = vrot.lane.b32.xlu0 %v298, 109
        %v1198 = vpop.permute.xlu0 %1197
        %1199 = vrot.lane.b32.xlu0 %v304, 109
        %v1200 = vpop.permute.xlu0 %1199
        %1201 = vrot.lane.b32.xlu0 %v299, 109
        %v1202 = vpop.permute.xlu0 %1201
        %1203 = vrot.lane.b32.xlu0 %v300, 109
        %v1204 = vpop.permute.xlu0 %1203
        %1205 = vrot.lane.b32.xlu0 %v301, 109
        %v1206 = vpop.permute.xlu0 %1205
        %1207 = vrot.lane.b32.xlu0 %v305, 109
        %v1208 = vpop.permute.xlu0 %1207
        %vm1209 = vcmask 891904
        %v1210 = vsel %vm1209, %v1178, %v1180
        %v1211 = vsel %vm1209, %v1180, %v1182
        %v1212 = vsel %vm1209, %v1182, %v1184
        %v1213 = vsel %vm1209, %v1186, %v1188
        %v1214 = vsel %vm1209, %v1188, %v1190
        %v1215 = vsel %vm1209, %v1190, %v1192
        %v1216 = vsel %vm1209, %v1194, %v1196
        %v1217 = vsel %vm1209, %v1196, %v1198
        %v1218 = vsel %vm1209, %v1198, %v1200
        %v1219 = vsel %vm1209, %v1202, %v1204
        %v1220 = vsel %vm1209, %v1204, %v1206
        %v1221 = vsel %vm1209, %v1206, %v1208
        %1222 = vrot.lane.b32.xlu0 %v290, 67
        %v1223 = vpop.permute.xlu0 %1222
        %1224 = vrot.lane.b32.xlu0 %v291, 67
        %v1225 = vpop.permute.xlu0 %1224
        %1226 = vrot.lane.b32.xlu0 %v292, 67
        %v1227 = vpop.permute.xlu0 %1226
        %1228 = vrot.lane.b32.xlu0 %v302, 67
        %v1229 = vpop.permute.xlu0 %1228
        %1230 = vrot.lane.b32.xlu0 %v293, 67
        %v1231 = vpop.permute.xlu0 %1230
        %1232 = vrot.lane.b32.xlu0 %v294, 67
        %v1233 = vpop.permute.xlu0 %1232
        %1234 = vrot.lane.b32.xlu0 %v295, 67
        %v1235 = vpop.permute.xlu0 %1234
        %1236 = vrot.lane.b32.xlu0 %v303, 67
        %v1237 = vpop.permute.xlu0 %1236
        %1238 = vrot.lane.b32.xlu0 %v296, 67
        %v1239 = vpop.permute.xlu0 %1238
        %1240 = vrot.lane.b32.xlu0 %v297, 67
        %v1241 = vpop.permute.xlu0 %1240
        %1242 = vrot.lane.b32.xlu0 %v298, 67
        %v1243 = vpop.permute.xlu0 %1242
        %1244 = vrot.lane.b32.xlu0 %v304, 67
        %v1245 = vpop.permute.xlu0 %1244
        %1246 = vrot.lane.b32.xlu0 %v299, 67
        %v1247 = vpop.permute.xlu0 %1246
        %1248 = vrot.lane.b32.xlu0 %v300, 67
        %v1249 = vpop.permute.xlu0 %1248
        %1250 = vrot.lane.b32.xlu0 %v301, 67
        %v1251 = vpop.permute.xlu0 %1250
        %1252 = vrot.lane.b32.xlu0 %v305, 67
        %v1253 = vpop.permute.xlu0 %1252
        %1254 = vrot.lane.b32.xlu0 %v355, 67
        %v1255 = vpop.permute.xlu0 %1254
        %1256 = vrot.lane.b32.xlu0 %v356, 67
        %v1257 = vpop.permute.xlu0 %1256
        %1258 = vrot.lane.b32.xlu0 %v357, 67
        %v1259 = vpop.permute.xlu0 %1258
        %1260 = vrot.lane.b32.xlu0 %v329, 67
        %v1261 = vpop.permute.xlu0 %1260
        %1262 = vrot.lane.b32.xlu0 %v358, 67
        %v1263 = vpop.permute.xlu0 %1262
        %1264 = vrot.lane.b32.xlu0 %v359, 67
        %v1265 = vpop.permute.xlu0 %1264
        %1266 = vrot.lane.b32.xlu0 %v360, 67
        %v1267 = vpop.permute.xlu0 %1266
        %1268 = vrot.lane.b32.xlu0 %v337, 67
        %v1269 = vpop.permute.xlu0 %1268
        %1270 = vrot.lane.b32.xlu0 %v361, 67
        %v1271 = vpop.permute.xlu0 %1270
        %1272 = vrot.lane.b32.xlu0 %v362, 67
        %v1273 = vpop.permute.xlu0 %1272
        %1274 = vrot.lane.b32.xlu0 %v363, 67
        %v1275 = vpop.permute.xlu0 %1274
        %1276 = vrot.lane.b32.xlu0 %v345, 67
        %v1277 = vpop.permute.xlu0 %1276
        %1278 = vrot.lane.b32.xlu0 %v364, 67
        %v1279 = vpop.permute.xlu0 %1278
        %1280 = vrot.lane.b32.xlu0 %v365, 67
        %v1281 = vpop.permute.xlu0 %1280
        %1282 = vrot.lane.b32.xlu0 %v366, 67
        %v1283 = vpop.permute.xlu0 %1282
        %1284 = vrot.lane.b32.xlu0 %v353, 67
        %v1285 = vpop.permute.xlu0 %1284
        %1286 = vrot.lane.b32.xlu0 %v412, 67
        %v1287 = vpop.permute.xlu0 %1286
        %1288 = vrot.lane.b32.xlu0 %v413, 67
        %v1289 = vpop.permute.xlu0 %1288
        %1290 = vrot.lane.b32.xlu0 %v414, 67
        %v1291 = vpop.permute.xlu0 %1290
        %1292 = vrot.lane.b32.xlu0 %v386, 67
        %v1293 = vpop.permute.xlu0 %1292
        %1294 = vrot.lane.b32.xlu0 %v415, 67
        %v1295 = vpop.permute.xlu0 %1294
        %1296 = vrot.lane.b32.xlu0 %v416, 67
        %v1297 = vpop.permute.xlu0 %1296
        %1298 = vrot.lane.b32.xlu0 %v417, 67
        %v1299 = vpop.permute.xlu0 %1298
        %1300 = vrot.lane.b32.xlu0 %v394, 67
        %v1301 = vpop.permute.xlu0 %1300
        %1302 = vrot.lane.b32.xlu0 %v418, 67
        %v1303 = vpop.permute.xlu0 %1302
        %1304 = vrot.lane.b32.xlu0 %v419, 67
        %v1305 = vpop.permute.xlu0 %1304
        %1306 = vrot.lane.b32.xlu0 %v420, 67
        %v1307 = vpop.permute.xlu0 %1306
        %1308 = vrot.lane.b32.xlu0 %v402, 67
        %v1309 = vpop.permute.xlu0 %1308
        %1310 = vrot.lane.b32.xlu0 %v421, 67
        %v1311 = vpop.permute.xlu0 %1310
        %1312 = vrot.lane.b32.xlu0 %v422, 67
        %v1313 = vpop.permute.xlu0 %1312
        %1314 = vrot.lane.b32.xlu0 %v423, 67
        %v1315 = vpop.permute.xlu0 %1314
        %1316 = vrot.lane.b32.xlu0 %v410, 67
        %v1317 = vpop.permute.xlu0 %1316
        %1318 = vrot.lane.b32.xlu0 %v469, 67
        %v1319 = vpop.permute.xlu0 %1318
        %1320 = vrot.lane.b32.xlu0 %v470, 67
        %v1321 = vpop.permute.xlu0 %1320
        %1322 = vrot.lane.b32.xlu0 %v471, 67
        %v1323 = vpop.permute.xlu0 %1322
        %1324 = vrot.lane.b32.xlu0 %v443, 67
        %v1325 = vpop.permute.xlu0 %1324
        %1326 = vrot.lane.b32.xlu0 %v472, 67
        %v1327 = vpop.permute.xlu0 %1326
        %1328 = vrot.lane.b32.xlu0 %v473, 67
        %v1329 = vpop.permute.xlu0 %1328
        %1330 = vrot.lane.b32.xlu0 %v474, 67
        %v1331 = vpop.permute.xlu0 %1330
        %1332 = vrot.lane.b32.xlu0 %v451, 67
        %v1333 = vpop.permute.xlu0 %1332
        %1334 = vrot.lane.b32.xlu0 %v475, 67
        %v1335 = vpop.permute.xlu0 %1334
        %1336 = vrot.lane.b32.xlu0 %v476, 67
        %v1337 = vpop.permute.xlu0 %1336
        %1338 = vrot.lane.b32.xlu0 %v477, 67
        %v1339 = vpop.permute.xlu0 %1338
        %1340 = vrot.lane.b32.xlu0 %v459, 67
        %v1341 = vpop.permute.xlu0 %1340
        %1342 = vrot.lane.b32.xlu0 %v478, 67
        %v1343 = vpop.permute.xlu0 %1342
        %1344 = vrot.lane.b32.xlu0 %v479, 67
        %v1345 = vpop.permute.xlu0 %1344
        %1346 = vrot.lane.b32.xlu0 %v480, 67
        %v1347 = vpop.permute.xlu0 %1346
        %1348 = vrot.lane.b32.xlu0 %v467, 67
        %v1349 = vpop.permute.xlu0 %1348
        %1350 = vrot.lane.b32.xlu0 %v1210, 67
        %v1351 = vpop.permute.xlu0 %1350
        %1352 = vrot.lane.b32.xlu0 %v1211, 67
        %v1353 = vpop.permute.xlu0 %1352
        %1354 = vrot.lane.b32.xlu0 %v1212, 67
        %v1355 = vpop.permute.xlu0 %1354
        %1356 = vrot.lane.b32.xlu0 %v1184, 67
        %v1357 = vpop.permute.xlu0 %1356
        %1358 = vrot.lane.b32.xlu0 %v1213, 67
        %v1359 = vpop.permute.xlu0 %1358
        %1360 = vrot.lane.b32.xlu0 %v1214, 67
        %v1361 = vpop.permute.xlu0 %1360
        %1362 = vrot.lane.b32.xlu0 %v1215, 67
        %v1363 = vpop.permute.xlu0 %1362
        %1364 = vrot.lane.b32.xlu0 %v1192, 67
        %v1365 = vpop.permute.xlu0 %1364
        %1366 = vrot.lane.b32.xlu0 %v1216, 67
        %v1367 = vpop.permute.xlu0 %1366
        %1368 = vrot.lane.b32.xlu0 %v1217, 67
        %v1369 = vpop.permute.xlu0 %1368
        %1370 = vrot.lane.b32.xlu0 %v1218, 67
        %v1371 = vpop.permute.xlu0 %1370
        %1372 = vrot.lane.b32.xlu0 %v1200, 67
        %v1373 = vpop.permute.xlu0 %1372
        %1374 = vrot.lane.b32.xlu0 %v1219, 67
        %v1375 = vpop.permute.xlu0 %1374
        %1376 = vrot.lane.b32.xlu0 %v1220, 67
        %v1377 = vpop.permute.xlu0 %1376
        %1378 = vrot.lane.b32.xlu0 %v1221, 67
        %v1379 = vpop.permute.xlu0 %1378
        %1380 = vrot.lane.b32.xlu0 %v1208, 67
        %v1381 = vpop.permute.xlu0 %1380
        %1382 = vrot.lane.b32.xlu0 %v583, 67
        %v1383 = vpop.permute.xlu0 %1382
        %1384 = vrot.lane.b32.xlu0 %v584, 67
        %v1385 = vpop.permute.xlu0 %1384
        %1386 = vrot.lane.b32.xlu0 %v585, 67
        %v1387 = vpop.permute.xlu0 %1386
        %1388 = vrot.lane.b32.xlu0 %v557, 67
        %v1389 = vpop.permute.xlu0 %1388
        %1390 = vrot.lane.b32.xlu0 %v586, 67
        %v1391 = vpop.permute.xlu0 %1390
        %1392 = vrot.lane.b32.xlu0 %v587, 67
        %v1393 = vpop.permute.xlu0 %1392
        %1394 = vrot.lane.b32.xlu0 %v588, 67
        %v1395 = vpop.permute.xlu0 %1394
        %1396 = vrot.lane.b32.xlu0 %v565, 67
        %v1397 = vpop.permute.xlu0 %1396
        %1398 = vrot.lane.b32.xlu0 %v589, 67
        %v1399 = vpop.permute.xlu0 %1398
        %1400 = vrot.lane.b32.xlu0 %v590, 67
        %v1401 = vpop.permute.xlu0 %1400
        %1402 = vrot.lane.b32.xlu0 %v591, 67
        %v1403 = vpop.permute.xlu0 %1402
        %1404 = vrot.lane.b32.xlu0 %v573, 67
        %v1405 = vpop.permute.xlu0 %1404
        %1406 = vrot.lane.b32.xlu0 %v592, 67
        %v1407 = vpop.permute.xlu0 %1406
        %1408 = vrot.lane.b32.xlu0 %v593, 67
        %v1409 = vpop.permute.xlu0 %1408
        %1410 = vrot.lane.b32.xlu0 %v594, 67
        %v1411 = vpop.permute.xlu0 %1410
        %1412 = vrot.lane.b32.xlu0 %v581, 67
        %v1413 = vpop.permute.xlu0 %1412
        %1414 = vrot.lane.b32.xlu0 %v640, 67
        %v1415 = vpop.permute.xlu0 %1414
        %1416 = vrot.lane.b32.xlu0 %v641, 67
        %v1417 = vpop.permute.xlu0 %1416
        %1418 = vrot.lane.b32.xlu0 %v642, 67
        %v1419 = vpop.permute.xlu0 %1418
        %1420 = vrot.lane.b32.xlu0 %v614, 67
        %v1421 = vpop.permute.xlu0 %1420
        %1422 = vrot.lane.b32.xlu0 %v643, 67
        %v1423 = vpop.permute.xlu0 %1422
        %1424 = vrot.lane.b32.xlu0 %v644, 67
        %v1425 = vpop.permute.xlu0 %1424
        %1426 = vrot.lane.b32.xlu0 %v645, 67
        %v1427 = vpop.permute.xlu0 %1426
        %1428 = vrot.lane.b32.xlu0 %v622, 67
        %v1429 = vpop.permute.xlu0 %1428
        %1430 = vrot.lane.b32.xlu0 %v646, 67
        %v1431 = vpop.permute.xlu0 %1430
        %1432 = vrot.lane.b32.xlu0 %v647, 67
        %v1433 = vpop.permute.xlu0 %1432
        %1434 = vrot.lane.b32.xlu0 %v648, 67
        %v1435 = vpop.permute.xlu0 %1434
        %1436 = vrot.lane.b32.xlu0 %v630, 67
        %v1437 = vpop.permute.xlu0 %1436
        %1438 = vrot.lane.b32.xlu0 %v649, 67
        %v1439 = vpop.permute.xlu0 %1438
        %1440 = vrot.lane.b32.xlu0 %v650, 67
        %v1441 = vpop.permute.xlu0 %1440
        %1442 = vrot.lane.b32.xlu0 %v651, 67
        %v1443 = vpop.permute.xlu0 %1442
        %1444 = vrot.lane.b32.xlu0 %v638, 67
        %v1445 = vpop.permute.xlu0 %1444
        %1446 = vrot.lane.b32.xlu0 %v697, 67
        %v1447 = vpop.permute.xlu0 %1446
        %1448 = vrot.lane.b32.xlu0 %v698, 67
        %v1449 = vpop.permute.xlu0 %1448
        %1450 = vrot.lane.b32.xlu0 %v699, 67
        %v1451 = vpop.permute.xlu0 %1450
        %1452 = vrot.lane.b32.xlu0 %v671, 67
        %v1453 = vpop.permute.xlu0 %1452
        %1454 = vrot.lane.b32.xlu0 %v700, 67
        %v1455 = vpop.permute.xlu0 %1454
        %1456 = vrot.lane.b32.xlu0 %v701, 67
        %v1457 = vpop.permute.xlu0 %1456
        %1458 = vrot.lane.b32.xlu0 %v702, 67
        %v1459 = vpop.permute.xlu0 %1458
        %1460 = vrot.lane.b32.xlu0 %v679, 67
        %v1461 = vpop.permute.xlu0 %1460
        %1462 = vrot.lane.b32.xlu0 %v703, 67
        %v1463 = vpop.permute.xlu0 %1462
        %1464 = vrot.lane.b32.xlu0 %v704, 67
        %v1465 = vpop.permute.xlu0 %1464
        %1466 = vrot.lane.b32.xlu0 %v705, 67
        %v1467 = vpop.permute.xlu0 %1466
        %1468 = vrot.lane.b32.xlu0 %v687, 67
        %v1469 = vpop.permute.xlu0 %1468
        %1470 = vrot.lane.b32.xlu0 %v706, 67
        %v1471 = vpop.permute.xlu0 %1470
        %1472 = vrot.lane.b32.xlu0 %v707, 67
        %v1473 = vpop.permute.xlu0 %1472
        %1474 = vrot.lane.b32.xlu0 %v708, 67
        %v1475 = vpop.permute.xlu0 %1474
        %1476 = vrot.lane.b32.xlu0 %v695, 67
        %v1477 = vpop.permute.xlu0 %1476
        %1478 = vrot.lane.b32.xlu0 %v754, 67
        %v1479 = vpop.permute.xlu0 %1478
        %1480 = vrot.lane.b32.xlu0 %v755, 67
        %v1481 = vpop.permute.xlu0 %1480
        %1482 = vrot.lane.b32.xlu0 %v756, 67
        %v1483 = vpop.permute.xlu0 %1482
        %1484 = vrot.lane.b32.xlu0 %v728, 67
        %v1485 = vpop.permute.xlu0 %1484
        %1486 = vrot.lane.b32.xlu0 %v757, 67
        %v1487 = vpop.permute.xlu0 %1486
        %1488 = vrot.lane.b32.xlu0 %v758, 67
        %v1489 = vpop.permute.xlu0 %1488
        %1490 = vrot.lane.b32.xlu0 %v759, 67
        %v1491 = vpop.permute.xlu0 %1490
        %1492 = vrot.lane.b32.xlu0 %v736, 67
        %v1493 = vpop.permute.xlu0 %1492
        %1494 = vrot.lane.b32.xlu0 %v760, 67
        %v1495 = vpop.permute.xlu0 %1494
        %1496 = vrot.lane.b32.xlu0 %v761, 67
        %v1497 = vpop.permute.xlu0 %1496
        %1498 = vrot.lane.b32.xlu0 %v762, 67
        %v1499 = vpop.permute.xlu0 %1498
        %1500 = vrot.lane.b32.xlu0 %v744, 67
        %v1501 = vpop.permute.xlu0 %1500
        %1502 = vrot.lane.b32.xlu0 %v763, 67
        %v1503 = vpop.permute.xlu0 %1502
        %1504 = vrot.lane.b32.xlu0 %v764, 67
        %v1505 = vpop.permute.xlu0 %1504
        %1506 = vrot.lane.b32.xlu0 %v765, 67
        %v1507 = vpop.permute.xlu0 %1506
        %1508 = vrot.lane.b32.xlu0 %v752, 67
        %v1509 = vpop.permute.xlu0 %1508
        %vm1510 = vcmask 547840
        %v1511 = vsel %vm1510, %v1223, %v1225
        %v1512 = vsel %vm1510, %v1225, %v1227
        %v1513 = vsel %vm1510, %v1227, %v1229
        %v1514 = vsel %vm1510, %v1231, %v1233
        %v1515 = vsel %vm1510, %v1233, %v1235
        %v1516 = vsel %vm1510, %v1235, %v1237
        %v1517 = vsel %vm1510, %v1239, %v1241
        %v1518 = vsel %vm1510, %v1241, %v1243
        %v1519 = vsel %vm1510, %v1243, %v1245
        %v1520 = vsel %vm1510, %v1247, %v1249
        %v1521 = vsel %vm1510, %v1249, %v1251
        %v1522 = vsel %vm1510, %v1251, %v1253
        %v1523 = vsel %vm1510, %v1255, %v1257
        %v1524 = vsel %vm1510, %v1257, %v1259
        %v1525 = vsel %vm1510, %v1259, %v1261
        %v1526 = vsel %vm1510, %v1263, %v1265
        %v1527 = vsel %vm1510, %v1265, %v1267
        %v1528 = vsel %vm1510, %v1267, %v1269
        %v1529 = vsel %vm1510, %v1271, %v1273
        %v1530 = vsel %vm1510, %v1273, %v1275
        %v1531 = vsel %vm1510, %v1275, %v1277
        %v1532 = vsel %vm1510, %v1279, %v1281
        %v1533 = vsel %vm1510, %v1281, %v1283
        %v1534 = vsel %vm1510, %v1283, %v1285
        %v1535 = vsel %vm1510, %v1287, %v1289
        %v1536 = vsel %vm1510, %v1289, %v1291
        %v1537 = vsel %vm1510, %v1291, %v1293
        %v1538 = vsel %vm1510, %v1295, %v1297
        %v1539 = vsel %vm1510, %v1297, %v1299
        %v1540 = vsel %vm1510, %v1299, %v1301
        %v1541 = vsel %vm1510, %v1303, %v1305
        %v1542 = vsel %vm1510, %v1305, %v1307
        %v1543 = vsel %vm1510, %v1307, %v1309
        %v1544 = vsel %vm1510, %v1311, %v1313
        %v1545 = vsel %vm1510, %v1313, %v1315
        %v1546 = vsel %vm1510, %v1315, %v1317
        %v1547 = vsel %vm1510, %v1319, %v1321
        %v1548 = vsel %vm1510, %v1321, %v1323
        %v1549 = vsel %vm1510, %v1323, %v1325
        %v1550 = vsel %vm1510, %v1327, %v1329
        %v1551 = vsel %vm1510, %v1329, %v1331
        %v1552 = vsel %vm1510, %v1331, %v1333
        %v1553 = vsel %vm1510, %v1335, %v1337
        %v1554 = vsel %vm1510, %v1337, %v1339
        %v1555 = vsel %vm1510, %v1339, %v1341
        %v1556 = vsel %vm1510, %v1343, %v1345
        %v1557 = vsel %vm1510, %v1345, %v1347
        %v1558 = vsel %vm1510, %v1347, %v1349
        %v1559 = vsel %vm1510, %v1351, %v1353
        %v1560 = vsel %vm1510, %v1353, %v1355
        %v1561 = vsel %vm1510, %v1355, %v1357
        %v1562 = vsel %vm1510, %v1359, %v1361
        %v1563 = vsel %vm1510, %v1361, %v1363
        %v1564 = vsel %vm1510, %v1363, %v1365
        %v1565 = vsel %vm1510, %v1367, %v1369
        %v1566 = vsel %vm1510, %v1369, %v1371
        %v1567 = vsel %vm1510, %v1371, %v1373
        %v1568 = vsel %vm1510, %v1375, %v1377
        %v1569 = vsel %vm1510, %v1377, %v1379
        %v1570 = vsel %vm1510, %v1379, %v1381
        %v1571 = vsel %vm1510, %v1383, %v1385
        %v1572 = vsel %vm1510, %v1385, %v1387
        %v1573 = vsel %vm1510, %v1387, %v1389
        %v1574 = vsel %vm1510, %v1391, %v1393
        %v1575 = vsel %vm1510, %v1393, %v1395
        %v1576 = vsel %vm1510, %v1395, %v1397
        %v1577 = vsel %vm1510, %v1399, %v1401
        %v1578 = vsel %vm1510, %v1401, %v1403
        %v1579 = vsel %vm1510, %v1403, %v1405
        %v1580 = vsel %vm1510, %v1407, %v1409
        %v1581 = vsel %vm1510, %v1409, %v1411
        %v1582 = vsel %vm1510, %v1411, %v1413
        %v1583 = vsel %vm1510, %v1415, %v1417
        %v1584 = vsel %vm1510, %v1417, %v1419
        %v1585 = vsel %vm1510, %v1419, %v1421
        %v1586 = vsel %vm1510, %v1423, %v1425
        %v1587 = vsel %vm1510, %v1425, %v1427
        %v1588 = vsel %vm1510, %v1427, %v1429
        %v1589 = vsel %vm1510, %v1431, %v1433
        %v1590 = vsel %vm1510, %v1433, %v1435
        %v1591 = vsel %vm1510, %v1435, %v1437
        %v1592 = vsel %vm1510, %v1439, %v1441
        %v1593 = vsel %vm1510, %v1441, %v1443
        %v1594 = vsel %vm1510, %v1443, %v1445
        %v1595 = vsel %vm1510, %v1447, %v1449
        %v1596 = vsel %vm1510, %v1449, %v1451
        %v1597 = vsel %vm1510, %v1451, %v1453
        %v1598 = vsel %vm1510, %v1455, %v1457
        %v1599 = vsel %vm1510, %v1457, %v1459
        %v1600 = vsel %vm1510, %v1459, %v1461
        %v1601 = vsel %vm1510, %v1463, %v1465
        %v1602 = vsel %vm1510, %v1465, %v1467
        %v1603 = vsel %vm1510, %v1467, %v1469
        %v1604 = vsel %vm1510, %v1471, %v1473
        %v1605 = vsel %vm1510, %v1473, %v1475
        %v1606 = vsel %vm1510, %v1475, %v1477
        %v1607 = vsel %vm1510, %v1479, %v1481
        %v1608 = vsel %vm1510, %v1481, %v1483
        %v1609 = vsel %vm1510, %v1483, %v1485
        %v1610 = vsel %vm1510, %v1487, %v1489
        %v1611 = vsel %vm1510, %v1489, %v1491
        %v1612 = vsel %vm1510, %v1491, %v1493
        %v1613 = vsel %vm1510, %v1495, %v1497
        %v1614 = vsel %vm1510, %v1497, %v1499
        %v1615 = vsel %vm1510, %v1499, %v1501
        %v1616 = vsel %vm1510, %v1503, %v1505
        %v1617 = vsel %vm1510, %v1505, %v1507
        %v1618 = vsel %vm1510, %v1507, %v1509
        %v1727 = vpack.c.bf16 %v293, %v290
        %v1728 = vpack.c.bf16 %v294, %v291
        %v1729 = vpack.c.bf16 %v295, %v292
        %v1730 = vpack.c.bf16 %v299, %v296
        %v1731 = vpack.c.bf16 %v300, %v297
        %v1732 = vpack.c.bf16 %v301, %v298
        %v1733 = vpack.c.bf16 %v358, %v355
        %v1734 = vpack.c.bf16 %v359, %v356
        %v1735 = vpack.c.bf16 %v360, %v357
        %v1736 = vpack.c.bf16 %v364, %v361
        %v1737 = vpack.c.bf16 %v365, %v362
        %v1738 = vpack.c.bf16 %v366, %v363
        %v1739 = vpack.c.bf16 %v415, %v412
        %v1740 = vpack.c.bf16 %v416, %v413
        %v1741 = vpack.c.bf16 %v417, %v414
        %v1742 = vpack.c.bf16 %v421, %v418
        %v1743 = vpack.c.bf16 %v422, %v419
        %v1744 = vpack.c.bf16 %v423, %v420
        %v1745 = vpack.c.bf16 %v472, %v469
        %v1746 = vpack.c.bf16 %v473, %v470
        %v1747 = vpack.c.bf16 %v474, %v471
        %v1748 = vpack.c.bf16 %v478, %v475
        %v1749 = vpack.c.bf16 %v479, %v476
        %v1750 = vpack.c.bf16 %v480, %v477
        %v1751 = vpack.c.bf16 %v529, %v526
        %v1752 = vpack.c.bf16 %v530, %v527
        %v1753 = vpack.c.bf16 %v531, %v528
        %v1754 = vpack.c.bf16 %v535, %v532
        %v1755 = vpack.c.bf16 %v536, %v533
        %v1756 = vpack.c.bf16 %v537, %v534
        %v1757 = vpack.c.bf16 %v586, %v583
        %v1758 = vpack.c.bf16 %v587, %v584
        %v1759 = vpack.c.bf16 %v588, %v585
        %v1760 = vpack.c.bf16 %v592, %v589
        %v1761 = vpack.c.bf16 %v593, %v590
        %v1762 = vpack.c.bf16 %v594, %v591
        %v1763 = vpack.c.bf16 %v643, %v640
        %v1764 = vpack.c.bf16 %v644, %v641
        %v1765 = vpack.c.bf16 %v645, %v642
        %v1766 = vpack.c.bf16 %v649, %v646
        %v1767 = vpack.c.bf16 %v650, %v647
        %v1768 = vpack.c.bf16 %v651, %v648
        %v1769 = vpack.c.bf16 %v700, %v697
        %v1770 = vpack.c.bf16 %v701, %v698
        %v1771 = vpack.c.bf16 %v702, %v699
        %v1772 = vpack.c.bf16 %v706, %v703
        %v1773 = vpack.c.bf16 %v707, %v704
        %v1774 = vpack.c.bf16 %v708, %v705
        %v1775 = vpack.c.bf16 %v757, %v754
        %v1776 = vpack.c.bf16 %v758, %v755
        %v1777 = vpack.c.bf16 %v759, %v756
        %v1778 = vpack.c.bf16 %v763, %v760
        %v1779 = vpack.c.bf16 %v764, %v761
        %v1780 = vpack.c.bf16 %v765, %v762
        %v1781 = vpack.c.bf16 %v814, %v811
        %v1782 = vpack.c.bf16 %v815, %v812
        %v1783 = vpack.c.bf16 %v816, %v813
        %v1784 = vpack.c.bf16 %v820, %v817
        %v1785 = vpack.c.bf16 %v821, %v818
        %v1786 = vpack.c.bf16 %v822, %v819
        %v1787 = vpack.c.bf16 %v871, %v868
        %v1788 = vpack.c.bf16 %v872, %v869
        %v1789 = vpack.c.bf16 %v873, %v870
        %v1790 = vpack.c.bf16 %v877, %v874
        %v1791 = vpack.c.bf16 %v878, %v875
        %v1792 = vpack.c.bf16 %v879, %v876
        %v1793 = vpack.c.bf16 %v928, %v925
        %v1794 = vpack.c.bf16 %v929, %v926
        %v1795 = vpack.c.bf16 %v930, %v927
        %v1796 = vpack.c.bf16 %v934, %v931
        %v1797 = vpack.c.bf16 %v935, %v932
        %v1798 = vpack.c.bf16 %v936, %v933
        %v1799 = vpack.c.bf16 %v985, %v982
        %v1800 = vpack.c.bf16 %v986, %v983
        %v1801 = vpack.c.bf16 %v987, %v984
        %v1802 = vpack.c.bf16 %v991, %v988
        %v1803 = vpack.c.bf16 %v992, %v989
        %v1804 = vpack.c.bf16 %v993, %v990
        %v1805 = vpack.c.bf16 %v1042, %v1039
        %v1806 = vpack.c.bf16 %v1043, %v1040
        %v1807 = vpack.c.bf16 %v1044, %v1041
        %v1808 = vpack.c.bf16 %v1048, %v1045
        %v1809 = vpack.c.bf16 %v1049, %v1046
        %v1810 = vpack.c.bf16 %v1050, %v1047
        %v1811 = vpack.c.bf16 %v1099, %v1096
        %v1812 = vpack.c.bf16 %v1100, %v1097
        %v1813 = vpack.c.bf16 %v1101, %v1098
        %v1814 = vpack.c.bf16 %v1105, %v1102
        %v1815 = vpack.c.bf16 %v1106, %v1103
        %v1816 = vpack.c.bf16 %v1107, %v1104
        %v1817 = vpack.c.bf16 %v1156, %v1153
        %v1818 = vpack.c.bf16 %v1157, %v1154
        %v1819 = vpack.c.bf16 %v1158, %v1155
        %v1820 = vpack.c.bf16 %v1162, %v1159
        %v1821 = vpack.c.bf16 %v1163, %v1160
        %v1822 = vpack.c.bf16 %v1164, %v1161
        %v1823 = vpack.c.bf16 %v1514, %v1511
        %v1824 = vpack.c.bf16 %v1515, %v1512
        %v1825 = vpack.c.bf16 %v1516, %v1513
        %v1826 = vpack.c.bf16 %v1520, %v1517
        %v1827 = vpack.c.bf16 %v1521, %v1518
        %v1828 = vpack.c.bf16 %v1522, %v1519
        %v1829 = vpack.c.bf16 %v1526, %v1523
        %v1830 = vpack.c.bf16 %v1527, %v1524
        %v1831 = vpack.c.bf16 %v1528, %v1525
        %v1832 = vpack.c.bf16 %v1532, %v1529
        %v1833 = vpack.c.bf16 %v1533, %v1530
        %v1834 = vpack.c.bf16 %v1534, %v1531
        %v1835 = vpack.c.bf16 %v1538, %v1535
        %v1836 = vpack.c.bf16 %v1539, %v1536
        %v1837 = vpack.c.bf16 %v1540, %v1537
        %v1838 = vpack.c.bf16 %v1544, %v1541
        %v1839 = vpack.c.bf16 %v1545, %v1542
        %v1840 = vpack.c.bf16 %v1546, %v1543
        %v1841 = vpack.c.bf16 %v1550, %v1547
        %v1842 = vpack.c.bf16 %v1551, %v1548
        %v1843 = vpack.c.bf16 %v1552, %v1549
        %v1844 = vpack.c.bf16 %v1556, %v1553
        %v1845 = vpack.c.bf16 %v1557, %v1554
        %v1846 = vpack.c.bf16 %v1558, %v1555
        %v1847 = vpack.c.bf16 %v1562, %v1559
        %v1848 = vpack.c.bf16 %v1563, %v1560
        %v1849 = vpack.c.bf16 %v1564, %v1561
        %v1850 = vpack.c.bf16 %v1568, %v1565
        %v1851 = vpack.c.bf16 %v1569, %v1566
        %v1852 = vpack.c.bf16 %v1570, %v1567
        %v1853 = vpack.c.bf16 %v1574, %v1571
        %v1854 = vpack.c.bf16 %v1575, %v1572
        %v1855 = vpack.c.bf16 %v1576, %v1573
        %v1856 = vpack.c.bf16 %v1580, %v1577
        %v1857 = vpack.c.bf16 %v1581, %v1578
        %v1858 = vpack.c.bf16 %v1582, %v1579
        %v1859 = vpack.c.bf16 %v1586, %v1583
        %v1860 = vpack.c.bf16 %v1587, %v1584
        %v1861 = vpack.c.bf16 %v1588, %v1585
        %v1862 = vpack.c.bf16 %v1592, %v1589
        %v1863 = vpack.c.bf16 %v1593, %v1590
        %v1864 = vpack.c.bf16 %v1594, %v1591
        %v1865 = vpack.c.bf16 %v1598, %v1595
        %v1866 = vpack.c.bf16 %v1599, %v1596
        %v1867 = vpack.c.bf16 %v1600, %v1597
        %v1868 = vpack.c.bf16 %v1604, %v1601
        %v1869 = vpack.c.bf16 %v1605, %v1602
        %v1870 = vpack.c.bf16 %v1606, %v1603
        %v1871 = vpack.c.bf16 %v1610, %v1607
        %v1872 = vpack.c.bf16 %v1611, %v1608
        %v1873 = vpack.c.bf16 %v1612, %v1609
        %v1874 = vpack.c.bf16 %v1616, %v1613
        %v1875 = vpack.c.bf16 %v1617, %v1614
        %v1876 = vpack.c.bf16 %v1618, %v1615
        %v1877 = vld [vmem:[%s1] sm:$0xff]
        %v1878 = vld [vmem:[%s1 + $0x8] sm:$0xff]
        %v1879 = vld [vmem:[%s1 + $0x10] sm:$0xff]
        %v1880 = vld [vmem:[%s1 + $0x18] sm:$0xf]
        %v1881 = vld [vmem:[%s1 + $0x1c] sm:$0xff]
        %v1882 = vld [vmem:[%s1 + $0x24] sm:$0xff]
        %v1883 = vld [vmem:[%s1 + $0x2c] sm:$0xff]
        %v1884 = vld [vmem:[%s1 + $0x34] sm:$0xf]
        %v1885 = vld [vmem:[%s2] sm:$0xff]
        %v1886 = vld [vmem:[%s2 + $0x8] sm:$0xff]
        %1888 = vset.pattern.permute.xlu0 0
        %1889 = vperm.xlu0 %1888, %v1885
        %v1890 = vpop.permute.xlu0 %1889
        %1893 = vset.pattern.permute.xlu0 0
        %1894 = vperm.xlu0 %1893, %v1886
        %v1895 = vpop.permute.xlu0 %1894
        %v1905 = vunpack.c.l.b16 %v1877
        %v1906 = vunpack.c.h.b16 %v1877
        %v1907 = vunpack.c.l.b16 %v1878
        %v1908 = vunpack.c.h.b16 %v1878
        %v1909 = vunpack.c.l.b16 %v1879
        %v1910 = vunpack.c.h.b16 %v1879
        %v1911 = vunpack.c.l.b16 %v1880
        %v1912 = vunpack.c.l.b16 %v1881
        %v1913 = vunpack.c.h.b16 %v1881
        %v1914 = vunpack.c.l.b16 %v1882
        %v1915 = vunpack.c.h.b16 %v1882
        %v1916 = vunpack.c.l.b16 %v1883
        %v1917 = vunpack.c.h.b16 %v1883
        %v1918 = vunpack.c.l.b16 %v1884
        %v1919 = vpack.c.b16 %v1912, %v1905
        %v1920 = vpack.c.b16 %v1913, %v1906
        %v1921 = vpack.c.b16 %v1914, %v1907
        %v1922 = vpack.c.b16 %v1915, %v1908
        %v1923 = vpack.c.b16 %v1916, %v1909
        %v1924 = vpack.c.b16 %v1917, %v1910
        %v1925 = vpack.c.b16 %v1918, %v1911
        %vm1932 = vcmask 261120
        %v1934 = vsel %vm1932, %v1925, 0
        %1936 = vmatprep.subr.bf16.mxu0 %v1728
        %1937 = vmatpush1.bf16.msra.mxu0 %v1727
        %1938 = vmatprep.subr.bf16.mxu0 %v1731
        %1939 = vmatpush1.bf16.msra.mxu0 %v1730
        %1940 = vmatprep.subr.bf16.mxu0 %v1734
        %1941 = vmatpush1.bf16.msra.mxu0 %v1733
        %1942 = vmatprep.subr.bf16.mxu0 %v1737
        %1943 = vmatpush1.bf16.msra.mxu0 %v1736
        %1944 = vmatprep.subr.bf16.mxu0 %v1740
        %1945 = vmatpush1.bf16.msra.mxu0 %v1739
        %1946 = vmatprep.subr.bf16.mxu0 %v1743
        %1947 = vmatpush1.bf16.msra.mxu0 %v1742
        %1948 = vmatprep.subr.bf16.mxu0 %v1746
        %1949 = vmatpush1.bf16.msra.mxu0 %v1745
        %1950 = vmatprep.subr.bf16.mxu0 %v1749
        %1951 = vmatpush1.bf16.msra.mxu0 %v1748
        %1952 = vmatprep.subr.bf16.mxu0 %v1752
        %1953 = vmatpush1.bf16.msra.mxu0 %v1751
        %1954 = vmatprep.subr.bf16.mxu0 %v1755
        %1955 = vmatpush1.bf16.msra.mxu0 %v1754
        %1956 = vmatprep.subr.bf16.mxu0 %v1758
        %1957 = vmatpush1.bf16.msra.mxu0 %v1757
        %1958 = vmatprep.subr.bf16.mxu0 %v1761
        %1959 = vmatpush1.bf16.msra.mxu0 %v1760
        %1960 = vmatprep.subr.bf16.mxu0 %v1764
        %1961 = vmatpush1.bf16.msra.mxu0 %v1763
        %1962 = vmatprep.subr.bf16.mxu0 %v1767
        %1963 = vmatpush1.bf16.msra.mxu0 %v1766
        %1964 = vmatprep.subr.bf16.mxu0 %v1770
        %1965 = vmatpush1.bf16.msra.mxu0 %v1769
        %1966 = vmatprep.subr.bf16.mxu0 %v1773
        %1967 = vmatpush1.bf16.msra.mxu0 %v1772
        %1968 = vmatprep.mubr.bf16.mxu0 %v1920
        %1969 = vmatmul.mubr.bf16.gmra.mrb[0].mxu0 %v1919
        %v1970 = vpop.f32.mrb[0].mxu0
        %v1971 = vadd.f32 %v1890, %v1970
        %v1972 = vpop.f32.mrb[0].mxu0
        %v1973 = vadd.f32 %v1890, %v1972
        %v1974 = vpop.f32.mrb[0].mxu0
        %v1975 = vadd.f32 %v1895, %v1974
        %v1976 = vpop.f32.mrb[0].mxu0
        %v1977 = vadd.f32 %v1895, %v1976
        %1978 = vdwg.mxu0
        %1979 = vmatprep.subr.bf16.mxu0 %v1776
        %1980 = vmatpush1.bf16.msra.mxu0 %v1775
        %1981 = vmatprep.subr.bf16.mxu0 %v1779
        %1982 = vmatpush1.bf16.msra.mxu0 %v1778
        %1983 = vmatprep.subr.bf16.mxu0 %v1782
        %1984 = vmatpush1.bf16.msra.mxu0 %v1781
        %1985 = vmatprep.subr.bf16.mxu0 %v1785
        %1986 = vmatpush1.bf16.msra.mxu0 %v1784
        %1987 = vmatprep.subr.bf16.mxu0 %v1788
        %1988 = vmatpush1.bf16.msra.mxu0 %v1787
        %1989 = vmatprep.subr.bf16.mxu0 %v1791
        %1990 = vmatpush1.bf16.msra.mxu0 %v1790
        %1991 = vmatprep.subr.bf16.mxu0 %v1794
        %1992 = vmatpush1.bf16.msra.mxu0 %v1793
        %1993 = vmatprep.subr.bf16.mxu0 %v1797
        %1994 = vmatpush1.bf16.msra.mxu0 %v1796
        %1995 = vmatprep.subr.bf16.mxu0 %v1800
        %1996 = vmatpush1.bf16.msra.mxu0 %v1799
        %1997 = vmatprep.subr.bf16.mxu0 %v1803
        %1998 = vmatpush1.bf16.msra.mxu0 %v1802
        %1999 = vmatprep.subr.bf16.mxu0 %v1806
        %2000 = vmatpush1.bf16.msra.mxu0 %v1805
        %2001 = vmatprep.subr.bf16.mxu0 %v1809
        %2002 = vmatpush1.bf16.msra.mxu0 %v1808
        %2003 = vmatprep.subr.bf16.mxu0 %v1812
        %2004 = vmatpush1.bf16.msra.mxu0 %v1811
        %2005 = vmatprep.subr.bf16.mxu0 %v1815
        %2006 = vmatpush1.bf16.msra.mxu0 %v1814
        %2007 = vmatprep.subr.bf16.mxu0 %v1818
        %2008 = vmatpush1.bf16.msra.mxu0 %v1817
        %2009 = vmatprep.subr.bf16.mxu0 %v1821
        %2010 = vmatpush1.bf16.msra.mxu0 %v1820
        %2011 = vmatprep.mubr.bf16.mxu0 %v1922
        %2012 = vmatmul.mubr.bf16.gmra.mrb[0].mxu0 %v1921
        %v2013 = vpop.f32.mrb[0].mxu0
        %v2014 = vadd.f32 %v1971, %v2013
        %v2015 = vpop.f32.mrb[0].mxu0
        %v2016 = vadd.f32 %v1973, %v2015
        %v2017 = vpop.f32.mrb[0].mxu0
        %v2018 = vadd.f32 %v1975, %v2017
        %v2019 = vpop.f32.mrb[0].mxu0
        %v2020 = vadd.f32 %v1977, %v2019
        %2021 = vdwg.mxu0
        %2022 = vmatprep.subr.bf16.mxu0 %v1824
        %2023 = vmatpush1.bf16.msra.mxu0 %v1823
        %2024 = vmatprep.subr.bf16.mxu0 %v1827
        %2025 = vmatpush1.bf16.msra.mxu0 %v1826
        %2026 = vmatprep.subr.bf16.mxu0 %v1830
        %2027 = vmatpush1.bf16.msra.mxu0 %v1829
        %2028 = vmatprep.subr.bf16.mxu0 %v1833
        %2029 = vmatpush1.bf16.msra.mxu0 %v1832
        %2030 = vmatprep.subr.bf16.mxu0 %v1836
        %2031 = vmatpush1.bf16.msra.mxu0 %v1835
        %2032 = vmatprep.subr.bf16.mxu0 %v1839
        %2033 = vmatpush1.bf16.msra.mxu0 %v1838
        %2034 = vmatprep.subr.bf16.mxu0 %v1842
        %2035 = vmatpush1.bf16.msra.mxu0 %v1841
        %2036 = vmatprep.subr.bf16.mxu0 %v1845
        %2037 = vmatpush1.bf16.msra.mxu0 %v1844
        %2038 = vmatprep.subr.bf16.mxu0 %v1848
        %2039 = vmatpush1.bf16.msra.mxu0 %v1847
        %2040 = vmatprep.subr.bf16.mxu0 %v1851
        %2041 = vmatpush1.bf16.msra.mxu0 %v1850
        %2042 = vmatprep.subr.bf16.mxu0 %v1854
        %2043 = vmatpush1.bf16.msra.mxu0 %v1853
        %2044 = vmatprep.subr.bf16.mxu0 %v1857
        %2045 = vmatpush1.bf16.msra.mxu0 %v1856
        %2046 = vmatprep.subr.bf16.mxu0 %v1860
        %2047 = vmatpush1.bf16.msra.mxu0 %v1859
        %2048 = vmatprep.subr.bf16.mxu0 %v1863
        %2049 = vmatpush1.bf16.msra.mxu0 %v1862
        %2050 = vmatprep.subr.bf16.mxu0 %v1866
        %2051 = vmatpush1.bf16.msra.mxu0 %v1865
        %2052 = vmatprep.subr.bf16.mxu0 %v1869
        %2053 = vmatpush1.bf16.msra.mxu0 %v1868
        %2054 = vmatprep.mubr.bf16.mxu0 %v1924
        %2055 = vmatmul.mubr.bf16.gmra.mrb[0].mxu0 %v1923
        %v2056 = vpop.f32.mrb[0].mxu0
        %v2057 = vadd.f32 %v2014, %v2056
        %v2058 = vpop.f32.mrb[0].mxu0
        %v2059 = vadd.f32 %v2016, %v2058
        %v2060 = vpop.f32.mrb[0].mxu0
        %v2061 = vadd.f32 %v2018, %v2060
        %v2062 = vpop.f32.mrb[0].mxu0
        %v2063 = vadd.f32 %v2020, %v2062
        %2064 = vdwg.mxu0
        %2065 = vmatprep.subr.bf16.mxu0 %v1872
        %2066 = vmatpush1.bf16.msra.mxu0 %v1871
        %2067 = vmatprep.subr.bf16.mxu0 %v1875
        %2068 = vmatpush1.bf16.msra.mxu0 %v1874
        %2069 = vmatprep.subr.bf16.mxu0 0
        %2070 = vmatpush1.bf16.msra.mxu0 0
        %2071 = vmatprep.subr.bf16.mxu0 0
        %2072 = vmatpush1.bf16.msra.mxu0 0
        %2073 = vmatprep.subr.bf16.mxu0 0
        %2074 = vmatpush1.bf16.msra.mxu0 0
        %2075 = vmatprep.subr.bf16.mxu0 0
        %2076 = vmatpush1.bf16.msra.mxu0 0
        %2077 = vmatprep.subr.bf16.mxu0 0
        %2078 = vmatpush1.bf16.msra.mxu0 0
        %2079 = vmatprep.subr.bf16.mxu0 0
        %2080 = vmatpush1.bf16.msra.mxu0 0
        %2081 = vmatprep.subr.bf16.mxu0 0
        %2082 = vmatpush1.bf16.msra.mxu0 0
        %2083 = vmatprep.subr.bf16.mxu0 0
        %2084 = vmatpush1.bf16.msra.mxu0 0
        %2085 = vmatprep.subr.bf16.mxu0 0
        %2086 = vmatpush1.bf16.msra.mxu0 0
        %2087 = vmatprep.subr.bf16.mxu0 0
        %2088 = vmatpush1.bf16.msra.mxu0 0
        %2089 = vmatprep.subr.bf16.mxu0 0
        %2090 = vmatpush1.bf16.msra.mxu0 0
        %2091 = vmatprep.subr.bf16.mxu0 0
        %2092 = vmatpush1.bf16.msra.mxu0 0
        %2093 = vmatprep.subr.bf16.mxu0 0
        %2094 = vmatpush1.bf16.msra.mxu0 0
        %2095 = vmatprep.subr.bf16.mxu0 0
        %2096 = vmatpush1.bf16.msra.mxu0 0
        %2097 = vmatprep.mubr.bf16.mxu0 0
        %2098 = vmatmul.mubr.bf16.gmra.mrb[0].mxu0 %v1934
        %v2099 = vpop.f32.mrb[0].mxu0
        %v2100 = vadd.f32 %v2057, %v2099
        %v2101 = vpop.f32.mrb[0].mxu0
        %v2102 = vadd.f32 %v2059, %v2101
        %v2103 = vpop.f32.mrb[0].mxu0
        %v2104 = vadd.f32 %v2061, %v2103
        %v2105 = vpop.f32.mrb[0].mxu0
        %v2106 = vadd.f32 %v2063, %v2105
        %2107 = vdwg.mxu0
        %2108 = vmatprep.subr.bf16.mxu0 0
        %2109 = vmatpush1.bf16.msra.mxu0 %v1729
        %2110 = vmatprep.subr.bf16.mxu0 0
        %2111 = vmatpush1.bf16.msra.mxu0 %v1732
        %2112 = vmatprep.subr.bf16.mxu0 0
        %2113 = vmatpush1.bf16.msra.mxu0 %v1735
        %2114 = vmatprep.subr.bf16.mxu0 0
        %2115 = vmatpush1.bf16.msra.mxu0 %v1738
        %2116 = vmatprep.subr.bf16.mxu0 0
        %2117 = vmatpush1.bf16.msra.mxu0 %v1741
        %2118 = vmatprep.subr.bf16.mxu0 0
        %2119 = vmatpush1.bf16.msra.mxu0 %v1744
        %2120 = vmatprep.subr.bf16.mxu0 0
        %2121 = vmatpush1.bf16.msra.mxu0 %v1747
        %2122 = vmatprep.subr.bf16.mxu0 0
        %2123 = vmatpush1.bf16.msra.mxu0 %v1750
        %2124 = vmatprep.subr.bf16.mxu0 0
        %2125 = vmatpush1.bf16.msra.mxu0 %v1753
        %2126 = vmatprep.subr.bf16.mxu0 0
        %2127 = vmatpush1.bf16.msra.mxu0 %v1756
        %2128 = vmatprep.subr.bf16.mxu0 0
        %2129 = vmatpush1.bf16.msra.mxu0 %v1759
        %2130 = vmatprep.subr.bf16.mxu0 0
        %2131 = vmatpush1.bf16.msra.mxu0 %v1762
        %2132 = vmatprep.subr.bf16.mxu0 0
        %2133 = vmatpush1.bf16.msra.mxu0 %v1765
        %2134 = vmatprep.subr.bf16.mxu0 0
        %2135 = vmatpush1.bf16.msra.mxu0 %v1768
        %2136 = vmatprep.subr.bf16.mxu0 0
        %2137 = vmatpush1.bf16.msra.mxu0 %v1771
        %2138 = vmatprep.subr.bf16.mxu0 0
        %2139 = vmatpush1.bf16.msra.mxu0 %v1774
        %2140 = vmatprep.mubr.bf16.mxu0 %v1920
        %2141 = vmatmul.mubr.bf16.gmra.mrb[0].mxu0 %v1919
        %v2142 = vpop.f32.mrb[0].mxu0
        %v2143 = vadd.f32 %v1890, %v2142
        %v2144 = vpop.f32.mrb[0].mxu0
        %v2145 = vpop.f32.mrb[0].mxu0
        %v2146 = vadd.f32 %v1895, %v2145
        %v2147 = vpop.f32.mrb[0].mxu0
        %2148 = vdwg.mxu0
        %2149 = vmatprep.subr.bf16.mxu0 0
        %2150 = vmatpush1.bf16.msra.mxu0 %v1777
        %2151 = vmatprep.subr.bf16.mxu0 0
        %2152 = vmatpush1.bf16.msra.mxu0 %v1780
        %2153 = vmatprep.subr.bf16.mxu0 0
        %2154 = vmatpush1.bf16.msra.mxu0 %v1783
        %2155 = vmatprep.subr.bf16.mxu0 0
        %2156 = vmatpush1.bf16.msra.mxu0 %v1786
        %2157 = vmatprep.subr.bf16.mxu0 0
        %2158 = vmatpush1.bf16.msra.mxu0 %v1789
        %2159 = vmatprep.subr.bf16.mxu0 0
        %2160 = vmatpush1.bf16.msra.mxu0 %v1792
        %2161 = vmatprep.subr.bf16.mxu0 0
        %2162 = vmatpush1.bf16.msra.mxu0 %v1795
        %2163 = vmatprep.subr.bf16.mxu0 0
        %2164 = vmatpush1.bf16.msra.mxu0 %v1798
        %2165 = vmatprep.subr.bf16.mxu0 0
        %2166 = vmatpush1.bf16.msra.mxu0 %v1801
        %2167 = vmatprep.subr.bf16.mxu0 0
        %2168 = vmatpush1.bf16.msra.mxu0 %v1804
        %2169 = vmatprep.subr.bf16.mxu0 0
        %2170 = vmatpush1.bf16.msra.mxu0 %v1807
        %2171 = vmatprep.subr.bf16.mxu0 0
        %2172 = vmatpush1.bf16.msra.mxu0 %v1810
        %2173 = vmatprep.subr.bf16.mxu0 0
        %2174 = vmatpush1.bf16.msra.mxu0 %v1813
        %2175 = vmatprep.subr.bf16.mxu0 0
        %2176 = vmatpush1.bf16.msra.mxu0 %v1816
        %2177 = vmatprep.subr.bf16.mxu0 0
        %2178 = vmatpush1.bf16.msra.mxu0 %v1819
        %2179 = vmatprep.subr.bf16.mxu0 0
        %2180 = vmatpush1.bf16.msra.mxu0 %v1822
        %2181 = vmatprep.mubr.bf16.mxu0 %v1922
        %2182 = vmatmul.mubr.bf16.gmra.mrb[0].mxu0 %v1921
        %v2183 = vpop.f32.mrb[0].mxu0
        %v2184 = vadd.f32 %v2143, %v2183
        %v2185 = vpop.f32.mrb[0].mxu0
        %v2186 = vpop.f32.mrb[0].mxu0
        %v2187 = vadd.f32 %v2146, %v2186
        %v2188 = vpop.f32.mrb[0].mxu0
        %2189 = vdwg.mxu0
        %2190 = vmatprep.subr.bf16.mxu0 0
        %2191 = vmatpush1.bf16.msra.mxu0 %v1825
        %2192 = vmatprep.subr.bf16.mxu0 0
        %2193 = vmatpush1.bf16.msra.mxu0 %v1828
        %2194 = vmatprep.subr.bf16.mxu0 0
        %2195 = vmatpush1.bf16.msra.mxu0 %v1831
        %2196 = vmatprep.subr.bf16.mxu0 0
        %2197 = vmatpush1.bf16.msra.mxu0 %v1834
        %2198 = vmatprep.subr.bf16.mxu0 0
        %2199 = vmatpush1.bf16.msra.mxu0 %v1837
        %2200 = vmatprep.subr.bf16.mxu0 0
        %2201 = vmatpush1.bf16.msra.mxu0 %v1840
        %2202 = vmatprep.subr.bf16.mxu0 0
        %2203 = vmatpush1.bf16.msra.mxu0 %v1843
        %2204 = vmatprep.subr.bf16.mxu0 0
        %2205 = vmatpush1.bf16.msra.mxu0 %v1846
        %2206 = vmatprep.subr.bf16.mxu0 0
        %2207 = vmatpush1.bf16.msra.mxu0 %v1849
        %2208 = vmatprep.subr.bf16.mxu0 0
        %2209 = vmatpush1.bf16.msra.mxu0 %v1852
        %2210 = vmatprep.subr.bf16.mxu0 0
        %2211 = vmatpush1.bf16.msra.mxu0 %v1855
        %2212 = vmatprep.subr.bf16.mxu0 0
        %2213 = vmatpush1.bf16.msra.mxu0 %v1858
        %2214 = vmatprep.subr.bf16.mxu0 0
        %2215 = vmatpush1.bf16.msra.mxu0 %v1861
        %2216 = vmatprep.subr.bf16.mxu0 0
        %2217 = vmatpush1.bf16.msra.mxu0 %v1864
        %2218 = vmatprep.subr.bf16.mxu0 0
        %2219 = vmatpush1.bf16.msra.mxu0 %v1867
        %2220 = vmatprep.subr.bf16.mxu0 0
        %2221 = vmatpush1.bf16.msra.mxu0 %v1870
        %2222 = vmatprep.mubr.bf16.mxu0 %v1924
        %2223 = vmatmul.mubr.bf16.gmra.mrb[0].mxu0 %v1923
        %v2224 = vpop.f32.mrb[0].mxu0
        %v2225 = vadd.f32 %v2184, %v2224
        %v2226 = vpop.f32.mrb[0].mxu0
        %v2227 = vpop.f32.mrb[0].mxu0
        %v2228 = vadd.f32 %v2187, %v2227
        %v2229 = vpop.f32.mrb[0].mxu0
        %2230 = vdwg.mxu0
        %2231 = vmatprep.subr.bf16.mxu0 0
        %2232 = vmatpush1.bf16.msra.mxu0 %v1873
        %2233 = vmatprep.subr.bf16.mxu0 0
        %2234 = vmatpush1.bf16.msra.mxu0 %v1876
        %2235 = vmatprep.subr.bf16.mxu0 0
        %2236 = vmatpush1.bf16.msra.mxu0 0
        %2237 = vmatprep.subr.bf16.mxu0 0
        %2238 = vmatpush1.bf16.msra.mxu0 0
        %2239 = vmatprep.subr.bf16.mxu0 0
        %2240 = vmatpush1.bf16.msra.mxu0 0
        %2241 = vmatprep.subr.bf16.mxu0 0
        %2242 = vmatpush1.bf16.msra.mxu0 0
        %2243 = vmatprep.subr.bf16.mxu0 0
        %2244 = vmatpush1.bf16.msra.mxu0 0
        %2245 = vmatprep.subr.bf16.mxu0 0
        %2246 = vmatpush1.bf16.msra.mxu0 0
        %2247 = vmatprep.subr.bf16.mxu0 0
        %2248 = vmatpush1.bf16.msra.mxu0 0
        %2249 = vmatprep.subr.bf16.mxu0 0
        %2250 = vmatpush1.bf16.msra.mxu0 0
        %2251 = vmatprep.subr.bf16.mxu0 0
        %2252 = vmatpush1.bf16.msra.mxu0 0
        %2253 = vmatprep.subr.bf16.mxu0 0
        %2254 = vmatpush1.bf16.msra.mxu0 0
        %2255 = vmatprep.subr.bf16.mxu0 0
        %2256 = vmatpush1.bf16.msra.mxu0 0
        %2257 = vmatprep.subr.bf16.mxu0 0
        %2258 = vmatpush1.bf16.msra.mxu0 0
        %2259 = vmatprep.subr.bf16.mxu0 0
        %2260 = vmatpush1.bf16.msra.mxu0 0
        %2261 = vmatprep.subr.bf16.mxu0 0
        %2262 = vmatpush1.bf16.msra.mxu0 0
        %2263 = vmatprep.mubr.bf16.mxu0 0
        %2264 = vmatmul.mubr.bf16.gmra.mrb[0].mxu0 %v1934
        %v2265 = vpop.f32.mrb[0].mxu0
        %v2266 = vadd.f32 %v2225, %v2265
        %v2267 = vpop.f32.mrb[0].mxu0
        %v2268 = vpop.f32.mrb[0].mxu0
        %v2269 = vadd.f32 %v2228, %v2268
        %v2270 = vpop.f32.mrb[0].mxu0
        %2271 = vdwg.mxu0
        %vm2272 = vcmp.ge.f32.partialorder %v2100, 0.0
        %vm2273 = vcmp.ge.f32.partialorder %v2102, 0.0
        %vm2274 = vcmp.ge.f32.partialorder %v2266, 0.0
        %vm2275 = vcmp.ge.f32.partialorder %v2104, 0.0
        %vm2276 = vcmp.ge.f32.partialorder %v2106, 0.0
        %vm2277 = vcmp.ge.f32.partialorder %v2269, 0.0
        %s2278 = sld [smem:[#allocation2]]
        %v2279 = vstv %s2278
        %v2280 = vmul.f32 %v2279, %v2100
        %v2281 = vmul.f32 %v2279, %v2102
        %v2282 = vmul.f32 %v2279, %v2266
        %v2283 = vmul.f32 %v2279, %v2104
        %v2284 = vmul.f32 %v2279, %v2106
        %v2285 = vmul.f32 %v2279, %v2269
        %v2286 = vsel %vm2272, %v2100, %v2280
        %v2287 = vsel %vm2273, %v2102, %v2281
        %v2288 = vsel %vm2274, %v2266, %v2282
        %v2289 = vsel %vm2275, %v2104, %v2283
        %v2290 = vsel %vm2276, %v2106, %v2284
        %v2291 = vsel %vm2277, %v2269, %v2285
        %v2292 = vpack.c.bf16 %v2289, %v2286
        %v2293 = vpack.c.bf16 %v2290, %v2287
        %v2294 = vpack.c.bf16 %v2291, %v2288
        %v2295 = vld [vmem:[%s3] sm:$0x3]
        %v2296 = vld [vmem:[%s4] sm:$0xf]
        %2298 = vset.pattern.permute.xlu0 0
        %2299 = vperm.xlu0 %2298, %v2296
        %v2300 = vpop.permute.xlu0 %2299
        %vm2302 = vcmask 130048
        %v2304 = vsel %vm2302, %v2295, 0
        %2306 = vmatprep.subr.bf16.mxu0 %v2293
        %2307 = vmatpush1.bf16.msra.mxu0 %v2292
        %2308 = vmatprep.subr.bf16.mxu0 0
        %2309 = vmatpush1.bf16.msra.mxu0 0
        %2310 = vmatprep.subr.bf16.mxu0 0
        %2311 = vmatpush1.bf16.msra.mxu0 0
        %2312 = vmatprep.subr.bf16.mxu0 0
        %2313 = vmatpush1.bf16.msra.mxu0 0
        %2314 = vmatprep.subr.bf16.mxu0 0
        %2315 = vmatpush1.bf16.msra.mxu0 0
        %2316 = vmatprep.subr.bf16.mxu0 0
        %2317 = vmatpush1.bf16.msra.mxu0 0
        %2318 = vmatprep.subr.bf16.mxu0 0
        %2319 = vmatpush1.bf16.msra.mxu0 0
        %2320 = vmatprep.subr.bf16.mxu0 0
        %2321 = vmatpush1.bf16.msra.mxu0 0
        %2322 = vmatprep.subr.bf16.mxu0 0
        %2323 = vmatpush1.bf16.msra.mxu0 0
        %2324 = vmatprep.subr.bf16.mxu0 0
        %2325 = vmatpush1.bf16.msra.mxu0 0
        %2326 = vmatprep.subr.bf16.mxu0 0
        %2327 = vmatpush1.bf16.msra.mxu0 0
        %2328 = vmatprep.subr.bf16.mxu0 0
        %2329 = vmatpush1.bf16.msra.mxu0 0
        %2330 = vmatprep.subr.bf16.mxu0 0
        %2331 = vmatpush1.bf16.msra.mxu0 0
        %2332 = vmatprep.subr.bf16.mxu0 0
        %2333 = vmatpush1.bf16.msra.mxu0 0
        %2334 = vmatprep.subr.bf16.mxu0 0
        %2335 = vmatpush1.bf16.msra.mxu0 0
        %2336 = vmatprep.subr.bf16.mxu0 0
        %2337 = vmatpush1.bf16.msra.mxu0 0
        %2338 = vmatprep.mubr.bf16.mxu0 0
        %2339 = vmatmul.mubr.bf16.gmra.mrb[0].mxu0 %v2304
        %v2340 = vpop.f32.mrb[0].mxu0
        %v2341 = vadd.f32 %v2300, %v2340
        %v2342 = vpop.f32.mrb[0].mxu0
        %v2343 = vadd.f32 %v2300, %v2342
        %v2344 = vpop.f32.mrb[0].mxu0
        %v2345 = vpop.f32.mrb[0].mxu0
        %2346 = vdwg.mxu0
        %2347 = vmatprep.subr.bf16.mxu0 0
        %2348 = vmatpush1.bf16.msra.mxu0 %v2294
        %2349 = vmatprep.subr.bf16.mxu0 0
        %2350 = vmatpush1.bf16.msra.mxu0 0
        %2351 = vmatprep.subr.bf16.mxu0 0
        %2352 = vmatpush1.bf16.msra.mxu0 0
        %2353 = vmatprep.subr.bf16.mxu0 0
        %2354 = vmatpush1.bf16.msra.mxu0 0
        %2355 = vmatprep.subr.bf16.mxu0 0
        %2356 = vmatpush1.bf16.msra.mxu0 0
        %2357 = vmatprep.subr.bf16.mxu0 0
        %2358 = vmatpush1.bf16.msra.mxu0 0
        %2359 = vmatprep.subr.bf16.mxu0 0
        %2360 = vmatpush1.bf16.msra.mxu0 0
        %2361 = vmatprep.subr.bf16.mxu0 0
        %2362 = vmatpush1.bf16.msra.mxu0 0
        %2363 = vmatprep.subr.bf16.mxu0 0
        %2364 = vmatpush1.bf16.msra.mxu0 0
        %2365 = vmatprep.subr.bf16.mxu0 0
        %2366 = vmatpush1.bf16.msra.mxu0 0
        %2367 = vmatprep.subr.bf16.mxu0 0
        %2368 = vmatpush1.bf16.msra.mxu0 0
        %2369 = vmatprep.subr.bf16.mxu0 0
        %2370 = vmatpush1.bf16.msra.mxu0 0
        %2371 = vmatprep.subr.bf16.mxu0 0
        %2372 = vmatpush1.bf16.msra.mxu0 0
        %2373 = vmatprep.subr.bf16.mxu0 0
        %2374 = vmatpush1.bf16.msra.mxu0 0
        %2375 = vmatprep.subr.bf16.mxu0 0
        %2376 = vmatpush1.bf16.msra.mxu0 0
        %2377 = vmatprep.subr.bf16.mxu0 0
        %2378 = vmatpush1.bf16.msra.mxu0 0
        %2379 = vmatprep.mubr.bf16.mxu0 0
        %2380 = vmatmul.mubr.bf16.gmra.mrb[0].mxu0 %v2304
        %v2381 = vpop.f32.mrb[0].mxu0
        %v2382 = vadd.f32 %v2300, %v2381
        %v2383 = vpop.f32.mrb[0].mxu0
        %v2384 = vpop.f32.mrb[0].mxu0
        %v2385 = vpop.f32.mrb[0].mxu0
        %2386 = vdwg.mxu0
        %v2387 = vxor.u32 %v2341, 2147483648
        %v2388 = vxor.u32 %v2343, 2147483648
        %v2389 = vxor.u32 %v2382, 2147483648
        %v2390 = vmul.f32 %v2387, 1.442695
        %v2391 = vpow.pop %v2390
        %v2392 = vmul.f32 %v2388, 1.442695
        %v2393 = vpow.pop %v2392
        %v2394 = vmul.f32 %v2389, 1.442695
        %v2395 = vpow.pop %v2394
        %v2396 = vadd.f32 %v2391, 1.0
        %v2397 = vadd.f32 %v2393, 1.0
        %v2398 = vadd.f32 %v2395, 1.0
        %v2399 = vrcp.pop %v2396
        %v2400 = vmul.f32 1.0, %v2399
        %v2401 = vrcp.pop %v2397
        %v2402 = vmul.f32 1.0, %v2401
        %v2403 = vrcp.pop %v2398
        %v2404 = vmul.f32 1.0, %v2403
        %v2407 = vcombine.low %v2400, %v2402
        %2409 = vst [vmem:[%s287] sm:$0xff] %v2407
        %2410 = vst [vmem:[%s287 + $0x8] sm:$0xf] %v2404
        %s2411 = smul.u32 3, %s23
        %p2412 = scmp.lt.s32.totalorder %s22, 1
        %s2413 = scalar_select %p2412, %s22, 1
        %p2414 = scmp.lt.s32.totalorder %s2411, 2
        %s2415 = scalar_select %p2414, %s2411, 2
        %s2416 = smul.addr %s2413, 3
        %s2417 = sadd.s32 %s2415, %s2416
        %s2418 = smul.addr %s2417, 4
        %s2419 = scalar_lea.vmem %s6, %s2418
        // Predicated region
        $region49: #{fsrcnn20_forward.7} parent=43 // pred_check
          %p2420 = pneg %p181
        $region50: #{fsrcnn20_forward.7} parent=43 // pred_check_branch
          %2422 = sbr.rel (%p2420) target = $region52
        $region51: #{fsrcnn20_forward.7} parent=43 // pred_region
          %s2423 = smul.u32 3, %s23
        $region52: #{fsrcnn20_forward.7} parent=43 // pred_fallthru
          _
      $region44: #{fsrcnn20_forward.7} parent=5 // pred_fallthru
        _
      %p2424 = scmp.le.s32.totalorder 2, %s13
      // Predicated region
      $region53: #{fsrcnn20_forward.7} parent=5 // pred_check
        %p2425 = pneg %p2424
      $region54: #{fsrcnn20_forward.7} parent=5 // pred_check_branch
        %2427 = sbr.rel (%p2425) target = $region56
      $region55: #{fsrcnn20_forward.7} parent=5 // pred_region
        %s2428 = ssub.s32 %s13, 2
        // Predicated region
        $region57: #{fsrcnn20_forward.7} parent=55 // pred_check
          %p2429 = pneg %p187
        $region58: #{fsrcnn20_forward.7} parent=55 // pred_check_branch
          %2431 = sbr.rel (%p2429) target = $region60
        $region59: #{fsrcnn20_forward.7} parent=55 // pred_region
          %s2432 = smul.u32 3, %s25
          %p2433 = scmp.lt.s32.totalorder %s24, 1
          %s2434 = scalar_select %p2433, %s24, 1
          %p2435 = scmp.lt.s32.totalorder %s2432, 2
          %s2436 = scalar_select %p2435, %s2432, 2
          %s2437 = smul.addr %s2434, 3
          %s2438 = sadd.s32 %s2436, %s2437
          %s2439 = smul.addr %s2438, 4
          %s2440 = scalar_lea.vmem %s6, %s2439
        $region60: #{fsrcnn20_forward.7} parent=55 // pred_fallthru
          _
      $region56: #{fsrcnn20_forward.7} parent=5 // pred_fallthru
        _
    $region6: #{fsrcnn20_forward.7} parent=1 // loop_footer
      %s17 = sadd.s32 1, %s13
    $region7: #{fsrcnn20_forward.7} parent=1 // loop_footer_branch
      %12 = sbr.rel target = $region3
    $region8: #{fsrcnn20_forward.7} parent=1 // loop_exit
      _
    %2441 = vsyncpa [#allocation3], 1
    %s2442 = scalar_lea.sflag [#allocation3], 1
    %2443 = vsyncpa %s2442, 1

</llo_original>
